<compile_context>
chip_gen: v7x
topology: tpu7x:2x2x1
jax: 0.10.0
libtpu: 0.0.40
codegen_flags: <defaults>
</compile_context>

<pallas_src>
import jax
import jax.numpy as jnp
from jax.experimental import pallas as pl
from jax.experimental.pallas import tpu as pltpu

BN_EPS = 1e-5
_VMEM_LIMIT = 32 * 1024 * 1024          # scoped VMEM limit handed to Mosaic
_VMEM_BUDGET = 20 * 1024 * 1024         # row-tile search budget (with margin)


# ----------------------------------------------------------------------------
# Fused conv-as-matmul Pallas kernel.
# Grid: (B, n_out_d, row_tiles), all "parallel".  The KD depth taps of the 3D
# kernel arrive as KD separate (TR, K) input blocks of the same im2col slab;
# the whole reduction + epilogue happens in one grid step.
# ----------------------------------------------------------------------------
def _make_conv_kernel(n_taps, relu, has_res):
    def kernel(*refs):
        x_refs = refs[:n_taps]
        w_ref = refs[n_taps]           # (KD, K, Cout), VMEM-resident
        b_ref = refs[n_taps + 1]       # (1, Cout) f32
        res_ref = refs[n_taps + 2] if has_res else None
        o_ref = refs[-1]

        acc = jnp.dot(x_refs[0][...], w_ref[0],
                      preferred_element_type=jnp.float32)
        for t in range(1, n_taps):
            acc = acc + jnp.dot(x_refs[t][...], w_ref[t],
                                preferred_element_type=jnp.float32)
        y = acc + b_ref[...]
        if has_res:
            y = y + res_ref[...].astype(jnp.float32)
        if relu:
            y = jnp.maximum(y, 0.0)
        o_ref[...] = y.astype(o_ref.dtype)

    return kernel


def _pick_row_tile(R, K, Cout, KD, has_res):
    """Largest row tile (<= 2048, multiple of 8, divisor of R) whose working
    set fits the VMEM budget (double-buffered bf16 x blocks, bf16 out/res,
    resident weight, f32 accumulator)."""
    def vmem_bytes(tr):
        x_b = KD * 2 * tr * K * 2
        o_b = 2 * tr * Cout * 2
        r_b = (2 * tr * Cout * 2) if has_res else 0
        w_b = KD * K * Cout * 2
        acc = tr * Cout * 4
        return x_b + o_b + r_b + w_b + acc

    for tr in (2048, 1024, 512, 256, 128, 64, 32, 16, 8):
        if R % tr == 0 and vmem_bytes(tr) <= _VMEM_BUDGET:
            return tr
    return R  # fallback: single full-row block (tiny shapes only)


def tap_conv(x_t, w_t, bias, residual, relu, *, n_out_d, stride_d,
             out_dtype=jnp.bfloat16):
    """x_t: (B, Dp, R, K) bf16 partial-im2col slab (R rows per depth plane,
    K = KH*KW*Cin).  w_t: (KD, K, Cout) bf16 with BN scale folded in.
    bias: (Cout,) f32.  residual: (B, n_out_d, R, Cout) bf16 or None.
    Output depth plane `od`, tap `kd` reads input plane `od*stride_d + kd`.
    Returns (B, n_out_d, R, Cout) in out_dtype."""
    B, Dp, R, K = x_t.shape
    KD, _, Cout = w_t.shape
    has_res = residual is not None
    TR = _pick_row_tile(R, K, Cout, KD, has_res)
    sd = stride_d
    grid = (B, n_out_d, R // TR)

    def x_spec(kd):
        return pl.BlockSpec((None, None, TR, K),
                            lambda b, od, rt, kd=kd: (b, od * sd + kd, rt, 0))

    in_specs = [x_spec(kd) for kd in range(KD)]
    in_specs += [
        # weight: constant block index -> DMA'd once, stays resident in VMEM
        pl.BlockSpec((KD, K, Cout), lambda b, od, rt: (0, 0, 0)),
        pl.BlockSpec((1, Cout), lambda b, od, rt: (0, 0)),
    ]
    args = [x_t] * KD + [w_t, bias.reshape(1, Cout).astype(jnp.float32)]
    if has_res:
        in_specs.append(pl.BlockSpec((None, None, TR, Cout),
                                     lambda b, od, rt: (b, od, rt, 0)))
        args.append(residual)

    out = pl.pallas_call(
        _make_conv_kernel(KD, relu, has_res),
        out_shape=jax.ShapeDtypeStruct((B, n_out_d, R, Cout), out_dtype),
        grid_spec=pltpu.PrefetchScalarGridSpec(
            num_scalar_prefetch=0,
            grid=grid,
            in_specs=in_specs,
            out_specs=pl.BlockSpec((None, None, TR, Cout),
                                   lambda b, od, rt: (b, od, rt, 0)),
        ),
        compiler_params=pltpu.CompilerParams(
            dimension_semantics=("parallel", "parallel", "parallel"),
            vmem_limit_bytes=_VMEM_LIMIT),
    )(*args)
    return out


# ----------------------------------------------------------------------------
# JAX wrappers: BN folding, partial im2col, fused sub-pixel deconv
# ----------------------------------------------------------------------------
def _fold_bn(bn):
    # TODO(synk): BatchNorm3d uses folded running stats (inference mode);
    # training-mode batch statistics are not computed.
    gamma, beta, mean, var = bn
    scale = gamma / jnp.sqrt(var + BN_EPS)
    bias = beta - mean * scale
    return scale, bias


def conv3d_bn(x, w, bn, stride, relu, residual=None, out_dtype=jnp.bfloat16):
    """Conv3d(k=3, pad=1, stride, bias=False) + BN (+residual) (+ReLU).
    x: (B, D, H, W, Cin) NDHWC.  w: torch layout (Cout, Cin, 3, 3, 3)."""
    B, D, H, W, Cin = x.shape
    Cout = w.shape[0]
    Do = (D - 1) // stride + 1
    Ho = (H - 1) // stride + 1
    Wo = (W - 1) // stride + 1

    xb = x.astype(jnp.bfloat16)
    xp = jnp.pad(xb, ((0, 0), (1, 1), (1, 1), (1, 1), (0, 0)))
    # stride-resolved partial im2col over the (kh, kw) taps only (9*Cin wide).
    # (A kw-only 3*Cin slab would cut slab HBM traffic on v5e; kept at 9*Cin
    #  here for better MXU K-fill on v6e/v7x.)
    cols = []
    for kh in range(3):
        for kw in range(3):
            cols.append(xp[:, :, kh:kh + (Ho - 1) * stride + 1:stride,
                           kw:kw + (Wo - 1) * stride + 1:stride, :])
    xhw = jnp.concatenate(cols, axis=-1)                  # (B, D+2, Ho, Wo, 9*Cin)
    x_t = xhw.reshape(B, D + 2, Ho * Wo, 9 * Cin)

    scale, bias = _fold_bn(bn)
    w_r = jnp.transpose(w, (2, 3, 4, 1, 0)) * scale       # (3,3,3,Cin,Cout), BN-scaled
    w_t = w_r.reshape(3, 9 * Cin, Cout).astype(jnp.bfloat16)

    res_t = None
    if residual is not None:
        res_t = residual.reshape(B, Do, Ho * Wo, Cout).astype(jnp.bfloat16)

    out = tap_conv(x_t, w_t, bias, res_t, relu,
                   n_out_d=Do, stride_d=stride, out_dtype=out_dtype)
    return out.reshape(B, Do, Ho, Wo, Cout)


# (parity p, tap offset t in {0,1}) -> torch kernel index used, or None (zero)
_DECONV_TAP_K = {(0, 0): 1, (0, 1): None, (1, 0): 2, (1, 1): 0}


def convtrans3d_bn(x, wt, bn, relu, residual=None, out_dtype=jnp.bfloat16):
    """ConvTranspose3d(k=3, stride=2, pad=1, output_padding=1, bias=False)
    + BN (+residual) (+ReLU).  All 8 parity phases fused into one pallas_call:
    phase sub-filters are zero-embedded into a shared 2x2x2 tap space and
    stacked along Cout, so the kernel output is (B, D, H*W, 8*Cout) and a
    single bf16 interleave produces the (B, 2D, 2H, 2W, Cout) result.
    x: (B, D, H, W, Cin) NDHWC.  wt: torch layout (Cin, Cout, 3, 3, 3)."""
    B, D, H, W, Cin = x.shape
    Cout = wt.shape[1]
    scale, bias = _fold_bn(bn)
    w_perm = jnp.transpose(wt, (2, 3, 4, 0, 1)) * scale   # (kd, kh, kw, Cin, Cout)

    # --- fused weight (KD=2, K=4*Cin, N=8*Cout), phase order p = pd*4+ph*2+pw
    zero = jnp.zeros((Cin, Cout), w_perm.dtype)
    w_blocks = []
    for td in (0, 1):
        tap_rows = []
        for th in (0, 1):
            for tw in (0, 1):
                phase_cols = []
                for pd in (0, 1):
                    for ph in (0, 1):
                        for pw in (0, 1):
                            kd = _DECONV_TAP_K[(pd, td)]
                            kh = _DECONV_TAP_K[(ph, th)]
                            kw = _DECONV_TAP_K[(pw, tw)]
                            if kd is None or kh is None or kw is None:
                                phase_cols.append(zero)
                            else:
                                phase_cols.append(w_perm[kd, kh, kw])
                tap_rows.append(jnp.concatenate(phase_cols, axis=-1))  # (Cin, 8*Cout)
        w_blocks.append(jnp.concatenate(tap_rows, axis=0))             # (4*Cin, 8*Cout)
    w_t = jnp.stack(w_blocks, axis=0).astype(jnp.bfloat16)             # (2, 4*Cin, 8*Cout)
    bias8 = jnp.tile(bias, 8)                                          # (8*Cout,)

    # --- shared partial im2col over the 2x2 (th, tw) taps of the undilated x
    xb = x.astype(jnp.bfloat16)
    xp = jnp.pad(xb, ((0, 0), (0, 1), (0, 1), (0, 1), (0, 0)))   # pad high by 1
    cols = [xp[:, :, th:th + H, tw:tw + W, :] for th in (0, 1) for tw in (0, 1)]
    xhw = jnp.concatenate(cols, axis=-1)                         # (B, D+1, H, W, 4*Cin)
    x_t = xhw.reshape(B, D + 1, H * W, 4 * Cin)

    # --- residual de-interleaved into the fused (B, D, H*W, 8*Cout) layout
    res_t = None
    if residual is not None:
        r = residual.astype(jnp.bfloat16).reshape(B, D, 2, H, 2, W, 2, Cout)
        r = jnp.transpose(r, (0, 1, 3, 5, 2, 4, 6, 7))   # (B, D, H, W, pd, ph, pw, C)
        res_t = r.reshape(B, D, H * W, 8 * Cout)

    out = tap_conv(x_t, w_t, bias8, res_t, relu,
                   n_out_d=D, stride_d=1, out_dtype=out_dtype)
    # --- single bf16 sub-pixel interleave
    o = out.reshape(B, D, H, W, 2, 2, 2, Cout)
    o = jnp.transpose(o, (0, 1, 4, 2, 5, 3, 6, 7))       # (B, D, pd, H, ph, W, pw, C)
    return o.reshape(B, 2 * D, 2 * H, 2 * W, Cout)


# ----------------------------------------------------------------------------
# hourglass module
# ----------------------------------------------------------------------------
def init_hourglass_params(key, inplanes):
    c1, c2 = inplanes, inplanes * 2
    ks = jax.random.split(key, 12)

    def conv_w(k, cout, cin):
        return 0.05 * jax.random.normal(k, (cout, cin, 3, 3, 3), jnp.float32)

    def convt_w(k, cin, cout):
        return 0.05 * jax.random.normal(k, (cin, cout, 3, 3, 3), jnp.float32)

    def bn(k, c):
        kk = jax.random.split(k, 4)
        gamma = 1.0 + 0.1 * jax.random.normal(kk[0], (c,), jnp.float32)
        beta = 0.1 * jax.random.normal(kk[1], (c,), jnp.float32)
        mean = 0.1 * jax.random.normal(kk[2], (c,), jnp.float32)
        var = 0.5 + jnp.abs(jax.random.normal(kk[3], (c,), jnp.float32))
        return (gamma, beta, mean, var)

    return {
        'conv1_w': conv_w(ks[0], c2, c1), 'conv1_bn': bn(ks[1], c2),
        'conv2_w': conv_w(ks[2], c2, c2), 'conv2_bn': bn(ks[3], c2),
        'conv3_w': conv_w(ks[4], c2, c2), 'conv3_bn': bn(ks[5], c2),
        'conv4_w': conv_w(ks[6], c2, c2), 'conv4_bn': bn(ks[7], c2),
        'conv5_w': convt_w(ks[8], c2, c2), 'conv5_bn': bn(ks[9], c2),
        'conv6_w': convt_w(ks[10], c2, c1), 'conv6_bn': bn(ks[11], c1),
    }


def hourglass_forward(params, x_ncdhw, presqu=None, postsqu=None):
    """x_ncdhw: (B, C, D, H, W).  Returns (out, pre, post) in NCDHW (f32).
    Channels-last bf16 is kept end-to-end internally; NCDHW transposes and
    the f32 cast happen only at the module boundary."""
    to_c_last = lambda t: jnp.transpose(t, (0, 2, 3, 4, 1))
    to_ncdhw = lambda t: jnp.transpose(t, (0, 4, 1, 2, 3)).astype(jnp.float32)

    x = to_c_last(x_ncdhw)
    presqu_c = None if presqu is None else to_c_last(presqu)
    postsqu_c = None if postsqu is None else to_c_last(postsqu)

    # conv1: convbn_3d stride 2 + ReLU
    out = conv3d_bn(x, params['conv1_w'], params['conv1_bn'], stride=2, relu=True)
    # conv2: convbn_3d stride 1; pre = relu(conv2(out) + postsqu) (fused epilogue)
    pre = conv3d_bn(out, params['conv2_w'], params['conv2_bn'], stride=1,
                    relu=True, residual=postsqu_c)
    # conv3: convbn_3d stride 2 + ReLU
    out = conv3d_bn(pre, params['conv3_w'], params['conv3_bn'], stride=2, relu=True)
    # conv4: convbn_3d stride 1 + ReLU
    out = conv3d_bn(out, params['conv4_w'], params['conv4_bn'], stride=1, relu=True)
    # conv5: deconv + BN; post = relu(conv5(out) + (presqu or pre)) (fused)
    res5 = presqu_c if presqu_c is not None else pre
    post = convtrans3d_bn(out, params['conv5_w'], params['conv5_bn'],
                          relu=True, residual=res5)
    # conv6: deconv + BN (no relu, no residual)
    out = convtrans3d_bn(post, params['conv6_w'], params['conv6_bn'],
                         relu=False, residual=None)
    return to_ncdhw(out), to_ncdhw(pre), to_ncdhw(post)


if __name__ == "__main__":
    key = jax.random.PRNGKey(0)
    k_param, k_x = jax.random.split(key)

    inplanes = 4
    B, D, H, W = 2, 8, 16, 16          # D, H, W divisible by 4 (two stride-2 stages)
    x = jax.random.normal(k_x, (B, inplanes, D, H, W), jnp.float32)
    params = init_hourglass_params(k_param, inplanes)

    # mimic the first hourglass call in PSMNet: presqu=None, postsqu=None
    fwd = jax.jit(lambda p, xv: hourglass_forward(p, xv, presqu=None, postsqu=None))
    out, pre, post = fwd(params, x)
    jax.block_until_ready((out, pre, post))

    assert out.shape == (B, inplanes, D, H, W)
    assert pre.shape == (B, 2 * inplanes, D // 2, H // 2, W // 2)
    assert post.shape == (B, 2 * inplanes, D // 2, H // 2, W // 2)
    assert bool(jnp.all(jnp.isfinite(out)))
    print("KERNEL_OK")
</pallas_src>

<mosaic_0001>
module attributes {stable_mosaic.version = 11 : i64} {
  func.func @kernel(%arg0: i32, %arg1: i32, %arg2: i32, %arg3: memref<1x1x64x36xbf16, #tpu.memory_space<vmem>>, %arg4: memref<1x1x64x36xbf16, #tpu.memory_space<vmem>>, %arg5: memref<1x1x64x36xbf16, #tpu.memory_space<vmem>>, %arg6: memref<3x36x8xbf16, #tpu.memory_space<vmem>>, %arg7: memref<1x8xf32, #tpu.memory_space<vmem>>, %arg8: memref<1x1x64x8xbf16, #tpu.memory_space<vmem>>) attributes {dimension_semantics = [#tpu.dimension_semantics<parallel>, #tpu.dimension_semantics<parallel>, #tpu.dimension_semantics<parallel>], iteration_bounds = array<i64: 2, 4, 1>, scalar_prefetch = 0 : i64, scratch_operands = 0 : i64, tpu.core_type = #tpu.core_type<tc>, window_params = [{transform_indices = @transform_0, window_bounds = array<i64: 1, 1, 64, 36>}, {transform_indices = @transform_1, window_bounds = array<i64: 1, 1, 64, 36>}, {transform_indices = @transform_2, window_bounds = array<i64: 1, 1, 64, 36>}, {pipeline_mode = #tpu.pipeline_mode<synchronous>, transform_indices = @transform_3, window_bounds = array<i64: 3, 36, 8>}, {pipeline_mode = #tpu.pipeline_mode<synchronous>, transform_indices = @transform_4, window_bounds = array<i64: 1, 8>}, {transform_indices = @transform_5, window_bounds = array<i64: 1, 1, 64, 8>}]} {
    %c0 = arith.constant 0 : index
    %c0_0 = arith.constant 0 : index
    %c0_1 = arith.constant 0 : index
    %c0_2 = arith.constant 0 : index
    %0 = vector.load %arg3[%c0, %c0_0, %c0_1, %c0_2] : memref<1x1x64x36xbf16, #tpu.memory_space<vmem>>, vector<1x1x64x36xbf16>
    %1 = vector.shape_cast %0 : vector<1x1x64x36xbf16> to vector<64x36xbf16>
    %c0_3 = arith.constant 0 : index
    %c0_4 = arith.constant 0 : index
    %c0_5 = arith.constant 0 : index
    %2 = vector.load %arg6[%c0_3, %c0_4, %c0_5] : memref<3x36x8xbf16, #tpu.memory_space<vmem>>, vector<1x36x8xbf16>
    %3 = vector.shape_cast %2 : vector<1x36x8xbf16> to vector<36x8xbf16>
    %cst = arith.constant dense<0.000000e+00> : vector<64x8xf32>
    %4 = tpu.matmul %1, %3, %cst {dimension_numbers = #tpu.dot_dimension_numbers<[1], [0], [0], [1], [0, 0, 1, 1], [], []>} : vector<64x36xbf16>, vector<36x8xbf16>, vector<64x8xf32> -> vector<64x8xf32>
    %c0_6 = arith.constant 0 : index
    %c0_7 = arith.constant 0 : index
    %c0_8 = arith.constant 0 : index
    %c0_9 = arith.constant 0 : index
    %5 = vector.load %arg4[%c0_6, %c0_7, %c0_8, %c0_9] : memref<1x1x64x36xbf16, #tpu.memory_space<vmem>>, vector<1x1x64x36xbf16>
    %6 = vector.shape_cast %5 : vector<1x1x64x36xbf16> to vector<64x36xbf16>
    %c1 = arith.constant 1 : index
    %c0_10 = arith.constant 0 : index
    %c0_11 = arith.constant 0 : index
    %7 = vector.load %arg6[%c1, %c0_10, %c0_11] : memref<3x36x8xbf16, #tpu.memory_space<vmem>>, vector<1x36x8xbf16>
    %8 = vector.shape_cast %7 : vector<1x36x8xbf16> to vector<36x8xbf16>
    %cst_12 = arith.constant dense<0.000000e+00> : vector<64x8xf32>
    %9 = tpu.matmul %6, %8, %cst_12 {dimension_numbers = #tpu.dot_dimension_numbers<[1], [0], [0], [1], [0, 0, 1, 1], [], []>} : vector<64x36xbf16>, vector<36x8xbf16>, vector<64x8xf32> -> vector<64x8xf32>
    %10 = arith.addf %4, %9 : vector<64x8xf32>
    %c0_13 = arith.constant 0 : index
    %c0_14 = arith.constant 0 : index
    %c0_15 = arith.constant 0 : index
    %c0_16 = arith.constant 0 : index
    %11 = vector.load %arg5[%c0_13, %c0_14, %c0_15, %c0_16] : memref<1x1x64x36xbf16, #tpu.memory_space<vmem>>, vector<1x1x64x36xbf16>
    %12 = vector.shape_cast %11 : vector<1x1x64x36xbf16> to vector<64x36xbf16>
    %c2 = arith.constant 2 : index
    %c0_17 = arith.constant 0 : index
    %c0_18 = arith.constant 0 : index
    %13 = vector.load %arg6[%c2, %c0_17, %c0_18] : memref<3x36x8xbf16, #tpu.memory_space<vmem>>, vector<1x36x8xbf16>
    %14 = vector.shape_cast %13 : vector<1x36x8xbf16> to vector<36x8xbf16>
    %cst_19 = arith.constant dense<0.000000e+00> : vector<64x8xf32>
    %15 = tpu.matmul %12, %14, %cst_19 {dimension_numbers = #tpu.dot_dimension_numbers<[1], [0], [0], [1], [0, 0, 1, 1], [], []>} : vector<64x36xbf16>, vector<36x8xbf16>, vector<64x8xf32> -> vector<64x8xf32>
    %16 = arith.addf %10, %15 : vector<64x8xf32>
    %c0_20 = arith.constant 0 : index
    %c0_21 = arith.constant 0 : index
    %17 = vector.load %arg7[%c0_20, %c0_21] : memref<1x8xf32, #tpu.memory_space<vmem>>, vector<1x8xf32>
    %18 = vector.broadcast %17 : vector<1x8xf32> to vector<64x8xf32>
    %19 = arith.addf %16, %18 : vector<64x8xf32>
    %cst_22 = arith.constant 0.000000e+00 : f32
    %20 = vector.broadcast %cst_22 : f32 to vector<64x8xf32>
    %21 = arith.maximumf %19, %20 : vector<64x8xf32>
    %22 = arith.truncf %21 : vector<64x8xf32> to vector<64x8xbf16>
    %c0_23 = arith.constant 0 : index
    %c0_24 = arith.constant 0 : index
    %c0_25 = arith.constant 0 : index
    %c0_26 = arith.constant 0 : index
    %23 = vector.load %arg8[%c0_23, %c0_24, %c0_25, %c0_26] : memref<1x1x64x8xbf16, #tpu.memory_space<vmem>>, vector<1x1x64x8xbf16>
    %24 = vector.shape_cast %23 : vector<1x1x64x8xbf16> to vector<64x8xbf16>
    %25 = vector.shape_cast %22 : vector<64x8xbf16> to vector<1x1x64x8xbf16>
    tpu.vector_store %arg8[%c0_23, %c0_24, %c0_25, %c0_26], %25 {strides = array<i32>} : memref<1x1x64x8xbf16, #tpu.memory_space<vmem>>, vector<1x1x64x8xbf16>,
    return
  }
  func.func @transform_0(%arg0: i32, %arg1: i32, %arg2: i32) -> (i32, i32, i32, i32) {
    %c2_i32 = arith.constant 2 : i32
    %0 = arith.muli %arg1, %c2_i32 : i32
    %c0_i32 = arith.constant 0 : i32
    %1 = arith.addi %0, %c0_i32 : i32
    %c0_i32_0 = arith.constant 0 : i32
    %c0_i32_1 = arith.constant 0 : i32
    return %arg0, %1, %arg2, %c0_i32_0 : i32, i32, i32, i32
  }
  func.func @transform_1(%arg0: i32, %arg1: i32, %arg2: i32) -> (i32, i32, i32, i32) {
    %c2_i32 = arith.constant 2 : i32
    %0 = arith.muli %arg1, %c2_i32 : i32
    %c1_i32 = arith.constant 1 : i32
    %1 = arith.addi %0, %c1_i32 : i32
    %c0_i32 = arith.constant 0 : i32
    %c0_i32_0 = arith.constant 0 : i32
    return %arg0, %1, %arg2, %c0_i32 : i32, i32, i32, i32
  }
  func.func @transform_2(%arg0: i32, %arg1: i32, %arg2: i32) -> (i32, i32, i32, i32) {
    %c2_i32 = arith.constant 2 : i32
    %0 = arith.muli %arg1, %c2_i32 : i32
    %c2_i32_0 = arith.constant 2 : i32
    %1 = arith.addi %0, %c2_i32_0 : i32
    %c0_i32 = arith.constant 0 : i32
    %c0_i32_1 = arith.constant 0 : i32
    return %arg0, %1, %arg2, %c0_i32 : i32, i32, i32, i32
  }
  func.func @transform_3(%arg0: i32, %arg1: i32, %arg2: i32) -> (i32, i32, i32) {
    %c0_i32 = arith.constant 0 : i32
    %c0_i32_0 = arith.constant 0 : i32
    %c0_i32_1 = arith.constant 0 : i32
    %c0_i32_2 = arith.constant 0 : i32
    return %c0_i32, %c0_i32_0, %c0_i32_1 : i32, i32, i32
  }
  func.func @transform_4(%arg0: i32, %arg1: i32, %arg2: i32) -> (i32, i32) {
    %c0_i32 = arith.constant 0 : i32
    %c0_i32_0 = arith.constant 0 : i32
    %c0_i32_1 = arith.constant 0 : i32
    return %c0_i32, %c0_i32_0 : i32, i32
  }
  func.func @transform_5(%arg0: i32, %arg1: i32, %arg2: i32) -> (i32, i32, i32, i32) {
    %c0_i32 = arith.constant 0 : i32
    %c0_i32_0 = arith.constant 0 : i32
    return %arg0, %arg1, %arg2, %c0_i32 : i32, i32, i32, i32
  }
}

module attributes {stable_mosaic.version = 11 : i64} {
  func.func @kernel(%arg0: i32, %arg1: i32, %arg2: i32, %arg3: memref<1x1x64x72xbf16, #tpu.memory_space<vmem>>, %arg4: memref<1x1x64x72xbf16, #tpu.memory_space<vmem>>, %arg5: memref<1x1x64x72xbf16, #tpu.memory_space<vmem>>, %arg6: memref<3x72x8xbf16, #tpu.memory_space<vmem>>, %arg7: memref<1x8xf32, #tpu.memory_space<vmem>>, %arg8: memref<1x1x64x8xbf16, #tpu.memory_space<vmem>>) attributes {dimension_semantics = [#tpu.dimension_semantics<parallel>, #tpu.dimension_semantics<parallel>, #tpu.dimension_semantics<parallel>], iteration_bounds = array<i64: 2, 4, 1>, scalar_prefetch = 0 : i64, scratch_operands = 0 : i64, tpu.core_type = #tpu.core_type<tc>, window_params = [{transform_indices = @transform_0, window_bounds = array<i64: 1, 1, 64, 72>}, {transform_indices = @transform_1, window_bounds = array<i64: 1, 1, 64, 72>}, {transform_indices = @transform_2, window_bounds = array<i64: 1, 1, 64, 72>}, {pipeline_mode = #tpu.pipeline_mode<synchronous>, transform_indices = @transform_3, window_bounds = array<i64: 3, 72, 8>}, {pipeline_mode = #tpu.pipeline_mode<synchronous>, transform_indices = @transform_4, window_bounds = array<i64: 1, 8>}, {transform_indices = @transform_5, window_bounds = array<i64: 1, 1, 64, 8>}]} {
    %c0 = arith.constant 0 : index
    %c0_0 = arith.constant 0 : index
    %c0_1 = arith.constant 0 : index
    %c0_2 = arith.constant 0 : index
    %0 = vector.load %arg3[%c0, %c0_0, %c0_1, %c0_2] : memref<1x1x64x72xbf16, #tpu.memory_space<vmem>>, vector<1x1x64x72xbf16>
    %1 = vector.shape_cast %0 : vector<1x1x64x72xbf16> to vector<64x72xbf16>
    %c0_3 = arith.constant 0 : index
    %c0_4 = arith.constant 0 : index
    %c0_5 = arith.constant 0 : index
    %2 = vector.load %arg6[%c0_3, %c0_4, %c0_5] : memref<3x72x8xbf16, #tpu.memory_space<vmem>>, vector<1x72x8xbf16>
    %3 = vector.shape_cast %2 : vector<1x72x8xbf16> to vector<72x8xbf16>
    %cst = arith.constant dense<0.000000e+00> : vector<64x8xf32>
    %4 = tpu.matmul %1, %3, %cst {dimension_numbers = #tpu.dot_dimension_numbers<[1], [0], [0], [1], [0, 0, 1, 1], [], []>} : vector<64x72xbf16>, vector<72x8xbf16>, vector<64x8xf32> -> vector<64x8xf32>
    %c0_6 = arith.constant 0 : index
    %c0_7 = arith.constant 0 : index
    %c0_8 = arith.constant 0 : index
    %c0_9 = arith.constant 0 : index
    %5 = vector.load %arg4[%c0_6, %c0_7, %c0_8, %c0_9] : memref<1x1x64x72xbf16, #tpu.memory_space<vmem>>, vector<1x1x64x72xbf16>
    %6 = vector.shape_cast %5 : vector<1x1x64x72xbf16> to vector<64x72xbf16>
    %c1 = arith.constant 1 : index
    %c0_10 = arith.constant 0 : index
    %c0_11 = arith.constant 0 : index
    %7 = vector.load %arg6[%c1, %c0_10, %c0_11] : memref<3x72x8xbf16, #tpu.memory_space<vmem>>, vector<1x72x8xbf16>
    %8 = vector.shape_cast %7 : vector<1x72x8xbf16> to vector<72x8xbf16>
    %cst_12 = arith.constant dense<0.000000e+00> : vector<64x8xf32>
    %9 = tpu.matmul %6, %8, %cst_12 {dimension_numbers = #tpu.dot_dimension_numbers<[1], [0], [0], [1], [0, 0, 1, 1], [], []>} : vector<64x72xbf16>, vector<72x8xbf16>, vector<64x8xf32> -> vector<64x8xf32>
    %10 = arith.addf %4, %9 : vector<64x8xf32>
    %c0_13 = arith.constant 0 : index
    %c0_14 = arith.constant 0 : index
    %c0_15 = arith.constant 0 : index
    %c0_16 = arith.constant 0 : index
    %11 = vector.load %arg5[%c0_13, %c0_14, %c0_15, %c0_16] : memref<1x1x64x72xbf16, #tpu.memory_space<vmem>>, vector<1x1x64x72xbf16>
    %12 = vector.shape_cast %11 : vector<1x1x64x72xbf16> to vector<64x72xbf16>
    %c2 = arith.constant 2 : index
    %c0_17 = arith.constant 0 : index
    %c0_18 = arith.constant 0 : index
    %13 = vector.load %arg6[%c2, %c0_17, %c0_18] : memref<3x72x8xbf16, #tpu.memory_space<vmem>>, vector<1x72x8xbf16>
    %14 = vector.shape_cast %13 : vector<1x72x8xbf16> to vector<72x8xbf16>
    %cst_19 = arith.constant dense<0.000000e+00> : vector<64x8xf32>
    %15 = tpu.matmul %12, %14, %cst_19 {dimension_numbers = #tpu.dot_dimension_numbers<[1], [0], [0], [1], [0, 0, 1, 1], [], []>} : vector<64x72xbf16>, vector<72x8xbf16>, vector<64x8xf32> -> vector<64x8xf32>
    %16 = arith.addf %10, %15 : vector<64x8xf32>
    %c0_20 = arith.constant 0 : index
    %c0_21 = arith.constant 0 : index
    %17 = vector.load %arg7[%c0_20, %c0_21] : memref<1x8xf32, #tpu.memory_space<vmem>>, vector<1x8xf32>
    %18 = vector.broadcast %17 : vector<1x8xf32> to vector<64x8xf32>
    %19 = arith.addf %16, %18 : vector<64x8xf32>
    %cst_22 = arith.constant 0.000000e+00 : f32
    %20 = vector.broadcast %cst_22 : f32 to vector<64x8xf32>
    %21 = arith.maximumf %19, %20 : vector<64x8xf32>
    %22 = arith.truncf %21 : vector<64x8xf32> to vector<64x8xbf16>
    %c0_23 = arith.constant 0 : index
    %c0_24 = arith.constant 0 : index
    %c0_25 = arith.constant 0 : index
    %c0_26 = arith.constant 0 : index
    %23 = vector.load %arg8[%c0_23, %c0_24, %c0_25, %c0_26] : memref<1x1x64x8xbf16, #tpu.memory_space<vmem>>, vector<1x1x64x8xbf16>
    %24 = vector.shape_cast %23 : vector<1x1x64x8xbf16> to vector<64x8xbf16>
    %25 = vector.shape_cast %22 : vector<64x8xbf16> to vector<1x1x64x8xbf16>
    tpu.vector_store %arg8[%c0_23, %c0_24, %c0_25, %c0_26], %25 {strides = array<i32>} : memref<1x1x64x8xbf16, #tpu.memory_space<vmem>>, vector<1x1x64x8xbf16>,
    return
  }
  func.func @transform_0(%arg0: i32, %arg1: i32, %arg2: i32) -> (i32, i32, i32, i32) {
    %c1_i32 = arith.constant 1 : i32
    %0 = arith.muli %arg1, %c1_i32 : i32
    %c0_i32 = arith.constant 0 : i32
    %1 = arith.addi %0, %c0_i32 : i32
    %c0_i32_0 = arith.constant 0 : i32
    %c0_i32_1 = arith.constant 0 : i32
    return %arg0, %1, %arg2, %c0_i32_0 : i32, i32, i32, i32
  }
  func.func @transform_1(%arg0: i32, %arg1: i32, %arg2: i32) -> (i32, i32, i32, i32) {
    %c1_i32 = arith.constant 1 : i32
    %0 = arith.muli %arg1, %c1_i32 : i32
    %c1_i32_0 = arith.constant 1 : i32
    %1 = arith.addi %0, %c1_i32_0 : i32
    %c0_i32 = arith.constant 0 : i32
    %c0_i32_1 = arith.constant 0 : i32
    return %arg0, %1, %arg2, %c0_i32 : i32, i32, i32, i32
  }
  func.func @transform_2(%arg0: i32, %arg1: i32, %arg2: i32) -> (i32, i32, i32, i32) {
    %c1_i32 = arith.constant 1 : i32
    %0 = arith.muli %arg1, %c1_i32 : i32
    %c2_i32 = arith.constant 2 : i32
    %1 = arith.addi %0, %c2_i32 : i32
    %c0_i32 = arith.constant 0 : i32
    %c0_i32_0 = arith.constant 0 : i32
    return %arg0, %1, %arg2, %c0_i32 : i32, i32, i32, i32
  }
  func.func @transform_3(%arg0: i32, %arg1: i32, %arg2: i32) -> (i32, i32, i32) {
    %c0_i32 = arith.constant 0 : i32
    %c0_i32_0 = arith.constant 0 : i32
    %c0_i32_1 = arith.constant 0 : i32
    %c0_i32_2 = arith.constant 0 : i32
    return %c0_i32, %c0_i32_0, %c0_i32_1 : i32, i32, i32
  }
  func.func @transform_4(%arg0: i32, %arg1: i32, %arg2: i32) -> (i32, i32) {
    %c0_i32 = arith.constant 0 : i32
    %c0_i32_0 = arith.constant 0 : i32
    %c0_i32_1 = arith.constant 0 : i32
    return %c0_i32, %c0_i32_0 : i32, i32
  }
  func.func @transform_5(%arg0: i32, %arg1: i32, %arg2: i32) -> (i32, i32, i32, i32) {
    %c0_i32 = arith.constant 0 : i32
    %c0_i32_0 = arith.constant 0 : i32
    return %arg0, %arg1, %arg2, %c0_i32 : i32, i32, i32, i32
  }
}

module attributes {stable_mosaic.version = 11 : i64} {
  func.func @kernel(%arg0: i32, %arg1: i32, %arg2: i32, %arg3: memref<1x1x16x72xbf16, #tpu.memory_space<vmem>>, %arg4: memref<1x1x16x72xbf16, #tpu.memory_space<vmem>>, %arg5: memref<1x1x16x72xbf16, #tpu.memory_space<vmem>>, %arg6: memref<3x72x8xbf16, #tpu.memory_space<vmem>>, %arg7: memref<1x8xf32, #tpu.memory_space<vmem>>, %arg8: memref<1x1x16x8xbf16, #tpu.memory_space<vmem>>) attributes {dimension_semantics = [#tpu.dimension_semantics<parallel>, #tpu.dimension_semantics<parallel>, #tpu.dimension_semantics<parallel>], iteration_bounds = array<i64: 2, 2, 1>, scalar_prefetch = 0 : i64, scratch_operands = 0 : i64, tpu.core_type = #tpu.core_type<tc>, window_params = [{transform_indices = @transform_0, window_bounds = array<i64: 1, 1, 16, 72>}, {transform_indices = @transform_1, window_bounds = array<i64: 1, 1, 16, 72>}, {transform_indices = @transform_2, window_bounds = array<i64: 1, 1, 16, 72>}, {pipeline_mode = #tpu.pipeline_mode<synchronous>, transform_indices = @transform_3, window_bounds = array<i64: 3, 72, 8>}, {pipeline_mode = #tpu.pipeline_mode<synchronous>, transform_indices = @transform_4, window_bounds = array<i64: 1, 8>}, {transform_indices = @transform_5, window_bounds = array<i64: 1, 1, 16, 8>}]} {
    %c0 = arith.constant 0 : index
    %c0_0 = arith.constant 0 : index
    %c0_1 = arith.constant 0 : index
    %c0_2 = arith.constant 0 : index
    %0 = vector.load %arg3[%c0, %c0_0, %c0_1, %c0_2] : memref<1x1x16x72xbf16, #tpu.memory_space<vmem>>, vector<1x1x16x72xbf16>
    %1 = vector.shape_cast %0 : vector<1x1x16x72xbf16> to vector<16x72xbf16>
    %c0_3 = arith.constant 0 : index
    %c0_4 = arith.constant 0 : index
    %c0_5 = arith.constant 0 : index
    %2 = vector.load %arg6[%c0_3, %c0_4, %c0_5] : memref<3x72x8xbf16, #tpu.memory_space<vmem>>, vector<1x72x8xbf16>
    %3 = vector.shape_cast %2 : vector<1x72x8xbf16> to vector<72x8xbf16>
    %cst = arith.constant dense<0.000000e+00> : vector<16x8xf32>
    %4 = tpu.matmul %1, %3, %cst {dimension_numbers = #tpu.dot_dimension_numbers<[1], [0], [0], [1], [0, 0, 1, 1], [], []>} : vector<16x72xbf16>, vector<72x8xbf16>, vector<16x8xf32> -> vector<16x8xf32>
    %c0_6 = arith.constant 0 : index
    %c0_7 = arith.constant 0 : index
    %c0_8 = arith.constant 0 : index
    %c0_9 = arith.constant 0 : index
    %5 = vector.load %arg4[%c0_6, %c0_7, %c0_8, %c0_9] : memref<1x1x16x72xbf16, #tpu.memory_space<vmem>>, vector<1x1x16x72xbf16>
    %6 = vector.shape_cast %5 : vector<1x1x16x72xbf16> to vector<16x72xbf16>
    %c1 = arith.constant 1 : index
    %c0_10 = arith.constant 0 : index
    %c0_11 = arith.constant 0 : index
    %7 = vector.load %arg6[%c1, %c0_10, %c0_11] : memref<3x72x8xbf16, #tpu.memory_space<vmem>>, vector<1x72x8xbf16>
    %8 = vector.shape_cast %7 : vector<1x72x8xbf16> to vector<72x8xbf16>
    %cst_12 = arith.constant dense<0.000000e+00> : vector<16x8xf32>
    %9 = tpu.matmul %6, %8, %cst_12 {dimension_numbers = #tpu.dot_dimension_numbers<[1], [0], [0], [1], [0, 0, 1, 1], [], []>} : vector<16x72xbf16>, vector<72x8xbf16>, vector<16x8xf32> -> vector<16x8xf32>
    %10 = arith.addf %4, %9 : vector<16x8xf32>
    %c0_13 = arith.constant 0 : index
    %c0_14 = arith.constant 0 : index
    %c0_15 = arith.constant 0 : index
    %c0_16 = arith.constant 0 : index
    %11 = vector.load %arg5[%c0_13, %c0_14, %c0_15, %c0_16] : memref<1x1x16x72xbf16, #tpu.memory_space<vmem>>, vector<1x1x16x72xbf16>
    %12 = vector.shape_cast %11 : vector<1x1x16x72xbf16> to vector<16x72xbf16>
    %c2 = arith.constant 2 : index
    %c0_17 = arith.constant 0 : index
    %c0_18 = arith.constant 0 : index
    %13 = vector.load %arg6[%c2, %c0_17, %c0_18] : memref<3x72x8xbf16, #tpu.memory_space<vmem>>, vector<1x72x8xbf16>
    %14 = vector.shape_cast %13 : vector<1x72x8xbf16> to vector<72x8xbf16>
    %cst_19 = arith.constant dense<0.000000e+00> : vector<16x8xf32>
    %15 = tpu.matmul %12, %14, %cst_19 {dimension_numbers = #tpu.dot_dimension_numbers<[1], [0], [0], [1], [0, 0, 1, 1], [], []>} : vector<16x72xbf16>, vector<72x8xbf16>, vector<16x8xf32> -> vector<16x8xf32>
    %16 = arith.addf %10, %15 : vector<16x8xf32>
    %c0_20 = arith.constant 0 : index
    %c0_21 = arith.constant 0 : index
    %17 = vector.load %arg7[%c0_20, %c0_21] : memref<1x8xf32, #tpu.memory_space<vmem>>, vector<1x8xf32>
    %18 = vector.broadcast %17 : vector<1x8xf32> to vector<16x8xf32>
    %19 = arith.addf %16, %18 : vector<16x8xf32>
    %cst_22 = arith.constant 0.000000e+00 : f32
    %20 = vector.broadcast %cst_22 : f32 to vector<16x8xf32>
    %21 = arith.maximumf %19, %20 : vector<16x8xf32>
    %22 = arith.truncf %21 : vector<16x8xf32> to vector<16x8xbf16>
    %c0_23 = arith.constant 0 : index
    %c0_24 = arith.constant 0 : index
    %c0_25 = arith.constant 0 : index
    %c0_26 = arith.constant 0 : index
    %23 = vector.load %arg8[%c0_23, %c0_24, %c0_25, %c0_26] : memref<1x1x16x8xbf16, #tpu.memory_space<vmem>>, vector<1x1x16x8xbf16>
    %24 = vector.shape_cast %23 : vector<1x1x16x8xbf16> to vector<16x8xbf16>
    %25 = vector.shape_cast %22 : vector<16x8xbf16> to vector<1x1x16x8xbf16>
    tpu.vector_store %arg8[%c0_23, %c0_24, %c0_25, %c0_26], %25 {strides = array<i32>} : memref<1x1x16x8xbf16, #tpu.memory_space<vmem>>, vector<1x1x16x8xbf16>,
    return
  }
  func.func @transform_0(%arg0: i32, %arg1: i32, %arg2: i32) -> (i32, i32, i32, i32) {
    %c2_i32 = arith.constant 2 : i32
    %0 = arith.muli %arg1, %c2_i32 : i32
    %c0_i32 = arith.constant 0 : i32
    %1 = arith.addi %0, %c0_i32 : i32
    %c0_i32_0 = arith.constant 0 : i32
    %c0_i32_1 = arith.constant 0 : i32
    return %arg0, %1, %arg2, %c0_i32_0 : i32, i32, i32, i32
  }
  func.func @transform_1(%arg0: i32, %arg1: i32, %arg2: i32) -> (i32, i32, i32, i32) {
    %c2_i32 = arith.constant 2 : i32
    %0 = arith.muli %arg1, %c2_i32 : i32
    %c1_i32 = arith.constant 1 : i32
    %1 = arith.addi %0, %c1_i32 : i32
    %c0_i32 = arith.constant 0 : i32
    %c0_i32_0 = arith.constant 0 : i32
    return %arg0, %1, %arg2, %c0_i32 : i32, i32, i32, i32
  }
  func.func @transform_2(%arg0: i32, %arg1: i32, %arg2: i32) -> (i32, i32, i32, i32) {
    %c2_i32 = arith.constant 2 : i32
    %0 = arith.muli %arg1, %c2_i32 : i32
    %c2_i32_0 = arith.constant 2 : i32
    %1 = arith.addi %0, %c2_i32_0 : i32
    %c0_i32 = arith.constant 0 : i32
    %c0_i32_1 = arith.constant 0 : i32
    return %arg0, %1, %arg2, %c0_i32 : i32, i32, i32, i32
  }
  func.func @transform_3(%arg0: i32, %arg1: i32, %arg2: i32) -> (i32, i32, i32) {
    %c0_i32 = arith.constant 0 : i32
    %c0_i32_0 = arith.constant 0 : i32
    %c0_i32_1 = arith.constant 0 : i32
    %c0_i32_2 = arith.constant 0 : i32
    return %c0_i32, %c0_i32_0, %c0_i32_1 : i32, i32, i32
  }
  func.func @transform_4(%arg0: i32, %arg1: i32, %arg2: i32) -> (i32, i32) {
    %c0_i32 = arith.constant 0 : i32
    %c0_i32_0 = arith.constant 0 : i32
    %c0_i32_1 = arith.constant 0 : i32
    return %c0_i32, %c0_i32_0 : i32, i32
  }
  func.func @transform_5(%arg0: i32, %arg1: i32, %arg2: i32) -> (i32, i32, i32, i32) {
    %c0_i32 = arith.constant 0 : i32
    %c0_i32_0 = arith.constant 0 : i32
    return %arg0, %arg1, %arg2, %c0_i32 : i32, i32, i32, i32
  }
}

module attributes {stable_mosaic.version = 11 : i64} {
  func.func @kernel(%arg0: i32, %arg1: i32, %arg2: i32, %arg3: memref<1x1x16x72xbf16, #tpu.memory_space<vmem>>, %arg4: memref<1x1x16x72xbf16, #tpu.memory_space<vmem>>, %arg5: memref<1x1x16x72xbf16, #tpu.memory_space<vmem>>, %arg6: memref<3x72x8xbf16, #tpu.memory_space<vmem>>, %arg7: memref<1x8xf32, #tpu.memory_space<vmem>>, %arg8: memref<1x1x16x8xbf16, #tpu.memory_space<vmem>>) attributes {dimension_semantics = [#tpu.dimension_semantics<parallel>, #tpu.dimension_semantics<parallel>, #tpu.dimension_semantics<parallel>], iteration_bounds = array<i64: 2, 2, 1>, scalar_prefetch = 0 : i64, scratch_operands = 0 : i64, tpu.core_type = #tpu.core_type<tc>, window_params = [{transform_indices = @transform_0, window_bounds = array<i64: 1, 1, 16, 72>}, {transform_indices = @transform_1, window_bounds = array<i64: 1, 1, 16, 72>}, {transform_indices = @transform_2, window_bounds = array<i64: 1, 1, 16, 72>}, {pipeline_mode = #tpu.pipeline_mode<synchronous>, transform_indices = @transform_3, window_bounds = array<i64: 3, 72, 8>}, {pipeline_mode = #tpu.pipeline_mode<synchronous>, transform_indices = @transform_4, window_bounds = array<i64: 1, 8>}, {transform_indices = @transform_5, window_bounds = array<i64: 1, 1, 16, 8>}]} {
    %c0 = arith.constant 0 : index
    %c0_0 = arith.constant 0 : index
    %c0_1 = arith.constant 0 : index
    %c0_2 = arith.constant 0 : index
    %0 = vector.load %arg3[%c0, %c0_0, %c0_1, %c0_2] : memref<1x1x16x72xbf16, #tpu.memory_space<vmem>>, vector<1x1x16x72xbf16>
    %1 = vector.shape_cast %0 : vector<1x1x16x72xbf16> to vector<16x72xbf16>
    %c0_3 = arith.constant 0 : index
    %c0_4 = arith.constant 0 : index
    %c0_5 = arith.constant 0 : index
    %2 = vector.load %arg6[%c0_3, %c0_4, %c0_5] : memref<3x72x8xbf16, #tpu.memory_space<vmem>>, vector<1x72x8xbf16>
    %3 = vector.shape_cast %2 : vector<1x72x8xbf16> to vector<72x8xbf16>
    %cst = arith.constant dense<0.000000e+00> : vector<16x8xf32>
    %4 = tpu.matmul %1, %3, %cst {dimension_numbers = #tpu.dot_dimension_numbers<[1], [0], [0], [1], [0, 0, 1, 1], [], []>} : vector<16x72xbf16>, vector<72x8xbf16>, vector<16x8xf32> -> vector<16x8xf32>
    %c0_6 = arith.constant 0 : index
    %c0_7 = arith.constant 0 : index
    %c0_8 = arith.constant 0 : index
    %c0_9 = arith.constant 0 : index
    %5 = vector.load %arg4[%c0_6, %c0_7, %c0_8, %c0_9] : memref<1x1x16x72xbf16, #tpu.memory_space<vmem>>, vector<1x1x16x72xbf16>
    %6 = vector.shape_cast %5 : vector<1x1x16x72xbf16> to vector<16x72xbf16>
    %c1 = arith.constant 1 : index
    %c0_10 = arith.constant 0 : index
    %c0_11 = arith.constant 0 : index
    %7 = vector.load %arg6[%c1, %c0_10, %c0_11] : memref<3x72x8xbf16, #tpu.memory_space<vmem>>, vector<1x72x8xbf16>
    %8 = vector.shape_cast %7 : vector<1x72x8xbf16> to vector<72x8xbf16>
    %cst_12 = arith.constant dense<0.000000e+00> : vector<16x8xf32>
    %9 = tpu.matmul %6, %8, %cst_12 {dimension_numbers = #tpu.dot_dimension_numbers<[1], [0], [0], [1], [0, 0, 1, 1], [], []>} : vector<16x72xbf16>, vector<72x8xbf16>, vector<16x8xf32> -> vector<16x8xf32>
    %10 = arith.addf %4, %9 : vector<16x8xf32>
    %c0_13 = arith.constant 0 : index
    %c0_14 = arith.constant 0 : index
    %c0_15 = arith.constant 0 : index
    %c0_16 = arith.constant 0 : index
    %11 = vector.load %arg5[%c0_13, %c0_14, %c0_15, %c0_16] : memref<1x1x16x72xbf16, #tpu.memory_space<vmem>>, vector<1x1x16x72xbf16>
    %12 = vector.shape_cast %11 : vector<1x1x16x72xbf16> to vector<16x72xbf16>
    %c2 = arith.constant 2 : index
    %c0_17 = arith.constant 0 : index
    %c0_18 = arith.constant 0 : index
    %13 = vector.load %arg6[%c2, %c0_17, %c0_18] : memref<3x72x8xbf16, #tpu.memory_space<vmem>>, vector<1x72x8xbf16>
    %14 = vector.shape_cast %13 : vector<1x72x8xbf16> to vector<72x8xbf16>
    %cst_19 = arith.constant dense<0.000000e+00> : vector<16x8xf32>
    %15 = tpu.matmul %12, %14, %cst_19 {dimension_numbers = #tpu.dot_dimension_numbers<[1], [0], [0], [1], [0, 0, 1, 1], [], []>} : vector<16x72xbf16>, vector<72x8xbf16>, vector<16x8xf32> -> vector<16x8xf32>
    %16 = arith.addf %10, %15 : vector<16x8xf32>
    %c0_20 = arith.constant 0 : index
    %c0_21 = arith.constant 0 : index
    %17 = vector.load %arg7[%c0_20, %c0_21] : memref<1x8xf32, #tpu.memory_space<vmem>>, vector<1x8xf32>
    %18 = vector.broadcast %17 : vector<1x8xf32> to vector<16x8xf32>
    %19 = arith.addf %16, %18 : vector<16x8xf32>
    %cst_22 = arith.constant 0.000000e+00 : f32
    %20 = vector.broadcast %cst_22 : f32 to vector<16x8xf32>
    %21 = arith.maximumf %19, %20 : vector<16x8xf32>
    %22 = arith.truncf %21 : vector<16x8xf32> to vector<16x8xbf16>
    %c0_23 = arith.constant 0 : index
    %c0_24 = arith.constant 0 : index
    %c0_25 = arith.constant 0 : index
    %c0_26 = arith.constant 0 : index
    %23 = vector.load %arg8[%c0_23, %c0_24, %c0_25, %c0_26] : memref<1x1x16x8xbf16, #tpu.memory_space<vmem>>, vector<1x1x16x8xbf16>
    %24 = vector.shape_cast %23 : vector<1x1x16x8xbf16> to vector<16x8xbf16>
    %25 = vector.shape_cast %22 : vector<16x8xbf16> to vector<1x1x16x8xbf16>
    tpu.vector_store %arg8[%c0_23, %c0_24, %c0_25, %c0_26], %25 {strides = array<i32>} : memref<1x1x16x8xbf16, #tpu.memory_space<vmem>>, vector<1x1x16x8xbf16>,
    return
  }
  func.func @transform_0(%arg0: i32, %arg1: i32, %arg2: i32) -> (i32, i32, i32, i32) {
    %c1_i32 = arith.constant 1 : i32
    %0 = arith.muli %arg1, %c1_i32 : i32
    %c0_i32 = arith.constant 0 : i32
    %1 = arith.addi %0, %c0_i32 : i32
    %c0_i32_0 = arith.constant 0 : i32
    %c0_i32_1 = arith.constant 0 : i32
    return %arg0, %1, %arg2, %c0_i32_0 : i32, i32, i32, i32
  }
  func.func @transform_1(%arg0: i32, %arg1: i32, %arg2: i32) -> (i32, i32, i32, i32) {
    %c1_i32 = arith.constant 1 : i32
    %0 = arith.muli %arg1, %c1_i32 : i32
    %c1_i32_0 = arith.constant 1 : i32
    %1 = arith.addi %0, %c1_i32_0 : i32
    %c0_i32 = arith.constant 0 : i32
    %c0_i32_1 = arith.constant 0 : i32
    return %arg0, %1, %arg2, %c0_i32 : i32, i32, i32, i32
  }
  func.func @transform_2(%arg0: i32, %arg1: i32, %arg2: i32) -> (i32, i32, i32, i32) {
    %c1_i32 = arith.constant 1 : i32
    %0 = arith.muli %arg1, %c1_i32 : i32
    %c2_i32 = arith.constant 2 : i32
    %1 = arith.addi %0, %c2_i32 : i32
    %c0_i32 = arith.constant 0 : i32
    %c0_i32_0 = arith.constant 0 : i32
    return %arg0, %1, %arg2, %c0_i32 : i32, i32, i32, i32
  }
  func.func @transform_3(%arg0: i32, %arg1: i32, %arg2: i32) -> (i32, i32, i32) {
    %c0_i32 = arith.constant 0 : i32
    %c0_i32_0 = arith.constant 0 : i32
    %c0_i32_1 = arith.constant 0 : i32
    %c0_i32_2 = arith.constant 0 : i32
    return %c0_i32, %c0_i32_0, %c0_i32_1 : i32, i32, i32
  }
  func.func @transform_4(%arg0: i32, %arg1: i32, %arg2: i32) -> (i32, i32) {
    %c0_i32 = arith.constant 0 : i32
    %c0_i32_0 = arith.constant 0 : i32
    %c0_i32_1 = arith.constant 0 : i32
    return %c0_i32, %c0_i32_0 : i32, i32
  }
  func.func @transform_5(%arg0: i32, %arg1: i32, %arg2: i32) -> (i32, i32, i32, i32) {
    %c0_i32 = arith.constant 0 : i32
    %c0_i32_0 = arith.constant 0 : i32
    return %arg0, %arg1, %arg2, %c0_i32 : i32, i32, i32, i32
  }
}

module attributes {stable_mosaic.version = 11 : i64} {
  func.func @kernel(%arg0: i32, %arg1: i32, %arg2: i32, %arg3: memref<1x1x16x32xbf16, #tpu.memory_space<vmem>>, %arg4: memref<1x1x16x32xbf16, #tpu.memory_space<vmem>>, %arg5: memref<2x32x64xbf16, #tpu.memory_space<vmem>>, %arg6: memref<1x64xf32, #tpu.memory_space<vmem>>, %arg7: memref<1x1x16x64xbf16, #tpu.memory_space<vmem>>, %arg8: memref<1x1x16x64xbf16, #tpu.memory_space<vmem>>) attributes {dimension_semantics = [#tpu.dimension_semantics<parallel>, #tpu.dimension_semantics<parallel>, #tpu.dimension_semantics<parallel>], iteration_bounds = array<i64: 2, 2, 1>, scalar_prefetch = 0 : i64, scratch_operands = 0 : i64, tpu.core_type = #tpu.core_type<tc>, window_params = [{transform_indices = @transform_0, window_bounds = array<i64: 1, 1, 16, 32>}, {transform_indices = @transform_1, window_bounds = array<i64: 1, 1, 16, 32>}, {pipeline_mode = #tpu.pipeline_mode<synchronous>, transform_indices = @transform_2, window_bounds = array<i64: 2, 32, 64>}, {pipeline_mode = #tpu.pipeline_mode<synchronous>, transform_indices = @transform_3, window_bounds = array<i64: 1, 64>}, {transform_indices = @transform_4, window_bounds = array<i64: 1, 1, 16, 64>}, {transform_indices = @transform_5, window_bounds = array<i64: 1, 1, 16, 64>}]} {
    %c0 = arith.constant 0 : index
    %c0_0 = arith.constant 0 : index
    %c0_1 = arith.constant 0 : index
    %c0_2 = arith.constant 0 : index
    %0 = vector.load %arg3[%c0, %c0_0, %c0_1, %c0_2] : memref<1x1x16x32xbf16, #tpu.memory_space<vmem>>, vector<1x1x16x32xbf16>
    %1 = vector.shape_cast %0 : vector<1x1x16x32xbf16> to vector<16x32xbf16>
    %c0_3 = arith.constant 0 : index
    %c0_4 = arith.constant 0 : index
    %c0_5 = arith.constant 0 : index
    %2 = vector.load %arg5[%c0_3, %c0_4, %c0_5] : memref<2x32x64xbf16, #tpu.memory_space<vmem>>, vector<1x32x64xbf16>
    %3 = vector.shape_cast %2 : vector<1x32x64xbf16> to vector<32x64xbf16>
    %cst = arith.constant dense<0.000000e+00> : vector<16x64xf32>
    %4 = tpu.matmul %1, %3, %cst {dimension_numbers = #tpu.dot_dimension_numbers<[1], [0], [0], [1], [0, 0, 1, 1], [], []>} : vector<16x32xbf16>, vector<32x64xbf16>, vector<16x64xf32> -> vector<16x64xf32>
    %c0_6 = arith.constant 0 : index
    %c0_7 = arith.constant 0 : index
    %c0_8 = arith.constant 0 : index
    %c0_9 = arith.constant 0 : index
    %5 = vector.load %arg4[%c0_6, %c0_7, %c0_8, %c0_9] : memref<1x1x16x32xbf16, #tpu.memory_space<vmem>>, vector<1x1x16x32xbf16>
    %6 = vector.shape_cast %5 : vector<1x1x16x32xbf16> to vector<16x32xbf16>
    %c1 = arith.constant 1 : index
    %c0_10 = arith.constant 0 : index
    %c0_11 = arith.constant 0 : index
    %7 = vector.load %arg5[%c1, %c0_10, %c0_11] : memref<2x32x64xbf16, #tpu.memory_space<vmem>>, vector<1x32x64xbf16>
    %8 = vector.shape_cast %7 : vector<1x32x64xbf16> to vector<32x64xbf16>
    %cst_12 = arith.constant dense<0.000000e+00> : vector<16x64xf32>
    %9 = tpu.matmul %6, %8, %cst_12 {dimension_numbers = #tpu.dot_dimension_numbers<[1], [0], [0], [1], [0, 0, 1, 1], [], []>} : vector<16x32xbf16>, vector<32x64xbf16>, vector<16x64xf32> -> vector<16x64xf32>
    %10 = arith.addf %4, %9 : vector<16x64xf32>
    %c0_13 = arith.constant 0 : index
    %c0_14 = arith.constant 0 : index
    %11 = vector.load %arg6[%c0_13, %c0_14] : memref<1x64xf32, #tpu.memory_space<vmem>>, vector<1x64xf32>
    %12 = vector.broadcast %11 : vector<1x64xf32> to vector<16x64xf32>
    %13 = arith.addf %10, %12 : vector<16x64xf32>
    %c0_15 = arith.constant 0 : index
    %c0_16 = arith.constant 0 : index
    %c0_17 = arith.constant 0 : index
    %c0_18 = arith.constant 0 : index
    %14 = vector.load %arg7[%c0_15, %c0_16, %c0_17, %c0_18] : memref<1x1x16x64xbf16, #tpu.memory_space<vmem>>, vector<1x1x16x64xbf16>
    %15 = vector.shape_cast %14 : vector<1x1x16x64xbf16> to vector<16x64xbf16>
    %16 = arith.extf %15 : vector<16x64xbf16> to vector<16x64xf32>
    %17 = arith.addf %13, %16 : vector<16x64xf32>
    %cst_19 = arith.constant 0.000000e+00 : f32
    %18 = vector.broadcast %cst_19 : f32 to vector<16x64xf32>
    %19 = arith.maximumf %17, %18 : vector<16x64xf32>
    %20 = arith.truncf %19 : vector<16x64xf32> to vector<16x64xbf16>
    %c0_20 = arith.constant 0 : index
    %c0_21 = arith.constant 0 : index
    %c0_22 = arith.constant 0 : index
    %c0_23 = arith.constant 0 : index
    %21 = vector.load %arg8[%c0_20, %c0_21, %c0_22, %c0_23] : memref<1x1x16x64xbf16, #tpu.memory_space<vmem>>, vector<1x1x16x64xbf16>
    %22 = vector.shape_cast %21 : vector<1x1x16x64xbf16> to vector<16x64xbf16>
    %23 = vector.shape_cast %20 : vector<16x64xbf16> to vector<1x1x16x64xbf16>
    tpu.vector_store %arg8[%c0_20, %c0_21, %c0_22, %c0_23], %23 {strides = array<i32>} : memref<1x1x16x64xbf16, #tpu.memory_space<vmem>>, vector<1x1x16x64xbf16>,
    return
  }
  func.func @transform_0(%arg0: i32, %arg1: i32, %arg2: i32) -> (i32, i32, i32, i32) {
    %c1_i32 = arith.constant 1 : i32
    %0 = arith.muli %arg1, %c1_i32 : i32
    %c0_i32 = arith.constant 0 : i32
    %1 = arith.addi %0, %c0_i32 : i32
    %c0_i32_0 = arith.constant 0 : i32
    %c0_i32_1 = arith.constant 0 : i32
    return %arg0, %1, %arg2, %c0_i32_0 : i32, i32, i32, i32
  }
  func.func @transform_1(%arg0: i32, %arg1: i32, %arg2: i32) -> (i32, i32, i32, i32) {
    %c1_i32 = arith.constant 1 : i32
    %0 = arith.muli %arg1, %c1_i32 : i32
    %c1_i32_0 = arith.constant 1 : i32
    %1 = arith.addi %0, %c1_i32_0 : i32
    %c0_i32 = arith.constant 0 : i32
    %c0_i32_1 = arith.constant 0 : i32
    return %arg0, %1, %arg2, %c0_i32 : i32, i32, i32, i32
  }
  func.func @transform_2(%arg0: i32, %arg1: i32, %arg2: i32) -> (i32, i32, i32) {
    %c0_i32 = arith.constant 0 : i32
    %c0_i32_0 = arith.constant 0 : i32
    %c0_i32_1 = arith.constant 0 : i32
    %c0_i32_2 = arith.constant 0 : i32
    return %c0_i32, %c0_i32_0, %c0_i32_1 : i32, i32, i32
  }
  func.func @transform_3(%arg0: i32, %arg1: i32, %arg2: i32) -> (i32, i32) {
    %c0_i32 = arith.constant 0 : i32
    %c0_i32_0 = arith.constant 0 : i32
    %c0_i32_1 = arith.constant 0 : i32
    return %c0_i32, %c0_i32_0 : i32, i32
  }
  func.func @transform_4(%arg0: i32, %arg1: i32, %arg2: i32) -> (i32, i32, i32, i32) {
    %c0_i32 = arith.constant 0 : i32
    %c0_i32_0 = arith.constant 0 : i32
    return %arg0, %arg1, %arg2, %c0_i32 : i32, i32, i32, i32
  }
  func.func @transform_5(%arg0: i32, %arg1: i32, %arg2: i32) -> (i32, i32, i32, i32) {
    %c0_i32 = arith.constant 0 : i32
    %c0_i32_0 = arith.constant 0 : i32
    return %arg0, %arg1, %arg2, %c0_i32 : i32, i32, i32, i32
  }
}

module attributes {stable_mosaic.version = 11 : i64} {
  func.func @kernel(%arg0: i32, %arg1: i32, %arg2: i32, %arg3: memref<1x1x64x32xbf16, #tpu.memory_space<vmem>>, %arg4: memref<1x1x64x32xbf16, #tpu.memory_space<vmem>>, %arg5: memref<2x32x32xbf16, #tpu.memory_space<vmem>>, %arg6: memref<1x32xf32, #tpu.memory_space<vmem>>, %arg7: memref<1x1x64x32xbf16, #tpu.memory_space<vmem>>) attributes {dimension_semantics = [#tpu.dimension_semantics<parallel>, #tpu.dimension_semantics<parallel>, #tpu.dimension_semantics<parallel>], iteration_bounds = array<i64: 2, 4, 1>, scalar_prefetch = 0 : i64, scratch_operands = 0 : i64, tpu.core_type = #tpu.core_type<tc>, window_params = [{transform_indices = @transform_0, window_bounds = array<i64: 1, 1, 64, 32>}, {transform_indices = @transform_1, window_bounds = array<i64: 1, 1, 64, 32>}, {pipeline_mode = #tpu.pipeline_mode<synchronous>, transform_indices = @transform_2, window_bounds = array<i64: 2, 32, 32>}, {pipeline_mode = #tpu.pipeline_mode<synchronous>, transform_indices = @transform_3, window_bounds = array<i64: 1, 32>}, {transform_indices = @transform_4, window_bounds = array<i64: 1, 1, 64, 32>}]} {
    %c0 = arith.constant 0 : index
    %c0_0 = arith.constant 0 : index
    %c0_1 = arith.constant 0 : index
    %c0_2 = arith.constant 0 : index
    %0 = vector.load %arg3[%c0, %c0_0, %c0_1, %c0_2] : memref<1x1x64x32xbf16, #tpu.memory_space<vmem>>, vector<1x1x64x32xbf16>
    %1 = vector.shape_cast %0 : vector<1x1x64x32xbf16> to vector<64x32xbf16>
    %c0_3 = arith.constant 0 : index
    %c0_4 = arith.constant 0 : index
    %c0_5 = arith.constant 0 : index
    %2 = vector.load %arg5[%c0_3, %c0_4, %c0_5] : memref<2x32x32xbf16, #tpu.memory_space<vmem>>, vector<1x32x32xbf16>
    %3 = vector.shape_cast %2 : vector<1x32x32xbf16> to vector<32x32xbf16>
    %cst = arith.constant dense<0.000000e+00> : vector<64x32xf32>
    %4 = tpu.matmul %1, %3, %cst {dimension_numbers = #tpu.dot_dimension_numbers<[1], [0], [0], [1], [0, 0, 1, 1], [], []>} : vector<64x32xbf16>, vector<32x32xbf16>, vector<64x32xf32> -> vector<64x32xf32>
    %c0_6 = arith.constant 0 : index
    %c0_7 = arith.constant 0 : index
    %c0_8 = arith.constant 0 : index
    %c0_9 = arith.constant 0 : index
    %5 = vector.load %arg4[%c0_6, %c0_7, %c0_8, %c0_9] : memref<1x1x64x32xbf16, #tpu.memory_space<vmem>>, vector<1x1x64x32xbf16>
    %6 = vector.shape_cast %5 : vector<1x1x64x32xbf16> to vector<64x32xbf16>
    %c1 = arith.constant 1 : index
    %c0_10 = arith.constant 0 : index
    %c0_11 = arith.constant 0 : index
    %7 = vector.load %arg5[%c1, %c0_10, %c0_11] : memref<2x32x32xbf16, #tpu.memory_space<vmem>>, vector<1x32x32xbf16>
    %8 = vector.shape_cast %7 : vector<1x32x32xbf16> to vector<32x32xbf16>
    %cst_12 = arith.constant dense<0.000000e+00> : vector<64x32xf32>
    %9 = tpu.matmul %6, %8, %cst_12 {dimension_numbers = #tpu.dot_dimension_numbers<[1], [0], [0], [1], [0, 0, 1, 1], [], []>} : vector<64x32xbf16>, vector<32x32xbf16>, vector<64x32xf32> -> vector<64x32xf32>
    %10 = arith.addf %4, %9 : vector<64x32xf32>
    %c0_13 = arith.constant 0 : index
    %c0_14 = arith.constant 0 : index
    %11 = vector.load %arg6[%c0_13, %c0_14] : memref<1x32xf32, #tpu.memory_space<vmem>>, vector<1x32xf32>
    %12 = vector.broadcast %11 : vector<1x32xf32> to vector<64x32xf32>
    %13 = arith.addf %10, %12 : vector<64x32xf32>
    %14 = arith.truncf %13 : vector<64x32xf32> to vector<64x32xbf16>
    %c0_15 = arith.constant 0 : index
    %c0_16 = arith.constant 0 : index
    %c0_17 = arith.constant 0 : index
    %c0_18 = arith.constant 0 : index
    %15 = vector.load %arg7[%c0_15, %c0_16, %c0_17, %c0_18] : memref<1x1x64x32xbf16, #tpu.memory_space<vmem>>, vector<1x1x64x32xbf16>
    %16 = vector.shape_cast %15 : vector<1x1x64x32xbf16> to vector<64x32xbf16>
    %17 = vector.shape_cast %14 : vector<64x32xbf16> to vector<1x1x64x32xbf16>
    tpu.vector_store %arg7[%c0_15, %c0_16, %c0_17, %c0_18], %17 {strides = array<i32>} : memref<1x1x64x32xbf16, #tpu.memory_space<vmem>>, vector<1x1x64x32xbf16>,
    return
  }
  func.func @transform_0(%arg0: i32, %arg1: i32, %arg2: i32) -> (i32, i32, i32, i32) {
    %c1_i32 = arith.constant 1 : i32
    %0 = arith.muli %arg1, %c1_i32 : i32
    %c0_i32 = arith.constant 0 : i32
    %1 = arith.addi %0, %c0_i32 : i32
    %c0_i32_0 = arith.constant 0 : i32
    %c0_i32_1 = arith.constant 0 : i32
    return %arg0, %1, %arg2, %c0_i32_0 : i32, i32, i32, i32
  }
  func.func @transform_1(%arg0: i32, %arg1: i32, %arg2: i32) -> (i32, i32, i32, i32) {
    %c1_i32 = arith.constant 1 : i32
    %0 = arith.muli %arg1, %c1_i32 : i32
    %c1_i32_0 = arith.constant 1 : i32
    %1 = arith.addi %0, %c1_i32_0 : i32
    %c0_i32 = arith.constant 0 : i32
    %c0_i32_1 = arith.constant 0 : i32
    return %arg0, %1, %arg2, %c0_i32 : i32, i32, i32, i32
  }
  func.func @transform_2(%arg0: i32, %arg1: i32, %arg2: i32) -> (i32, i32, i32) {
    %c0_i32 = arith.constant 0 : i32
    %c0_i32_0 = arith.constant 0 : i32
    %c0_i32_1 = arith.constant 0 : i32
    %c0_i32_2 = arith.constant 0 : i32
    return %c0_i32, %c0_i32_0, %c0_i32_1 : i32, i32, i32
  }
  func.func @transform_3(%arg0: i32, %arg1: i32, %arg2: i32) -> (i32, i32) {
    %c0_i32 = arith.constant 0 : i32
    %c0_i32_0 = arith.constant 0 : i32
    %c0_i32_1 = arith.constant 0 : i32
    return %c0_i32, %c0_i32_0 : i32, i32
  }
  func.func @transform_4(%arg0: i32, %arg1: i32, %arg2: i32) -> (i32, i32, i32, i32) {
    %c0_i32 = arith.constant 0 : i32
    %c0_i32_0 = arith.constant 0 : i32
    return %arg0, %arg1, %arg2, %c0_i32 : i32, i32, i32, i32
  }
}

</mosaic_0001>

<llo_original>
// kernel: _lambda_.6
$region0: #{_lambda_.6}
  #allocation0 [shape = 'u32[]', space=smem, size = 0x4, offset = 0x4, fixed_abs, tag = 'smem constant byte address 0x4 - core index']
  #allocation1 [shape = 'u32[144,128]{1,0:T(1,128)}', space=vmem, size = 0x12000, scoped, tag = 'internal scratch']
  %s0 = inlined_call_operand.vmem [shape: bf16[2,10,64,36], index: 0, kind: input, shape index: {}, may-alias: {0,1,2}]
  %s1 = inlined_call_operand.vmem [shape: bf16[2,10,64,36], index: 1, kind: input, shape index: {}, may-alias: {0,1,2}]
  %s2 = inlined_call_operand.vmem [shape: bf16[2,10,64,36], index: 2, kind: input, shape index: {}, may-alias: {0,1,2}]
  %s3 = inlined_call_operand.vmem [shape: bf16[3,36,8], index: 3, kind: input, shape index: {}]
  %s4 = inlined_call_operand.vmem [shape: f32[1,8], index: 4, kind: input, shape index: {}]
  %s5 = inlined_call_operand.vmem [shape: bf16[2,4,64,8], index: 5, kind: output, shape index: {}]
  %s6 = sld [smem:[#allocation0]]
  $region53: #{_lambda_.6} parent=0
    _
  %s8 = ssub.s32 1, %s6
  %s9 = scalar_select 0, %s8, %s6
  loop: start=0, step=1, limit=10
  $region2: #{_lambda_.6} parent=0 // loop_pre_header
    _
  $region3: #{_lambda_.6} parent=0 // loop_header
    %s11 = sphi 0, %s15
    %p12 = scmp.ge.s32.totalorder %s11, 10
    %s18 = sphi 0, %s37
    %s19 = sphi 0, %s33
    %s20 = sphi 0, %s29
    %s21 = sphi 0, %s18
    %s22 = sphi 0, %s19
    %s23 = sphi 0, %s20
    %s24 = sphi 0, %s21
    %s25 = sphi 0, %s22
    %s26 = sphi 0, %s23
    %s46 = sphi 0, %s48
    %s49 = sphi 0, %s46
    %s50 = sphi 0, %s49
    %s66 = sphi 0, %s50
    %s80 = sphi 0, %s82
    %s83 = sphi 0, %s80
    %s84 = sphi 0, %s83
    %s100 = sphi 0, %s84
    %s114 = sphi 0, %s116
    %s117 = sphi 0, %s114
    %s118 = sphi 0, %s117
    %s134 = sphi 0, %s118
    %s138 = sphi 0, %s138
    %s140 = sphi 0, %s138
    %s141 = sphi 0, %s140
    %s155 = sphi 0, %s141
    %s159 = sphi 0, %s159
    %s161 = sphi 0, %s159
    %s162 = sphi 0, %s161
    %s176 = sphi 0, %s162
    %s186 = sphi 0, %s188
    %s189 = sphi 0, %s186
    %s190 = sphi 0, %s189
    %s206 = sphi 0, %s190
  $region4: #{_lambda_.6} parent=0 // loop_header_branch
    %14 = sbr.rel (%p12) target = $region8
  $region5: #{_lambda_.6} parent=0 // loop_body
    %s16 = ssub.s32 %s11, 1
    %s17 = ssub.s32 %s11, 2
    %s27 = sadd.s32 1, %s20
    %p28 = scmp.ge.s32.totalorder %s27, 1
    %s29 = scalar_select %p28, 0, %s27
    %s30 = sadd.s32 1, %s19
    %s31 = scalar_select %p28, %s30, %s19
    %p32 = scmp.ge.s32.totalorder %s31, 4
    %s33 = scalar_select %p32, 0, %s31
    %s34 = sadd.s32 1, %s18
    %s35 = scalar_select %p32, %s34, %s18
    %p36 = scmp.ge.s32.totalorder %s35, 2
    %s37 = scalar_select %p36, 0, %s35
    %s38 = smul.u32 %s19, 2
    %s39 = smul.u32 %s33, 2
    %s40 = ssub.s32 %s18, %s37
    %s41 = ssub.s32 %s38, %s39
    %s42 = sor.u32 %s40, %s41
    %s43 = ssub.s32 %s20, %s29
    %s44 = sor.u32 %s42, %s43
    %p45 = scmp.eq.s32.totalorder %s44, 0
    %s47 = sadd.s32 %s46, 1
    %s48 = scalar_select %p45, %s46, %s47
    %p51 = pneg %p45
    %p52 = scmp.eq.s32.totalorder %s11, 7
    %p53 = por %p51, %p52
    %p54 = scmp.ne.s32.totalorder %s46, %s49
    %p55 = scmp.eq.s32.totalorder %s11, 0
    %p56 = por %p54, %p55
    %p57 = scmp.ne.s32.totalorder %s46, %s49
    %p58 = scmp.eq.s32.totalorder %s16, 7
    %p59 = por %p57, %p58
    %p60 = scmp.ne.s32.totalorder %s49, %s50
    %p61 = scmp.eq.s32.totalorder %s16, 0
    %p62 = por %p60, %p61
    %p63 = scmp.ne.s32.totalorder %s49, %s50
    %p64 = scmp.eq.s32.totalorder %s17, 7
    %p65 = por %p63, %p64
    %p67 = scmp.ne.s32.totalorder %s50, %s66
    %p68 = scmp.eq.s32.totalorder %s17, 0
    %p69 = por %p67, %p68
    %s70 = smul.u32 %s19, 2
    %s71 = sadd.s32 %s70, 1
    %s72 = smul.u32 %s33, 2
    %s73 = sadd.s32 %s72, 1
    %s74 = ssub.s32 %s18, %s37
    %s75 = ssub.s32 %s71, %s73
    %s76 = sor.u32 %s74, %s75
    %s77 = ssub.s32 %s20, %s29
    %s78 = sor.u32 %s76, %s77
    %p79 = scmp.eq.s32.totalorder %s78, 0
    %s81 = sadd.s32 %s80, 1
    %s82 = scalar_select %p79, %s80, %s81
    %p85 = pneg %p79
    %p86 = scmp.eq.s32.totalorder %s11, 7
    %p87 = por %p85, %p86
    %p88 = scmp.ne.s32.totalorder %s80, %s83
    %p89 = scmp.eq.s32.totalorder %s11, 0
    %p90 = por %p88, %p89
    %p91 = scmp.ne.s32.totalorder %s80, %s83
    %p92 = scmp.eq.s32.totalorder %s16, 7
    %p93 = por %p91, %p92
    %p94 = scmp.ne.s32.totalorder %s83, %s84
    %p95 = scmp.eq.s32.totalorder %s16, 0
    %p96 = por %p94, %p95
    %p97 = scmp.ne.s32.totalorder %s83, %s84
    %p98 = scmp.eq.s32.totalorder %s17, 7
    %p99 = por %p97, %p98
    %p101 = scmp.ne.s32.totalorder %s84, %s100
    %p102 = scmp.eq.s32.totalorder %s17, 0
    %p103 = por %p101, %p102
    %s104 = smul.u32 %s19, 2
    %s105 = sadd.s32 %s104, 2
    %s106 = smul.u32 %s33, 2
    %s107 = sadd.s32 %s106, 2
    %s108 = ssub.s32 %s18, %s37
    %s109 = ssub.s32 %s105, %s107
    %s110 = sor.u32 %s108, %s109
    %s111 = ssub.s32 %s20, %s29
    %s112 = sor.u32 %s110, %s111
    %p113 = scmp.eq.s32.totalorder %s112, 0
    %s115 = sadd.s32 %s114, 1
    %s116 = scalar_select %p113, %s114, %s115
    %p119 = pneg %p113
    %p120 = scmp.eq.s32.totalorder %s11, 7
    %p121 = por %p119, %p120
    %p122 = scmp.ne.s32.totalorder %s114, %s117
    %p123 = scmp.eq.s32.totalorder %s11, 0
    %p124 = por %p122, %p123
    %p125 = scmp.ne.s32.totalorder %s114, %s117
    %p126 = scmp.eq.s32.totalorder %s16, 7
    %p127 = por %p125, %p126
    %p128 = scmp.ne.s32.totalorder %s117, %s118
    %p129 = scmp.eq.s32.totalorder %s16, 0
    %p130 = por %p128, %p129
    %p131 = scmp.ne.s32.totalorder %s117, %s118
    %p132 = scmp.eq.s32.totalorder %s17, 7
    %p133 = por %p131, %p132
    %p135 = scmp.ne.s32.totalorder %s118, %s134
    %p136 = scmp.eq.s32.totalorder %s17, 0
    %p137 = por %p135, %p136
    %s139 = sadd.s32 %s138, 1
    %p142 = scmp.eq.s32.totalorder %s11, 7
    %p143 = scmp.ne.s32.totalorder %s138, %s140
    %p144 = scmp.eq.s32.totalorder %s11, 0
    %p145 = por %p143, %p144
    %p146 = scmp.ne.s32.totalorder %s138, %s140
    %p147 = scmp.eq.s32.totalorder %s16, 7
    %p148 = por %p146, %p147
    %p149 = scmp.ne.s32.totalorder %s140, %s141
    %p150 = scmp.eq.s32.totalorder %s16, 0
    %p151 = por %p149, %p150
    %p152 = scmp.ne.s32.totalorder %s140, %s141
    %p153 = scmp.eq.s32.totalorder %s17, 7
    %p154 = por %p152, %p153
    %p156 = scmp.ne.s32.totalorder %s141, %s155
    %p157 = scmp.eq.s32.totalorder %s17, 0
    %p158 = por %p156, %p157
    %s160 = sadd.s32 %s159, 1
    %p163 = scmp.eq.s32.totalorder %s11, 7
    %p164 = scmp.ne.s32.totalorder %s159, %s161
    %p165 = scmp.eq.s32.totalorder %s11, 0
    %p166 = por %p164, %p165
    %p167 = scmp.ne.s32.totalorder %s159, %s161
    %p168 = scmp.eq.s32.totalorder %s16, 7
    %p169 = por %p167, %p168
    %p170 = scmp.ne.s32.totalorder %s161, %s162
    %p171 = scmp.eq.s32.totalorder %s16, 0
    %p172 = por %p170, %p171
    %p173 = scmp.ne.s32.totalorder %s161, %s162
    %p174 = scmp.eq.s32.totalorder %s17, 7
    %p175 = por %p173, %p174
    %p177 = scmp.ne.s32.totalorder %s162, %s176
    %p178 = scmp.eq.s32.totalorder %s17, 0
    %p179 = por %p177, %p178
    %s180 = ssub.s32 %s18, %s37
    %s181 = ssub.s32 %s19, %s33
    %s182 = sor.u32 %s180, %s181
    %s183 = ssub.s32 %s20, %s29
    %s184 = sor.u32 %s182, %s183
    %p185 = scmp.eq.s32.totalorder %s184, 0
    %s187 = sadd.s32 %s186, 1
    %s188 = scalar_select %p185, %s186, %s187
    %p191 = pneg %p185
    %p192 = scmp.eq.s32.totalorder %s11, 7
    %p193 = por %p191, %p192
    %p194 = scmp.ne.s32.totalorder %s186, %s189
    %p195 = scmp.eq.s32.totalorder %s11, 0
    %p196 = por %p194, %p195
    %p197 = scmp.ne.s32.totalorder %s186, %s189
    %p198 = scmp.eq.s32.totalorder %s16, 7
    %p199 = por %p197, %p198
    %p200 = scmp.ne.s32.totalorder %s189, %s190
    %p201 = scmp.eq.s32.totalorder %s16, 0
    %p202 = por %p200, %p201
    %p203 = scmp.ne.s32.totalorder %s189, %s190
    %p204 = scmp.eq.s32.totalorder %s17, 7
    %p205 = por %p203, %p204
    %p207 = scmp.ne.s32.totalorder %s190, %s206
    %p208 = scmp.eq.s32.totalorder %s17, 0
    %p209 = por %p207, %p208
    %p210 = scmp.le.s32.totalorder 1, %s11
    %p211 = scmp.lt.s32.totalorder %s11, 9
    %p212 = pnand %p210, %p211
    %p213 = pneg %p212
    // Predicated region
    $region9: #{_lambda_.6} parent=5 // pred_check
      _
    $region10: #{_lambda_.6} parent=5 // pred_check_branch
      %215 = sbr.rel (%p212) target = $region12
    $region11: #{_lambda_.6} parent=5 // pred_region
      %s216 = ssub.s32 %s11, 1
      // Predicated region
      $region13: #{_lambda_.6} parent=11 // pred_check
        %p217 = pneg %p151
      $region14: #{_lambda_.6} parent=11 // pred_check_branch
        %219 = sbr.rel (%p217) target = $region16
      $region15: #{_lambda_.6} parent=11 // pred_region
        _
      $region16: #{_lambda_.6} parent=11 // pred_fallthru
        _
      // Predicated region
      $region17: #{_lambda_.6} parent=11 // pred_check
        %p220 = pneg %p172
      $region18: #{_lambda_.6} parent=11 // pred_check_branch
        %222 = sbr.rel (%p220) target = $region20
      $region19: #{_lambda_.6} parent=11 // pred_region
        _
      $region20: #{_lambda_.6} parent=11 // pred_fallthru
        _
    $region12: #{_lambda_.6} parent=5 // pred_fallthru
      _
    %p223 = scmp.lt.s32.totalorder %s11, 8
    // Predicated region
    $region21: #{_lambda_.6} parent=5 // pred_check
      %p224 = pneg %p223
    $region22: #{_lambda_.6} parent=5 // pred_check_branch
      %226 = sbr.rel (%p224) target = $region24
    $region23: #{_lambda_.6} parent=5 // pred_region
      // Predicated region
      $region25: #{_lambda_.6} parent=23 // pred_check
        %p227 = pneg %p56
      $region26: #{_lambda_.6} parent=23 // pred_check_branch
        %229 = sbr.rel (%p227) target = $region28
      $region27: #{_lambda_.6} parent=23 // pred_region
        %s230 = smul.u32 %s19, 2
        %s231 = smul.u32 8, %s20
        %p232 = scmp.lt.s32.totalorder %s18, 1
        %s233 = scalar_select %p232, %s18, 1
        %p234 = scmp.lt.s32.totalorder %s230, 9
        %s235 = scalar_select %p234, %s230, 9
        %p236 = scmp.lt.s32.totalorder %s231, 7
        %s237 = scalar_select %p236, %s231, 7
        %s238 = smul.addr %s235, 8
        %s239 = sadd.s32 %s237, %s238
        %s240 = smul.addr %s233, 80
        %s241 = sadd.s32 %s239, %s240
        %s242 = smul.addr %s241, 4
        %s243 = scalar_lea.vmem %s0, %s242
        %s244 = smul.u32 %s19, 2
        %s245 = smul.u32 8, %s20
      $region28: #{_lambda_.6} parent=23 // pred_fallthru
        _
      // Predicated region
      $region29: #{_lambda_.6} parent=23 // pred_check
        %p246 = pneg %p90
      $region30: #{_lambda_.6} parent=23 // pred_check_branch
        %248 = sbr.rel (%p246) target = $region32
      $region31: #{_lambda_.6} parent=23 // pred_region
        %s249 = smul.u32 %s19, 2
        %s250 = sadd.s32 %s249, 1
        %s251 = smul.u32 8, %s20
        %p252 = scmp.lt.s32.totalorder %s18, 1
        %s253 = scalar_select %p252, %s18, 1
        %p254 = scmp.lt.s32.totalorder %s250, 9
        %s255 = scalar_select %p254, %s250, 9
        %p256 = scmp.lt.s32.totalorder %s251, 7
        %s257 = scalar_select %p256, %s251, 7
        %s258 = smul.addr %s255, 8
        %s259 = sadd.s32 %s257, %s258
        %s260 = smul.addr %s253, 80
        %s261 = sadd.s32 %s259, %s260
        %s262 = smul.addr %s261, 4
        %s263 = scalar_lea.vmem %s1, %s262
        %s264 = smul.u32 %s19, 2
        %s265 = sadd.s32 %s264, 1
        %s266 = smul.u32 8, %s20
      $region32: #{_lambda_.6} parent=23 // pred_fallthru
        _
      // Predicated region
      $region33: #{_lambda_.6} parent=23 // pred_check
        %p267 = pneg %p124
      $region34: #{_lambda_.6} parent=23 // pred_check_branch
        %269 = sbr.rel (%p267) target = $region36
      $region35: #{_lambda_.6} parent=23 // pred_region
        %s270 = smul.u32 %s19, 2
        %s271 = sadd.s32 %s270, 2
        %s272 = smul.u32 8, %s20
        %p273 = scmp.lt.s32.totalorder %s18, 1
        %s274 = scalar_select %p273, %s18, 1
        %p275 = scmp.lt.s32.totalorder %s271, 9
        %s276 = scalar_select %p275, %s271, 9
        %p277 = scmp.lt.s32.totalorder %s272, 7
        %s278 = scalar_select %p277, %s272, 7
        %s279 = smul.addr %s276, 8
        %s280 = sadd.s32 %s278, %s279
        %s281 = smul.addr %s274, 80
        %s282 = sadd.s32 %s280, %s281
        %s283 = smul.addr %s282, 4
        %s284 = scalar_lea.vmem %s2, %s283
        %s285 = smul.u32 %s19, 2
        %s286 = sadd.s32 %s285, 2
        %s287 = smul.u32 8, %s20
      $region36: #{_lambda_.6} parent=23 // pred_fallthru
        _
    $region24: #{_lambda_.6} parent=5 // pred_fallthru
      _
    %p288 = scmp.le.s32.totalorder 1, %s11
    %p289 = scmp.lt.s32.totalorder %s11, 9
    %p290 = pnand %p288, %p289
    %p291 = pneg %p290
    // Predicated region
    $region37: #{_lambda_.6} parent=5 // pred_check
      _
    $region38: #{_lambda_.6} parent=5 // pred_check_branch
      %293 = sbr.rel (%p290) target = $region40
    $region39: #{_lambda_.6} parent=5 // pred_region
      %s294 = ssub.s32 %s11, 1
      %s295 = smul.u32 %s22, 2
      %s296 = smul.u32 8, %s23
      %p297 = scmp.lt.s32.totalorder %s21, 1
      %s298 = scalar_select %p297, %s21, 1
      %p299 = scmp.lt.s32.totalorder %s295, 9
      %s300 = scalar_select %p299, %s295, 9
      %p301 = scmp.lt.s32.totalorder %s296, 7
      %s302 = scalar_select %p301, %s296, 7
      %s303 = smul.addr %s300, 8
      %s304 = sadd.s32 %s302, %s303
      %s305 = smul.addr %s298, 80
      %s306 = sadd.s32 %s304, %s305
      %s307 = smul.addr %s306, 4
      %s308 = scalar_lea.vmem %s0, %s307
      %p309 = pneg %p62
      %p310 = pneg %p59
      %s311 = smul.u32 %s22, 2
      %s312 = sadd.s32 %s311, 1
      %s313 = smul.u32 8, %s23
      %p314 = scmp.lt.s32.totalorder %s21, 1
      %s315 = scalar_select %p314, %s21, 1
      %p316 = scmp.lt.s32.totalorder %s312, 9
      %s317 = scalar_select %p316, %s312, 9
      %p318 = scmp.lt.s32.totalorder %s313, 7
      %s319 = scalar_select %p318, %s313, 7
      %s320 = smul.addr %s317, 8
      %s321 = sadd.s32 %s319, %s320
      %s322 = smul.addr %s315, 80
      %s323 = sadd.s32 %s321, %s322
      %s324 = smul.addr %s323, 4
      %s325 = scalar_lea.vmem %s1, %s324
      %p326 = pneg %p96
      %p327 = pneg %p93
      %s328 = smul.u32 %s22, 2
      %s329 = sadd.s32 %s328, 2
      %s330 = smul.u32 8, %s23
      %p331 = scmp.lt.s32.totalorder %s21, 1
      %s332 = scalar_select %p331, %s21, 1
      %p333 = scmp.lt.s32.totalorder %s329, 9
      %s334 = scalar_select %p333, %s329, 9
      %p335 = scmp.lt.s32.totalorder %s330, 7
      %s336 = scalar_select %p335, %s330, 7
      %s337 = smul.addr %s334, 8
      %s338 = sadd.s32 %s336, %s337
      %s339 = smul.addr %s332, 80
      %s340 = sadd.s32 %s338, %s339
      %s341 = smul.addr %s340, 4
      %s342 = scalar_lea.vmem %s2, %s341
      %p343 = pneg %p130
      %p344 = pneg %p127
      %p345 = pneg %p151
      %p346 = pneg %p148
      %p347 = pneg %p172
      %p348 = pneg %p169
      %p349 = pneg %p202
      %p350 = pneg %p199
      %s351 = smul.u32 8, %s23
      %p352 = scmp.lt.s32.totalorder %s21, 1
      %s353 = scalar_select %p352, %s21, 1
      %p354 = scmp.lt.s32.totalorder %s22, 3
      %s355 = scalar_select %p354, %s22, 3
      %p356 = scmp.lt.s32.totalorder %s351, 7
      %s357 = scalar_select %p356, %s351, 7
      %s358 = smul.addr %s355, 8
      %s359 = sadd.s32 %s357, %s358
      %s360 = smul.addr %s353, 32
      %s361 = sadd.s32 %s359, %s360
      %s362 = smul.addr %s361, 4
      %s363 = scalar_lea.vmem %s5, %s362
      %s364 = smul.u32 %s22, 2
      %s365 = smul.u32 8, %s23
      %p366 = scmp.lt.s32.totalorder %s21, 1
      %s367 = scalar_select %p366, %s21, 1
      %p368 = scmp.lt.s32.totalorder %s364, 9
      %s369 = scalar_select %p368, %s364, 9
      %p370 = scmp.lt.s32.totalorder %s365, 7
      %s371 = scalar_select %p370, %s365, 7
      %s372 = smul.addr %s369, 8
      %s373 = sadd.s32 %s371, %s372
      %s374 = smul.addr %s367, 80
      %s375 = sadd.s32 %s373, %s374
      %s376 = smul.addr %s375, 4
      %s377 = scalar_lea.vmem %s0, %s376
      %s378 = smul.u32 %s22, 2
      %s379 = smul.u32 8, %s23
      %s380 = smul.u32 %s22, 2
      %s381 = sadd.s32 %s380, 1
      %s382 = smul.u32 8, %s23
      %p383 = scmp.lt.s32.totalorder %s21, 1
      %s384 = scalar_select %p383, %s21, 1
      %p385 = scmp.lt.s32.totalorder %s381, 9
      %s386 = scalar_select %p385, %s381, 9
      %p387 = scmp.lt.s32.totalorder %s382, 7
      %s388 = scalar_select %p387, %s382, 7
      %s389 = smul.addr %s386, 8
      %s390 = sadd.s32 %s388, %s389
      %s391 = smul.addr %s384, 80
      %s392 = sadd.s32 %s390, %s391
      %s393 = smul.addr %s392, 4
      %s394 = scalar_lea.vmem %s1, %s393
      %s395 = smul.u32 %s22, 2
      %s396 = sadd.s32 %s395, 1
      %s397 = smul.u32 8, %s23
      %s398 = smul.u32 %s22, 2
      %s399 = sadd.s32 %s398, 2
      %s400 = smul.u32 8, %s23
      %p401 = scmp.lt.s32.totalorder %s21, 1
      %s402 = scalar_select %p401, %s21, 1
      %p403 = scmp.lt.s32.totalorder %s399, 9
      %s404 = scalar_select %p403, %s399, 9
      %p405 = scmp.lt.s32.totalorder %s400, 7
      %s406 = scalar_select %p405, %s400, 7
      %s407 = smul.addr %s404, 8
      %s408 = sadd.s32 %s406, %s407
      %s409 = smul.addr %s402, 80
      %s410 = sadd.s32 %s408, %s409
      %s411 = smul.addr %s410, 4
      %s412 = scalar_lea.vmem %s2, %s411
      %s413 = smul.u32 %s22, 2
      %s414 = sadd.s32 %s413, 2
      %s415 = smul.u32 8, %s23
      %s416 = smul.u32 8, %s23
      %p417 = scmp.lt.s32.totalorder %s21, 1
      %s418 = scalar_select %p417, %s21, 1
      %p419 = scmp.lt.s32.totalorder %s22, 3
      %s420 = scalar_select %p419, %s22, 3
      %p421 = scmp.lt.s32.totalorder %s416, 7
      %s422 = scalar_select %p421, %s416, 7
      %s423 = smul.addr %s420, 8
      %s424 = sadd.s32 %s422, %s423
      %s425 = smul.addr %s418, 32
      %s426 = sadd.s32 %s424, %s425
      %s427 = smul.addr %s426, 4
      %s428 = scalar_lea.vmem %s5, %s427
      %s429 = smul.u32 8, %s23
      %v431 = vld [vmem:[%s377] sm:$0xf]
      %v432 = vld [vmem:[%s377 + $0x4] sm:$0xf]
      %v433 = vld [vmem:[%s377 + $0x8] sm:$0xf]
      %v434 = vld [vmem:[%s377 + $0xc] sm:$0xf]
      %v435 = vld [vmem:[%s377 + $0x10] sm:$0xf]
      %v436 = vld [vmem:[%s377 + $0x14] sm:$0xf]
      %v437 = vld [vmem:[%s377 + $0x18] sm:$0xf]
      %v438 = vld [vmem:[%s377 + $0x1c] sm:$0xf]
      %v439 = vld [vmem:[%s3] sm:$0xf]
      %v440 = vld [vmem:[%s3 + $0x4] sm:$0xf]
      %v441 = vld [vmem:[%s3 + $0x8] sm:$0xf]
      %v442 = vld [vmem:[%s3 + $0xc] sm:$0xf]
      %v443 = vld [vmem:[%s3 + $0x10] sm:$0x3]
      %v444 = vld [vmem:[%s394] sm:$0xf]
      %v445 = vld [vmem:[%s394 + $0x4] sm:$0xf]
      %v446 = vld [vmem:[%s394 + $0x8] sm:$0xf]
      %v447 = vld [vmem:[%s394 + $0xc] sm:$0xf]
      %v448 = vld [vmem:[%s394 + $0x10] sm:$0xf]
      %v449 = vld [vmem:[%s394 + $0x14] sm:$0xf]
      %v450 = vld [vmem:[%s394 + $0x18] sm:$0xf]
      %v451 = vld [vmem:[%s394 + $0x1c] sm:$0xf]
      %s452 = scalar_lea.vmem %s3, 20
      %v453 = vld [vmem:[%s452] sm:$0xf]
      %v454 = vld [vmem:[%s452 + $0x4] sm:$0xf]
      %v455 = vld [vmem:[%s452 + $0x8] sm:$0xf]
      %v456 = vld [vmem:[%s452 + $0xc] sm:$0xf]
      %v457 = vld [vmem:[%s452 + $0x10] sm:$0x3]
      %v466 = vunpack.c.l.b16 %v444
      %v467 = vunpack.c.l.b16 %v445
      %v468 = vunpack.c.l.b16 %v446
      %v469 = vunpack.c.l.b16 %v447
      %v470 = vunpack.c.l.b16 %v448
      %v471 = vunpack.c.l.b16 %v449
      %v472 = vunpack.c.l.b16 %v450
      %v473 = vunpack.c.l.b16 %v451
      %v474 = vpack.c.b16 %v467, %v466
      %v475 = vpack.c.b16 %v469, %v468
      %v476 = vpack.c.b16 %v471, %v470
      %v477 = vpack.c.b16 %v473, %v472
      %v483 = vunpack.c.l.b16 %v453
      %v484 = vunpack.c.l.b16 %v454
      %v485 = vunpack.c.l.b16 %v455
      %v486 = vunpack.c.l.b16 %v456
      %v487 = vunpack.c.l.b16 %v457
      %v488 = vpack.c.b16 %v484, %v483
      %v489 = vpack.c.b16 %v486, %v485
      %v490 = vpack.c.b16 %v487, %v487
      %vm493 = vcmask 293888
      %v495 = vsel %vm493, %v474, 0
      %v498 = vsel %vm493, %v475, 0
      %v501 = vsel %vm493, %v476, 0
      %v504 = vsel %vm493, %v477, 0
      %vm506 = vcmask 1041408
      %v508 = vsel %vm506, %v490, 0
      %510 = vmatprep.subr.bf16.mxu0 0
      %511 = vmatpush1.bf16.msra.mxu0 %v488
      %512 = vmatprep.subr.bf16.mxu0 0
      %513 = vmatpush1.bf16.msra.mxu0 %v489
      %514 = vmatprep.subr.bf16.mxu0 0
      %515 = vmatpush1.bf16.msra.mxu0 %v508
      %516 = vmatprep.subr.bf16.mxu0 0
      %517 = vmatpush1.bf16.msra.mxu0 0
      %518 = vmatprep.subr.bf16.mxu0 0
      %519 = vmatpush1.bf16.msra.mxu0 0
      %520 = vmatprep.subr.bf16.mxu0 0
      %521 = vmatpush1.bf16.msra.mxu0 0
      %522 = vmatprep.subr.bf16.mxu0 0
      %523 = vmatpush1.bf16.msra.mxu0 0
      %524 = vmatprep.subr.bf16.mxu0 0
      %525 = vmatpush1.bf16.msra.mxu0 0
      %526 = vmatprep.subr.bf16.mxu0 0
      %527 = vmatpush1.bf16.msra.mxu0 0
      %528 = vmatprep.subr.bf16.mxu0 0
      %529 = vmatpush1.bf16.msra.mxu0 0
      %530 = vmatprep.subr.bf16.mxu0 0
      %531 = vmatpush1.bf16.msra.mxu0 0
      %532 = vmatprep.subr.bf16.mxu0 0
      %533 = vmatpush1.bf16.msra.mxu0 0
      %534 = vmatprep.subr.bf16.mxu0 0
      %535 = vmatpush1.bf16.msra.mxu0 0
      %536 = vmatprep.subr.bf16.mxu0 0
      %537 = vmatpush1.bf16.msra.mxu0 0
      %538 = vmatprep.subr.bf16.mxu0 0
      %539 = vmatpush1.bf16.msra.mxu0 0
      %540 = vmatprep.subr.bf16.mxu0 0
      %541 = vmatpush1.bf16.msra.mxu0 0
      %542 = vmatprep.mubr.bf16.mxu0 0
      %543 = vmatmul.mubr.bf16.gmra.mrb[0].mxu0 %v495
      %v544 = vpop.f32.mrb[0].mxu0
      %v545 = vadd.f32 0.0, %v544
      %v546 = vpop.f32.mrb[0].mxu0
      %v547 = vpop.f32.mrb[0].mxu0
      %v548 = vadd.f32 0.0, %v547
      %v549 = vpop.f32.mrb[0].mxu0
      %550 = vmatprep.mubr.bf16.mxu0 0
      %551 = vmatmul.mubr.bf16.gmra.mrb[0].mxu0 %v498
      %v552 = vpop.f32.mrb[0].mxu0
      %v553 = vadd.f32 0.0, %v552
      %v554 = vpop.f32.mrb[0].mxu0
      %v555 = vpop.f32.mrb[0].mxu0
      %v556 = vadd.f32 0.0, %v555
      %v557 = vpop.f32.mrb[0].mxu0
      %558 = vmatprep.mubr.bf16.mxu0 0
      %559 = vmatmul.mubr.bf16.gmra.mrb[0].mxu0 %v501
      %v560 = vpop.f32.mrb[0].mxu0
      %v561 = vadd.f32 0.0, %v560
      %v562 = vpop.f32.mrb[0].mxu0
      %v563 = vpop.f32.mrb[0].mxu0
      %v564 = vadd.f32 0.0, %v563
      %v565 = vpop.f32.mrb[0].mxu0
      %566 = vmatprep.mubr.bf16.mxu0 0
      %567 = vmatmul.mubr.bf16.gmra.mrb[0].mxu0 %v504
      %v568 = vpop.f32.mrb[0].mxu0
      %v569 = vadd.f32 0.0, %v568
      %v570 = vpop.f32.mrb[0].mxu0
      %v571 = vpop.f32.mrb[0].mxu0
      %v572 = vadd.f32 0.0, %v571
      %v573 = vpop.f32.mrb[0].mxu0
      %574 = vdwg.mxu0
      %v583 = vunpack.c.l.b16 %v431
      %v584 = vunpack.c.l.b16 %v432
      %v585 = vunpack.c.l.b16 %v433
      %v586 = vunpack.c.l.b16 %v434
      %v587 = vunpack.c.l.b16 %v435
      %v588 = vunpack.c.l.b16 %v436
      %v589 = vunpack.c.l.b16 %v437
      %v590 = vunpack.c.l.b16 %v438
      %v591 = vpack.c.b16 %v584, %v583
      %v592 = vpack.c.b16 %v586, %v585
      %v593 = vpack.c.b16 %v588, %v587
      %v594 = vpack.c.b16 %v590, %v589
      %v600 = vunpack.c.l.b16 %v439
      %v601 = vunpack.c.l.b16 %v440
      %v602 = vunpack.c.l.b16 %v441
      %v603 = vunpack.c.l.b16 %v442
      %v604 = vunpack.c.l.b16 %v443
      %v605 = vpack.c.b16 %v601, %v600
      %v606 = vpack.c.b16 %v603, %v602
      %v607 = vpack.c.b16 %v604, %v604
      %v611 = vsel %vm493, %v591, 0
      %v614 = vsel %vm493, %v592, 0
      %v617 = vsel %vm493, %v593, 0
      %v620 = vsel %vm493, %v594, 0
      %v623 = vsel %vm506, %v607, 0
      %625 = vmatprep.subr.bf16.mxu0 0
      %626 = vmatpush1.bf16.msra.mxu0 %v605
      %627 = vmatprep.subr.bf16.mxu0 0
      %628 = vmatpush1.bf16.msra.mxu0 %v606
      %629 = vmatprep.subr.bf16.mxu0 0
      %630 = vmatpush1.bf16.msra.mxu0 %v623
      %631 = vmatprep.subr.bf16.mxu0 0
      %632 = vmatpush1.bf16.msra.mxu0 0
      %633 = vmatprep.subr.bf16.mxu0 0
      %634 = vmatpush1.bf16.msra.mxu0 0
      %635 = vmatprep.subr.bf16.mxu0 0
      %636 = vmatpush1.bf16.msra.mxu0 0
      %637 = vmatprep.subr.bf16.mxu0 0
      %638 = vmatpush1.bf16.msra.mxu0 0
      %639 = vmatprep.subr.bf16.mxu0 0
      %640 = vmatpush1.bf16.msra.mxu0 0
      %641 = vmatprep.subr.bf16.mxu0 0
      %642 = vmatpush1.bf16.msra.mxu0 0
      %643 = vmatprep.subr.bf16.mxu0 0
      %644 = vmatpush1.bf16.msra.mxu0 0
      %645 = vmatprep.subr.bf16.mxu0 0
      %646 = vmatpush1.bf16.msra.mxu0 0
      %647 = vmatprep.subr.bf16.mxu0 0
      %648 = vmatpush1.bf16.msra.mxu0 0
      %649 = vmatprep.subr.bf16.mxu0 0
      %650 = vmatpush1.bf16.msra.mxu0 0
      %651 = vmatprep.subr.bf16.mxu0 0
      %652 = vmatpush1.bf16.msra.mxu0 0
      %653 = vmatprep.subr.bf16.mxu0 0
      %654 = vmatpush1.bf16.msra.mxu0 0
      %655 = vmatprep.subr.bf16.mxu0 0
      %656 = vmatpush1.bf16.msra.mxu0 0
      %657 = vmatprep.mubr.bf16.mxu0 0
      %658 = vmatmul.mubr.bf16.gmra.mrb[0].mxu0 %v611
      %v659 = vpop.f32.mrb[0].mxu0
      %v660 = vadd.f32 %v545, %v659
      %v661 = vpop.f32.mrb[0].mxu0
      %v662 = vpop.f32.mrb[0].mxu0
      %v663 = vadd.f32 %v548, %v662
      %v664 = vpop.f32.mrb[0].mxu0
      %665 = vmatprep.mubr.bf16.mxu0 0
      %666 = vmatmul.mubr.bf16.gmra.mrb[0].mxu0 %v614
      %v667 = vpop.f32.mrb[0].mxu0
      %v668 = vadd.f32 %v553, %v667
      %v669 = vpop.f32.mrb[0].mxu0
      %v670 = vpop.f32.mrb[0].mxu0
      %v671 = vadd.f32 %v556, %v670
      %v672 = vpop.f32.mrb[0].mxu0
      %673 = vmatprep.mubr.bf16.mxu0 0
      %674 = vmatmul.mubr.bf16.gmra.mrb[0].mxu0 %v617
      %v675 = vpop.f32.mrb[0].mxu0
      %v676 = vadd.f32 %v561, %v675
      %v677 = vpop.f32.mrb[0].mxu0
      %v678 = vpop.f32.mrb[0].mxu0
      %v679 = vadd.f32 %v564, %v678
      %v680 = vpop.f32.mrb[0].mxu0
      %681 = vmatprep.mubr.bf16.mxu0 0
      %682 = vmatmul.mubr.bf16.gmra.mrb[0].mxu0 %v620
      %v683 = vpop.f32.mrb[0].mxu0
      %v684 = vadd.f32 %v569, %v683
      %v685 = vpop.f32.mrb[0].mxu0
      %v686 = vpop.f32.mrb[0].mxu0
      %v687 = vadd.f32 %v572, %v686
      %v688 = vpop.f32.mrb[0].mxu0
      %689 = vdwg.mxu0
      %v690 = vld [vmem:[%s412] sm:$0xf]
      %v691 = vld [vmem:[%s412 + $0x4] sm:$0xf]
      %v692 = vld [vmem:[%s412 + $0x8] sm:$0xf]
      %v693 = vld [vmem:[%s412 + $0xc] sm:$0xf]
      %v694 = vld [vmem:[%s412 + $0x10] sm:$0xf]
      %v695 = vld [vmem:[%s412 + $0x14] sm:$0xf]
      %v696 = vld [vmem:[%s412 + $0x18] sm:$0xf]
      %v697 = vld [vmem:[%s412 + $0x1c] sm:$0xf]
      %s698 = scalar_lea.vmem %s3, 40
      %v699 = vld [vmem:[%s698] sm:$0xf]
      %v700 = vld [vmem:[%s698 + $0x4] sm:$0xf]
      %v701 = vld [vmem:[%s698 + $0x8] sm:$0xf]
      %v702 = vld [vmem:[%s698 + $0xc] sm:$0xf]
      %v703 = vld [vmem:[%s698 + $0x10] sm:$0x3]
      %v712 = vunpack.c.l.b16 %v690
      %v713 = vunpack.c.l.b16 %v691
      %v714 = vunpack.c.l.b16 %v692
      %v715 = vunpack.c.l.b16 %v693
      %v716 = vunpack.c.l.b16 %v694
      %v717 = vunpack.c.l.b16 %v695
      %v718 = vunpack.c.l.b16 %v696
      %v719 = vunpack.c.l.b16 %v697
      %v720 = vpack.c.b16 %v713, %v712
      %v721 = vpack.c.b16 %v715, %v714
      %v722 = vpack.c.b16 %v717, %v716
      %v723 = vpack.c.b16 %v719, %v718
      %v729 = vunpack.c.l.b16 %v699
      %v730 = vunpack.c.l.b16 %v700
      %v731 = vunpack.c.l.b16 %v701
      %v732 = vunpack.c.l.b16 %v702
      %v733 = vunpack.c.l.b16 %v703
      %v734 = vpack.c.b16 %v730, %v729
      %v735 = vpack.c.b16 %v732, %v731
      %v736 = vpack.c.b16 %v733, %v733
      %v740 = vsel %vm493, %v720, 0
      %v743 = vsel %vm493, %v721, 0
      %v746 = vsel %vm493, %v722, 0
      %v749 = vsel %vm493, %v723, 0
      %v752 = vsel %vm506, %v736, 0
      %754 = vmatprep.subr.bf16.mxu0 0
      %755 = vmatpush1.bf16.msra.mxu0 %v734
      %756 = vmatprep.subr.bf16.mxu0 0
      %757 = vmatpush1.bf16.msra.mxu0 %v735
      %758 = vmatprep.subr.bf16.mxu0 0
      %759 = vmatpush1.bf16.msra.mxu0 %v752
      %760 = vmatprep.subr.bf16.mxu0 0
      %761 = vmatpush1.bf16.msra.mxu0 0
      %762 = vmatprep.subr.bf16.mxu0 0
      %763 = vmatpush1.bf16.msra.mxu0 0
      %764 = vmatprep.subr.bf16.mxu0 0
      %765 = vmatpush1.bf16.msra.mxu0 0
      %766 = vmatprep.subr.bf16.mxu0 0
      %767 = vmatpush1.bf16.msra.mxu0 0
      %768 = vmatprep.subr.bf16.mxu0 0
      %769 = vmatpush1.bf16.msra.mxu0 0
      %770 = vmatprep.subr.bf16.mxu0 0
      %771 = vmatpush1.bf16.msra.mxu0 0
      %772 = vmatprep.subr.bf16.mxu0 0
      %773 = vmatpush1.bf16.msra.mxu0 0
      %774 = vmatprep.subr.bf16.mxu0 0
      %775 = vmatpush1.bf16.msra.mxu0 0
      %776 = vmatprep.subr.bf16.mxu0 0
      %777 = vmatpush1.bf16.msra.mxu0 0
      %778 = vmatprep.subr.bf16.mxu0 0
      %779 = vmatpush1.bf16.msra.mxu0 0
      %780 = vmatprep.subr.bf16.mxu0 0
      %781 = vmatpush1.bf16.msra.mxu0 0
      %782 = vmatprep.subr.bf16.mxu0 0
      %783 = vmatpush1.bf16.msra.mxu0 0
      %784 = vmatprep.subr.bf16.mxu0 0
      %785 = vmatpush1.bf16.msra.mxu0 0
      %786 = vmatprep.mubr.bf16.mxu0 0
      %787 = vmatmul.mubr.bf16.gmra.mrb[0].mxu0 %v740
      %v788 = vpop.f32.mrb[0].mxu0
      %v789 = vadd.f32 0.0, %v788
      %v790 = vpop.f32.mrb[0].mxu0
      %v791 = vpop.f32.mrb[0].mxu0
      %v792 = vadd.f32 0.0, %v791
      %v793 = vpop.f32.mrb[0].mxu0
      %794 = vmatprep.mubr.bf16.mxu0 0
      %795 = vmatmul.mubr.bf16.gmra.mrb[0].mxu0 %v743
      %v796 = vpop.f32.mrb[0].mxu0
      %v797 = vadd.f32 0.0, %v796
      %v798 = vpop.f32.mrb[0].mxu0
      %v799 = vpop.f32.mrb[0].mxu0
      %v800 = vadd.f32 0.0, %v799
      %v801 = vpop.f32.mrb[0].mxu0
      %802 = vmatprep.mubr.bf16.mxu0 0
      %803 = vmatmul.mubr.bf16.gmra.mrb[0].mxu0 %v746
      %v804 = vpop.f32.mrb[0].mxu0
      %v805 = vadd.f32 0.0, %v804
      %v806 = vpop.f32.mrb[0].mxu0
      %v807 = vpop.f32.mrb[0].mxu0
      %v808 = vadd.f32 0.0, %v807
      %v809 = vpop.f32.mrb[0].mxu0
      %810 = vmatprep.mubr.bf16.mxu0 0
      %811 = vmatmul.mubr.bf16.gmra.mrb[0].mxu0 %v749
      %v812 = vpop.f32.mrb[0].mxu0
      %v813 = vadd.f32 0.0, %v812
      %v814 = vpop.f32.mrb[0].mxu0
      %v815 = vpop.f32.mrb[0].mxu0
      %v816 = vadd.f32 0.0, %v815
      %v817 = vpop.f32.mrb[0].mxu0
      %818 = vdwg.mxu0
      %v819 = vadd.f32 %v660, %v789
      %v820 = vadd.f32 %v663, %v792
      %v821 = vadd.f32 %v668, %v797
      %v822 = vadd.f32 %v671, %v800
      %v823 = vadd.f32 %v676, %v805
      %v824 = vadd.f32 %v679, %v808
      %v825 = vadd.f32 %v684, %v813
      %v826 = vadd.f32 %v687, %v816
      %v827 = vld [vmem:[%s4] sm:$0x1]
      %v829 = vlaneseq
      %v830 = vshrl.u32 %v829, 7
      %v831 = vsub.s32 0, %v830
      %v832 = vrot.slane %v827, %v831
      %v834 = vadd.f32 %v819, %v832
      %v835 = vadd.f32 %v820, %v832
      %v836 = vadd.f32 %v821, %v832
      %v837 = vadd.f32 %v822, %v832
      %v838 = vadd.f32 %v823, %v832
      %v839 = vadd.f32 %v824, %v832
      %v840 = vadd.f32 %v825, %v832
      %v841 = vadd.f32 %v826, %v832
      %v842 = vmax.f32 %v834, 0.0
      %v843 = vmax.f32 %v835, 0.0
      %v844 = vmax.f32 %v836, 0.0
      %v845 = vmax.f32 %v837, 0.0
      %v846 = vmax.f32 %v838, 0.0
      %v847 = vmax.f32 %v839, 0.0
      %v848 = vmax.f32 %v840, 0.0
      %v849 = vmax.f32 %v841, 0.0
      %v850 = vpack.c.bf16 %v843, %v842
      %v851 = vpack.c.bf16 %v845, %v844
      %v852 = vpack.c.bf16 %v847, %v846
      %v853 = vpack.c.bf16 %v849, %v848
      %v858 = vunpack.c.l.b16 %v850
      %v859 = vunpack.c.h.b16 %v850
      %v860 = vunpack.c.l.b16 %v851
      %v861 = vunpack.c.h.b16 %v851
      %v862 = vunpack.c.l.b16 %v852
      %v863 = vunpack.c.h.b16 %v852
      %v864 = vunpack.c.l.b16 %v853
      %v865 = vunpack.c.h.b16 %v853
      %v866 = vpack.c.b16 %v858, %v858
      %v867 = vpack.c.b16 %v859, %v859
      %v868 = vpack.c.b16 %v860, %v860
      %v869 = vpack.c.b16 %v861, %v861
      %v870 = vpack.c.b16 %v862, %v862
      %v871 = vpack.c.b16 %v863, %v863
      %v872 = vpack.c.b16 %v864, %v864
      %v873 = vpack.c.b16 %v865, %v865
      %vm882 = vcmask 60416
      %883 = vst.msk [vmem:[%s428] sm:$0xf] %vm882, %v866
      %884 = vst.msk [vmem:[%s428 + $0x4] sm:$0xf] %vm882, %v867
      %885 = vst.msk [vmem:[%s428 + $0x8] sm:$0xf] %vm882, %v868
      %886 = vst.msk [vmem:[%s428 + $0xc] sm:$0xf] %vm882, %v869
      %887 = vst.msk [vmem:[%s428 + $0x10] sm:$0xf] %vm882, %v870
      %888 = vst.msk [vmem:[%s428 + $0x14] sm:$0xf] %vm882, %v871
      %889 = vst.msk [vmem:[%s428 + $0x18] sm:$0xf] %vm882, %v872
      %890 = vst.msk [vmem:[%s428 + $0x1c] sm:$0xf] %vm882, %v873
      %s891 = smul.u32 8, %s23
      %p892 = scmp.lt.s32.totalorder %s21, 1
      %s893 = scalar_select %p892, %s21, 1
      %p894 = scmp.lt.s32.totalorder %s22, 3
      %s895 = scalar_select %p894, %s22, 3
      %p896 = scmp.lt.s32.totalorder %s891, 7
      %s897 = scalar_select %p896, %s891, 7
      %s898 = smul.addr %s895, 8
      %s899 = sadd.s32 %s897, %s898
      %s900 = smul.addr %s893, 32
      %s901 = sadd.s32 %s899, %s900
      %s902 = smul.addr %s901, 4
      %s903 = scalar_lea.vmem %s5, %s902
      // Predicated region
      $region41: #{_lambda_.6} parent=39 // pred_check
        %p904 = pneg %p199
      $region42: #{_lambda_.6} parent=39 // pred_check_branch
        %906 = sbr.rel (%p904) target = $region44
      $region43: #{_lambda_.6} parent=39 // pred_region
        %s907 = smul.u32 8, %s23
      $region44: #{_lambda_.6} parent=39 // pred_fallthru
        _
    $region40: #{_lambda_.6} parent=5 // pred_fallthru
      _
    %p908 = scmp.le.s32.totalorder 2, %s11
    // Predicated region
    $region45: #{_lambda_.6} parent=5 // pred_check
      %p909 = pneg %p908
    $region46: #{_lambda_.6} parent=5 // pred_check_branch
      %911 = sbr.rel (%p909) target = $region48
    $region47: #{_lambda_.6} parent=5 // pred_region
      %s912 = ssub.s32 %s11, 2
      // Predicated region
      $region49: #{_lambda_.6} parent=47 // pred_check
        %p913 = pneg %p205
      $region50: #{_lambda_.6} parent=47 // pred_check_branch
        %915 = sbr.rel (%p913) target = $region52
      $region51: #{_lambda_.6} parent=47 // pred_region
        %s916 = smul.u32 8, %s26
        %p917 = scmp.lt.s32.totalorder %s24, 1
        %s918 = scalar_select %p917, %s24, 1
        %p919 = scmp.lt.s32.totalorder %s25, 3
        %s920 = scalar_select %p919, %s25, 3
        %p921 = scmp.lt.s32.totalorder %s916, 7
        %s922 = scalar_select %p921, %s916, 7
        %s923 = smul.addr %s920, 8
        %s924 = sadd.s32 %s922, %s923
        %s925 = smul.addr %s918, 32
        %s926 = sadd.s32 %s924, %s925
        %s927 = smul.addr %s926, 4
        %s928 = scalar_lea.vmem %s5, %s927
      $region52: #{_lambda_.6} parent=47 // pred_fallthru
        _
    $region48: #{_lambda_.6} parent=5 // pred_fallthru
      _
  $region6: #{_lambda_.6} parent=0 // loop_footer
    %s15 = sadd.s32 1, %s11
  $region7: #{_lambda_.6} parent=0 // loop_footer_branch
    %10 = sbr.rel target = $region3
  $region8: #{_lambda_.6} parent=0 // loop_exit
    _

// kernel: _lambda_.7
$region0: #{_lambda_.7}
  #allocation0 [shape = 'u32[]', space=smem, size = 0x4, offset = 0x4, fixed_abs, tag = 'smem constant byte address 0x4 - core index']
  #allocation1 [shape = 'u32[144,128]{1,0:T(1,128)}', space=vmem, size = 0x12000, scoped, tag = 'internal scratch']
  %s0 = inlined_call_operand.vmem [shape: bf16[2,6,64,72], index: 0, kind: input, shape index: {}, may-alias: {0,1,2}]
  %s1 = inlined_call_operand.vmem [shape: bf16[2,6,64,72], index: 1, kind: input, shape index: {}, may-alias: {0,1,2}]
  %s2 = inlined_call_operand.vmem [shape: bf16[2,6,64,72], index: 2, kind: input, shape index: {}, may-alias: {0,1,2}]
  %s3 = inlined_call_operand.vmem [shape: bf16[3,72,8], index: 3, kind: input, shape index: {}]
  %s4 = inlined_call_operand.vmem [shape: f32[1,8], index: 4, kind: input, shape index: {}]
  %s5 = inlined_call_operand.vmem [shape: bf16[2,4,64,8], index: 5, kind: output, shape index: {}]
  %s6 = sld [smem:[#allocation0]]
  $region53: #{_lambda_.7} parent=0
    _
  %s8 = ssub.s32 1, %s6
  %s9 = scalar_select 0, %s8, %s6
  loop: start=0, step=1, limit=10
  $region2: #{_lambda_.7} parent=0 // loop_pre_header
    _
  $region3: #{_lambda_.7} parent=0 // loop_header
    %s11 = sphi 0, %s15
    %p12 = scmp.ge.s32.totalorder %s11, 10
    %s18 = sphi 0, %s37
    %s19 = sphi 0, %s33
    %s20 = sphi 0, %s29
    %s21 = sphi 0, %s18
    %s22 = sphi 0, %s19
    %s23 = sphi 0, %s20
    %s24 = sphi 0, %s21
    %s25 = sphi 0, %s22
    %s26 = sphi 0, %s23
    %s44 = sphi 0, %s46
    %s47 = sphi 0, %s44
    %s48 = sphi 0, %s47
    %s64 = sphi 0, %s48
    %s76 = sphi 0, %s78
    %s79 = sphi 0, %s76
    %s80 = sphi 0, %s79
    %s96 = sphi 0, %s80
    %s108 = sphi 0, %s110
    %s111 = sphi 0, %s108
    %s112 = sphi 0, %s111
    %s128 = sphi 0, %s112
    %s132 = sphi 0, %s132
    %s134 = sphi 0, %s132
    %s135 = sphi 0, %s134
    %s149 = sphi 0, %s135
    %s153 = sphi 0, %s153
    %s155 = sphi 0, %s153
    %s156 = sphi 0, %s155
    %s170 = sphi 0, %s156
    %s180 = sphi 0, %s182
    %s183 = sphi 0, %s180
    %s184 = sphi 0, %s183
    %s200 = sphi 0, %s184
  $region4: #{_lambda_.7} parent=0 // loop_header_branch
    %14 = sbr.rel (%p12) target = $region8
  $region5: #{_lambda_.7} parent=0 // loop_body
    %s16 = ssub.s32 %s11, 1
    %s17 = ssub.s32 %s11, 2
    %s27 = sadd.s32 1, %s20
    %p28 = scmp.ge.s32.totalorder %s27, 1
    %s29 = scalar_select %p28, 0, %s27
    %s30 = sadd.s32 1, %s19
    %s31 = scalar_select %p28, %s30, %s19
    %p32 = scmp.ge.s32.totalorder %s31, 4
    %s33 = scalar_select %p32, 0, %s31
    %s34 = sadd.s32 1, %s18
    %s35 = scalar_select %p32, %s34, %s18
    %p36 = scmp.ge.s32.totalorder %s35, 2
    %s37 = scalar_select %p36, 0, %s35
    %s38 = ssub.s32 %s18, %s37
    %s39 = ssub.s32 %s19, %s33
    %s40 = sor.u32 %s38, %s39
    %s41 = ssub.s32 %s20, %s29
    %s42 = sor.u32 %s40, %s41
    %p43 = scmp.eq.s32.totalorder %s42, 0
    %s45 = sadd.s32 %s44, 1
    %s46 = scalar_select %p43, %s44, %s45
    %p49 = pneg %p43
    %p50 = scmp.eq.s32.totalorder %s11, 7
    %p51 = por %p49, %p50
    %p52 = scmp.ne.s32.totalorder %s44, %s47
    %p53 = scmp.eq.s32.totalorder %s11, 0
    %p54 = por %p52, %p53
    %p55 = scmp.ne.s32.totalorder %s44, %s47
    %p56 = scmp.eq.s32.totalorder %s16, 7
    %p57 = por %p55, %p56
    %p58 = scmp.ne.s32.totalorder %s47, %s48
    %p59 = scmp.eq.s32.totalorder %s16, 0
    %p60 = por %p58, %p59
    %p61 = scmp.ne.s32.totalorder %s47, %s48
    %p62 = scmp.eq.s32.totalorder %s17, 7
    %p63 = por %p61, %p62
    %p65 = scmp.ne.s32.totalorder %s48, %s64
    %p66 = scmp.eq.s32.totalorder %s17, 0
    %p67 = por %p65, %p66
    %s68 = sadd.s32 %s19, 1
    %s69 = sadd.s32 %s33, 1
    %s70 = ssub.s32 %s18, %s37
    %s71 = ssub.s32 %s68, %s69
    %s72 = sor.u32 %s70, %s71
    %s73 = ssub.s32 %s20, %s29
    %s74 = sor.u32 %s72, %s73
    %p75 = scmp.eq.s32.totalorder %s74, 0
    %s77 = sadd.s32 %s76, 1
    %s78 = scalar_select %p75, %s76, %s77
    %p81 = pneg %p75
    %p82 = scmp.eq.s32.totalorder %s11, 7
    %p83 = por %p81, %p82
    %p84 = scmp.ne.s32.totalorder %s76, %s79
    %p85 = scmp.eq.s32.totalorder %s11, 0
    %p86 = por %p84, %p85
    %p87 = scmp.ne.s32.totalorder %s76, %s79
    %p88 = scmp.eq.s32.totalorder %s16, 7
    %p89 = por %p87, %p88
    %p90 = scmp.ne.s32.totalorder %s79, %s80
    %p91 = scmp.eq.s32.totalorder %s16, 0
    %p92 = por %p90, %p91
    %p93 = scmp.ne.s32.totalorder %s79, %s80
    %p94 = scmp.eq.s32.totalorder %s17, 7
    %p95 = por %p93, %p94
    %p97 = scmp.ne.s32.totalorder %s80, %s96
    %p98 = scmp.eq.s32.totalorder %s17, 0
    %p99 = por %p97, %p98
    %s100 = sadd.s32 %s19, 2
    %s101 = sadd.s32 %s33, 2
    %s102 = ssub.s32 %s18, %s37
    %s103 = ssub.s32 %s100, %s101
    %s104 = sor.u32 %s102, %s103
    %s105 = ssub.s32 %s20, %s29
    %s106 = sor.u32 %s104, %s105
    %p107 = scmp.eq.s32.totalorder %s106, 0
    %s109 = sadd.s32 %s108, 1
    %s110 = scalar_select %p107, %s108, %s109
    %p113 = pneg %p107
    %p114 = scmp.eq.s32.totalorder %s11, 7
    %p115 = por %p113, %p114
    %p116 = scmp.ne.s32.totalorder %s108, %s111
    %p117 = scmp.eq.s32.totalorder %s11, 0
    %p118 = por %p116, %p117
    %p119 = scmp.ne.s32.totalorder %s108, %s111
    %p120 = scmp.eq.s32.totalorder %s16, 7
    %p121 = por %p119, %p120
    %p122 = scmp.ne.s32.totalorder %s111, %s112
    %p123 = scmp.eq.s32.totalorder %s16, 0
    %p124 = por %p122, %p123
    %p125 = scmp.ne.s32.totalorder %s111, %s112
    %p126 = scmp.eq.s32.totalorder %s17, 7
    %p127 = por %p125, %p126
    %p129 = scmp.ne.s32.totalorder %s112, %s128
    %p130 = scmp.eq.s32.totalorder %s17, 0
    %p131 = por %p129, %p130
    %s133 = sadd.s32 %s132, 1
    %p136 = scmp.eq.s32.totalorder %s11, 7
    %p137 = scmp.ne.s32.totalorder %s132, %s134
    %p138 = scmp.eq.s32.totalorder %s11, 0
    %p139 = por %p137, %p138
    %p140 = scmp.ne.s32.totalorder %s132, %s134
    %p141 = scmp.eq.s32.totalorder %s16, 7
    %p142 = por %p140, %p141
    %p143 = scmp.ne.s32.totalorder %s134, %s135
    %p144 = scmp.eq.s32.totalorder %s16, 0
    %p145 = por %p143, %p144
    %p146 = scmp.ne.s32.totalorder %s134, %s135
    %p147 = scmp.eq.s32.totalorder %s17, 7
    %p148 = por %p146, %p147
    %p150 = scmp.ne.s32.totalorder %s135, %s149
    %p151 = scmp.eq.s32.totalorder %s17, 0
    %p152 = por %p150, %p151
    %s154 = sadd.s32 %s153, 1
    %p157 = scmp.eq.s32.totalorder %s11, 7
    %p158 = scmp.ne.s32.totalorder %s153, %s155
    %p159 = scmp.eq.s32.totalorder %s11, 0
    %p160 = por %p158, %p159
    %p161 = scmp.ne.s32.totalorder %s153, %s155
    %p162 = scmp.eq.s32.totalorder %s16, 7
    %p163 = por %p161, %p162
    %p164 = scmp.ne.s32.totalorder %s155, %s156
    %p165 = scmp.eq.s32.totalorder %s16, 0
    %p166 = por %p164, %p165
    %p167 = scmp.ne.s32.totalorder %s155, %s156
    %p168 = scmp.eq.s32.totalorder %s17, 7
    %p169 = por %p167, %p168
    %p171 = scmp.ne.s32.totalorder %s156, %s170
    %p172 = scmp.eq.s32.totalorder %s17, 0
    %p173 = por %p171, %p172
    %s174 = ssub.s32 %s18, %s37
    %s175 = ssub.s32 %s19, %s33
    %s176 = sor.u32 %s174, %s175
    %s177 = ssub.s32 %s20, %s29
    %s178 = sor.u32 %s176, %s177
    %p179 = scmp.eq.s32.totalorder %s178, 0
    %s181 = sadd.s32 %s180, 1
    %s182 = scalar_select %p179, %s180, %s181
    %p185 = pneg %p179
    %p186 = scmp.eq.s32.totalorder %s11, 7
    %p187 = por %p185, %p186
    %p188 = scmp.ne.s32.totalorder %s180, %s183
    %p189 = scmp.eq.s32.totalorder %s11, 0
    %p190 = por %p188, %p189
    %p191 = scmp.ne.s32.totalorder %s180, %s183
    %p192 = scmp.eq.s32.totalorder %s16, 7
    %p193 = por %p191, %p192
    %p194 = scmp.ne.s32.totalorder %s183, %s184
    %p195 = scmp.eq.s32.totalorder %s16, 0
    %p196 = por %p194, %p195
    %p197 = scmp.ne.s32.totalorder %s183, %s184
    %p198 = scmp.eq.s32.totalorder %s17, 7
    %p199 = por %p197, %p198
    %p201 = scmp.ne.s32.totalorder %s184, %s200
    %p202 = scmp.eq.s32.totalorder %s17, 0
    %p203 = por %p201, %p202
    %p204 = scmp.le.s32.totalorder 1, %s11
    %p205 = scmp.lt.s32.totalorder %s11, 9
    %p206 = pnand %p204, %p205
    %p207 = pneg %p206
    // Predicated region
    $region9: #{_lambda_.7} parent=5 // pred_check
      _
    $region10: #{_lambda_.7} parent=5 // pred_check_branch
      %209 = sbr.rel (%p206) target = $region12
    $region11: #{_lambda_.7} parent=5 // pred_region
      %s210 = ssub.s32 %s11, 1
      // Predicated region
      $region13: #{_lambda_.7} parent=11 // pred_check
        %p211 = pneg %p145
      $region14: #{_lambda_.7} parent=11 // pred_check_branch
        %213 = sbr.rel (%p211) target = $region16
      $region15: #{_lambda_.7} parent=11 // pred_region
        _
      $region16: #{_lambda_.7} parent=11 // pred_fallthru
        _
      // Predicated region
      $region17: #{_lambda_.7} parent=11 // pred_check
        %p214 = pneg %p166
      $region18: #{_lambda_.7} parent=11 // pred_check_branch
        %216 = sbr.rel (%p214) target = $region20
      $region19: #{_lambda_.7} parent=11 // pred_region
        _
      $region20: #{_lambda_.7} parent=11 // pred_fallthru
        _
    $region12: #{_lambda_.7} parent=5 // pred_fallthru
      _
    %p217 = scmp.lt.s32.totalorder %s11, 8
    // Predicated region
    $region21: #{_lambda_.7} parent=5 // pred_check
      %p218 = pneg %p217
    $region22: #{_lambda_.7} parent=5 // pred_check_branch
      %220 = sbr.rel (%p218) target = $region24
    $region23: #{_lambda_.7} parent=5 // pred_region
      // Predicated region
      $region25: #{_lambda_.7} parent=23 // pred_check
        %p221 = pneg %p54
      $region26: #{_lambda_.7} parent=23 // pred_check_branch
        %223 = sbr.rel (%p221) target = $region28
      $region27: #{_lambda_.7} parent=23 // pred_region
        %s224 = smul.u32 8, %s20
        %p225 = scmp.lt.s32.totalorder %s18, 1
        %s226 = scalar_select %p225, %s18, 1
        %p227 = scmp.lt.s32.totalorder %s19, 5
        %s228 = scalar_select %p227, %s19, 5
        %p229 = scmp.lt.s32.totalorder %s224, 7
        %s230 = scalar_select %p229, %s224, 7
        %s231 = smul.addr %s228, 8
        %s232 = sadd.s32 %s230, %s231
        %s233 = smul.addr %s226, 48
        %s234 = sadd.s32 %s232, %s233
        %s235 = smul.addr %s234, 4
        %s236 = scalar_lea.vmem %s0, %s235
        %s237 = smul.u32 8, %s20
      $region28: #{_lambda_.7} parent=23 // pred_fallthru
        _
      // Predicated region
      $region29: #{_lambda_.7} parent=23 // pred_check
        %p238 = pneg %p86
      $region30: #{_lambda_.7} parent=23 // pred_check_branch
        %240 = sbr.rel (%p238) target = $region32
      $region31: #{_lambda_.7} parent=23 // pred_region
        %s241 = sadd.s32 %s19, 1
        %s242 = smul.u32 8, %s20
        %p243 = scmp.lt.s32.totalorder %s18, 1
        %s244 = scalar_select %p243, %s18, 1
        %p245 = scmp.lt.s32.totalorder %s241, 5
        %s246 = scalar_select %p245, %s241, 5
        %p247 = scmp.lt.s32.totalorder %s242, 7
        %s248 = scalar_select %p247, %s242, 7
        %s249 = smul.addr %s246, 8
        %s250 = sadd.s32 %s248, %s249
        %s251 = smul.addr %s244, 48
        %s252 = sadd.s32 %s250, %s251
        %s253 = smul.addr %s252, 4
        %s254 = scalar_lea.vmem %s1, %s253
        %s255 = sadd.s32 %s19, 1
        %s256 = smul.u32 8, %s20
      $region32: #{_lambda_.7} parent=23 // pred_fallthru
        _
      // Predicated region
      $region33: #{_lambda_.7} parent=23 // pred_check
        %p257 = pneg %p118
      $region34: #{_lambda_.7} parent=23 // pred_check_branch
        %259 = sbr.rel (%p257) target = $region36
      $region35: #{_lambda_.7} parent=23 // pred_region
        %s260 = sadd.s32 %s19, 2
        %s261 = smul.u32 8, %s20
        %p262 = scmp.lt.s32.totalorder %s18, 1
        %s263 = scalar_select %p262, %s18, 1
        %p264 = scmp.lt.s32.totalorder %s260, 5
        %s265 = scalar_select %p264, %s260, 5
        %p266 = scmp.lt.s32.totalorder %s261, 7
        %s267 = scalar_select %p266, %s261, 7
        %s268 = smul.addr %s265, 8
        %s269 = sadd.s32 %s267, %s268
        %s270 = smul.addr %s263, 48
        %s271 = sadd.s32 %s269, %s270
        %s272 = smul.addr %s271, 4
        %s273 = scalar_lea.vmem %s2, %s272
        %s274 = sadd.s32 %s19, 2
        %s275 = smul.u32 8, %s20
      $region36: #{_lambda_.7} parent=23 // pred_fallthru
        _
    $region24: #{_lambda_.7} parent=5 // pred_fallthru
      _
    %p276 = scmp.le.s32.totalorder 1, %s11
    %p277 = scmp.lt.s32.totalorder %s11, 9
    %p278 = pnand %p276, %p277
    %p279 = pneg %p278
    // Predicated region
    $region37: #{_lambda_.7} parent=5 // pred_check
      _
    $region38: #{_lambda_.7} parent=5 // pred_check_branch
      %281 = sbr.rel (%p278) target = $region40
    $region39: #{_lambda_.7} parent=5 // pred_region
      %s282 = ssub.s32 %s11, 1
      %s283 = smul.u32 8, %s23
      %p284 = scmp.lt.s32.totalorder %s21, 1
      %s285 = scalar_select %p284, %s21, 1
      %p286 = scmp.lt.s32.totalorder %s22, 5
      %s287 = scalar_select %p286, %s22, 5
      %p288 = scmp.lt.s32.totalorder %s283, 7
      %s289 = scalar_select %p288, %s283, 7
      %s290 = smul.addr %s287, 8
      %s291 = sadd.s32 %s289, %s290
      %s292 = smul.addr %s285, 48
      %s293 = sadd.s32 %s291, %s292
      %s294 = smul.addr %s293, 4
      %s295 = scalar_lea.vmem %s0, %s294
      %p296 = pneg %p60
      %p297 = pneg %p57
      %s298 = sadd.s32 %s22, 1
      %s299 = smul.u32 8, %s23
      %p300 = scmp.lt.s32.totalorder %s21, 1
      %s301 = scalar_select %p300, %s21, 1
      %p302 = scmp.lt.s32.totalorder %s298, 5
      %s303 = scalar_select %p302, %s298, 5
      %p304 = scmp.lt.s32.totalorder %s299, 7
      %s305 = scalar_select %p304, %s299, 7
      %s306 = smul.addr %s303, 8
      %s307 = sadd.s32 %s305, %s306
      %s308 = smul.addr %s301, 48
      %s309 = sadd.s32 %s307, %s308
      %s310 = smul.addr %s309, 4
      %s311 = scalar_lea.vmem %s1, %s310
      %p312 = pneg %p92
      %p313 = pneg %p89
      %s314 = sadd.s32 %s22, 2
      %s315 = smul.u32 8, %s23
      %p316 = scmp.lt.s32.totalorder %s21, 1
      %s317 = scalar_select %p316, %s21, 1
      %p318 = scmp.lt.s32.totalorder %s314, 5
      %s319 = scalar_select %p318, %s314, 5
      %p320 = scmp.lt.s32.totalorder %s315, 7
      %s321 = scalar_select %p320, %s315, 7
      %s322 = smul.addr %s319, 8
      %s323 = sadd.s32 %s321, %s322
      %s324 = smul.addr %s317, 48
      %s325 = sadd.s32 %s323, %s324
      %s326 = smul.addr %s325, 4
      %s327 = scalar_lea.vmem %s2, %s326
      %p328 = pneg %p124
      %p329 = pneg %p121
      %p330 = pneg %p145
      %p331 = pneg %p142
      %p332 = pneg %p166
      %p333 = pneg %p163
      %p334 = pneg %p196
      %p335 = pneg %p193
      %s336 = smul.u32 8, %s23
      %p337 = scmp.lt.s32.totalorder %s21, 1
      %s338 = scalar_select %p337, %s21, 1
      %p339 = scmp.lt.s32.totalorder %s22, 3
      %s340 = scalar_select %p339, %s22, 3
      %p341 = scmp.lt.s32.totalorder %s336, 7
      %s342 = scalar_select %p341, %s336, 7
      %s343 = smul.addr %s340, 8
      %s344 = sadd.s32 %s342, %s343
      %s345 = smul.addr %s338, 32
      %s346 = sadd.s32 %s344, %s345
      %s347 = smul.addr %s346, 4
      %s348 = scalar_lea.vmem %s5, %s347
      %s349 = smul.u32 8, %s23
      %p350 = scmp.lt.s32.totalorder %s21, 1
      %s351 = scalar_select %p350, %s21, 1
      %p352 = scmp.lt.s32.totalorder %s22, 5
      %s353 = scalar_select %p352, %s22, 5
      %p354 = scmp.lt.s32.totalorder %s349, 7
      %s355 = scalar_select %p354, %s349, 7
      %s356 = smul.addr %s353, 8
      %s357 = sadd.s32 %s355, %s356
      %s358 = smul.addr %s351, 48
      %s359 = sadd.s32 %s357, %s358
      %s360 = smul.addr %s359, 4
      %s361 = scalar_lea.vmem %s0, %s360
      %s362 = smul.u32 8, %s23
      %s363 = sadd.s32 %s22, 1
      %s364 = smul.u32 8, %s23
      %p365 = scmp.lt.s32.totalorder %s21, 1
      %s366 = scalar_select %p365, %s21, 1
      %p367 = scmp.lt.s32.totalorder %s363, 5
      %s368 = scalar_select %p367, %s363, 5
      %p369 = scmp.lt.s32.totalorder %s364, 7
      %s370 = scalar_select %p369, %s364, 7
      %s371 = smul.addr %s368, 8
      %s372 = sadd.s32 %s370, %s371
      %s373 = smul.addr %s366, 48
      %s374 = sadd.s32 %s372, %s373
      %s375 = smul.addr %s374, 4
      %s376 = scalar_lea.vmem %s1, %s375
      %s377 = sadd.s32 %s22, 1
      %s378 = smul.u32 8, %s23
      %s379 = sadd.s32 %s22, 2
      %s380 = smul.u32 8, %s23
      %p381 = scmp.lt.s32.totalorder %s21, 1
      %s382 = scalar_select %p381, %s21, 1
      %p383 = scmp.lt.s32.totalorder %s379, 5
      %s384 = scalar_select %p383, %s379, 5
      %p385 = scmp.lt.s32.totalorder %s380, 7
      %s386 = scalar_select %p385, %s380, 7
      %s387 = smul.addr %s384, 8
      %s388 = sadd.s32 %s386, %s387
      %s389 = smul.addr %s382, 48
      %s390 = sadd.s32 %s388, %s389
      %s391 = smul.addr %s390, 4
      %s392 = scalar_lea.vmem %s2, %s391
      %s393 = sadd.s32 %s22, 2
      %s394 = smul.u32 8, %s23
      %s395 = smul.u32 8, %s23
      %p396 = scmp.lt.s32.totalorder %s21, 1
      %s397 = scalar_select %p396, %s21, 1
      %p398 = scmp.lt.s32.totalorder %s22, 3
      %s399 = scalar_select %p398, %s22, 3
      %p400 = scmp.lt.s32.totalorder %s395, 7
      %s401 = scalar_select %p400, %s395, 7
      %s402 = smul.addr %s399, 8
      %s403 = sadd.s32 %s401, %s402
      %s404 = smul.addr %s397, 32
      %s405 = sadd.s32 %s403, %s404
      %s406 = smul.addr %s405, 4
      %s407 = scalar_lea.vmem %s5, %s406
      %s408 = smul.u32 8, %s23
      %v410 = vld [vmem:[%s361] sm:$0xf]
      %v411 = vld [vmem:[%s361 + $0x4] sm:$0xf]
      %v412 = vld [vmem:[%s361 + $0x8] sm:$0xf]
      %v413 = vld [vmem:[%s361 + $0xc] sm:$0xf]
      %v414 = vld [vmem:[%s361 + $0x10] sm:$0xf]
      %v415 = vld [vmem:[%s361 + $0x14] sm:$0xf]
      %v416 = vld [vmem:[%s361 + $0x18] sm:$0xf]
      %v417 = vld [vmem:[%s361 + $0x1c] sm:$0xf]
      %v418 = vld [vmem:[%s3] sm:$0xf]
      %v419 = vld [vmem:[%s3 + $0x4] sm:$0xf]
      %v420 = vld [vmem:[%s3 + $0x8] sm:$0xf]
      %v421 = vld [vmem:[%s3 + $0xc] sm:$0xf]
      %v422 = vld [vmem:[%s3 + $0x10] sm:$0xf]
      %v423 = vld [vmem:[%s3 + $0x14] sm:$0xf]
      %v424 = vld [vmem:[%s3 + $0x18] sm:$0xf]
      %v425 = vld [vmem:[%s3 + $0x1c] sm:$0xf]
      %v426 = vld [vmem:[%s3 + $0x20] sm:$0xf]
      %v427 = vld [vmem:[%s376] sm:$0xf]
      %v428 = vld [vmem:[%s376 + $0x4] sm:$0xf]
      %v429 = vld [vmem:[%s376 + $0x8] sm:$0xf]
      %v430 = vld [vmem:[%s376 + $0xc] sm:$0xf]
      %v431 = vld [vmem:[%s376 + $0x10] sm:$0xf]
      %v432 = vld [vmem:[%s376 + $0x14] sm:$0xf]
      %v433 = vld [vmem:[%s376 + $0x18] sm:$0xf]
      %v434 = vld [vmem:[%s376 + $0x1c] sm:$0xf]
      %s435 = scalar_lea.vmem %s3, 36
      %v436 = vld [vmem:[%s435] sm:$0xf]
      %v437 = vld [vmem:[%s435 + $0x4] sm:$0xf]
      %v438 = vld [vmem:[%s435 + $0x8] sm:$0xf]
      %v439 = vld [vmem:[%s435 + $0xc] sm:$0xf]
      %v440 = vld [vmem:[%s435 + $0x10] sm:$0xf]
      %v441 = vld [vmem:[%s435 + $0x14] sm:$0xf]
      %v442 = vld [vmem:[%s435 + $0x18] sm:$0xf]
      %v443 = vld [vmem:[%s435 + $0x1c] sm:$0xf]
      %v444 = vld [vmem:[%s435 + $0x20] sm:$0xf]
      %v453 = vunpack.c.l.b16 %v427
      %v454 = vunpack.c.l.b16 %v428
      %v455 = vunpack.c.l.b16 %v429
      %v456 = vunpack.c.l.b16 %v430
      %v457 = vunpack.c.l.b16 %v431
      %v458 = vunpack.c.l.b16 %v432
      %v459 = vunpack.c.l.b16 %v433
      %v460 = vunpack.c.l.b16 %v434
      %v461 = vpack.c.b16 %v454, %v453
      %v462 = vpack.c.b16 %v456, %v455
      %v463 = vpack.c.b16 %v458, %v457
      %v464 = vpack.c.b16 %v460, %v459
      %v474 = vunpack.c.l.b16 %v436
      %v475 = vunpack.c.l.b16 %v437
      %v476 = vunpack.c.l.b16 %v438
      %v477 = vunpack.c.l.b16 %v439
      %v478 = vunpack.c.l.b16 %v440
      %v479 = vunpack.c.l.b16 %v441
      %v480 = vunpack.c.l.b16 %v442
      %v481 = vunpack.c.l.b16 %v443
      %v482 = vunpack.c.l.b16 %v444
      %v483 = vpack.c.b16 %v475, %v474
      %v484 = vpack.c.b16 %v477, %v476
      %v485 = vpack.c.b16 %v479, %v478
      %v486 = vpack.c.b16 %v481, %v480
      %v487 = vpack.c.b16 %v482, %v482
      %vm492 = vcmask 588800
      %v494 = vsel %vm492, %v461, 0
      %v497 = vsel %vm492, %v462, 0
      %v500 = vsel %vm492, %v463, 0
      %v503 = vsel %vm492, %v464, 0
      %vm505 = vcmask 1043456
      %v507 = vsel %vm505, %v487, 0
      %509 = vmatprep.subr.bf16.mxu0 0
      %510 = vmatpush1.bf16.msra.mxu0 %v483
      %511 = vmatprep.subr.bf16.mxu0 0
      %512 = vmatpush1.bf16.msra.mxu0 %v484
      %513 = vmatprep.subr.bf16.mxu0 0
      %514 = vmatpush1.bf16.msra.mxu0 %v485
      %515 = vmatprep.subr.bf16.mxu0 0
      %516 = vmatpush1.bf16.msra.mxu0 %v486
      %517 = vmatprep.subr.bf16.mxu0 0
      %518 = vmatpush1.bf16.msra.mxu0 %v507
      %519 = vmatprep.subr.bf16.mxu0 0
      %520 = vmatpush1.bf16.msra.mxu0 0
      %521 = vmatprep.subr.bf16.mxu0 0
      %522 = vmatpush1.bf16.msra.mxu0 0
      %523 = vmatprep.subr.bf16.mxu0 0
      %524 = vmatpush1.bf16.msra.mxu0 0
      %525 = vmatprep.subr.bf16.mxu0 0
      %526 = vmatpush1.bf16.msra.mxu0 0
      %527 = vmatprep.subr.bf16.mxu0 0
      %528 = vmatpush1.bf16.msra.mxu0 0
      %529 = vmatprep.subr.bf16.mxu0 0
      %530 = vmatpush1.bf16.msra.mxu0 0
      %531 = vmatprep.subr.bf16.mxu0 0
      %532 = vmatpush1.bf16.msra.mxu0 0
      %533 = vmatprep.subr.bf16.mxu0 0
      %534 = vmatpush1.bf16.msra.mxu0 0
      %535 = vmatprep.subr.bf16.mxu0 0
      %536 = vmatpush1.bf16.msra.mxu0 0
      %537 = vmatprep.subr.bf16.mxu0 0
      %538 = vmatpush1.bf16.msra.mxu0 0
      %539 = vmatprep.subr.bf16.mxu0 0
      %540 = vmatpush1.bf16.msra.mxu0 0
      %541 = vmatprep.mubr.bf16.mxu0 0
      %542 = vmatmul.mubr.bf16.gmra.mrb[0].mxu0 %v494
      %v543 = vpop.f32.mrb[0].mxu0
      %v544 = vadd.f32 0.0, %v543
      %v545 = vpop.f32.mrb[0].mxu0
      %v546 = vpop.f32.mrb[0].mxu0
      %v547 = vadd.f32 0.0, %v546
      %v548 = vpop.f32.mrb[0].mxu0
      %549 = vmatprep.mubr.bf16.mxu0 0
      %550 = vmatmul.mubr.bf16.gmra.mrb[0].mxu0 %v497
      %v551 = vpop.f32.mrb[0].mxu0
      %v552 = vadd.f32 0.0, %v551
      %v553 = vpop.f32.mrb[0].mxu0
      %v554 = vpop.f32.mrb[0].mxu0
      %v555 = vadd.f32 0.0, %v554
      %v556 = vpop.f32.mrb[0].mxu0
      %557 = vmatprep.mubr.bf16.mxu0 0
      %558 = vmatmul.mubr.bf16.gmra.mrb[0].mxu0 %v500
      %v559 = vpop.f32.mrb[0].mxu0
      %v560 = vadd.f32 0.0, %v559
      %v561 = vpop.f32.mrb[0].mxu0
      %v562 = vpop.f32.mrb[0].mxu0
      %v563 = vadd.f32 0.0, %v562
      %v564 = vpop.f32.mrb[0].mxu0
      %565 = vmatprep.mubr.bf16.mxu0 0
      %566 = vmatmul.mubr.bf16.gmra.mrb[0].mxu0 %v503
      %v567 = vpop.f32.mrb[0].mxu0
      %v568 = vadd.f32 0.0, %v567
      %v569 = vpop.f32.mrb[0].mxu0
      %v570 = vpop.f32.mrb[0].mxu0
      %v571 = vadd.f32 0.0, %v570
      %v572 = vpop.f32.mrb[0].mxu0
      %573 = vdwg.mxu0
      %v582 = vunpack.c.l.b16 %v410
      %v583 = vunpack.c.l.b16 %v411
      %v584 = vunpack.c.l.b16 %v412
      %v585 = vunpack.c.l.b16 %v413
      %v586 = vunpack.c.l.b16 %v414
      %v587 = vunpack.c.l.b16 %v415
      %v588 = vunpack.c.l.b16 %v416
      %v589 = vunpack.c.l.b16 %v417
      %v590 = vpack.c.b16 %v583, %v582
      %v591 = vpack.c.b16 %v585, %v584
      %v592 = vpack.c.b16 %v587, %v586
      %v593 = vpack.c.b16 %v589, %v588
      %v603 = vunpack.c.l.b16 %v418
      %v604 = vunpack.c.l.b16 %v419
      %v605 = vunpack.c.l.b16 %v420
      %v606 = vunpack.c.l.b16 %v421
      %v607 = vunpack.c.l.b16 %v422
      %v608 = vunpack.c.l.b16 %v423
      %v609 = vunpack.c.l.b16 %v424
      %v610 = vunpack.c.l.b16 %v425
      %v611 = vunpack.c.l.b16 %v426
      %v612 = vpack.c.b16 %v604, %v603
      %v613 = vpack.c.b16 %v606, %v605
      %v614 = vpack.c.b16 %v608, %v607
      %v615 = vpack.c.b16 %v610, %v609
      %v616 = vpack.c.b16 %v611, %v611
      %v622 = vsel %vm492, %v590, 0
      %v625 = vsel %vm492, %v591, 0
      %v628 = vsel %vm492, %v592, 0
      %v631 = vsel %vm492, %v593, 0
      %v634 = vsel %vm505, %v616, 0
      %636 = vmatprep.subr.bf16.mxu0 0
      %637 = vmatpush1.bf16.msra.mxu0 %v612
      %638 = vmatprep.subr.bf16.mxu0 0
      %639 = vmatpush1.bf16.msra.mxu0 %v613
      %640 = vmatprep.subr.bf16.mxu0 0
      %641 = vmatpush1.bf16.msra.mxu0 %v614
      %642 = vmatprep.subr.bf16.mxu0 0
      %643 = vmatpush1.bf16.msra.mxu0 %v615
      %644 = vmatprep.subr.bf16.mxu0 0
      %645 = vmatpush1.bf16.msra.mxu0 %v634
      %646 = vmatprep.subr.bf16.mxu0 0
      %647 = vmatpush1.bf16.msra.mxu0 0
      %648 = vmatprep.subr.bf16.mxu0 0
      %649 = vmatpush1.bf16.msra.mxu0 0
      %650 = vmatprep.subr.bf16.mxu0 0
      %651 = vmatpush1.bf16.msra.mxu0 0
      %652 = vmatprep.subr.bf16.mxu0 0
      %653 = vmatpush1.bf16.msra.mxu0 0
      %654 = vmatprep.subr.bf16.mxu0 0
      %655 = vmatpush1.bf16.msra.mxu0 0
      %656 = vmatprep.subr.bf16.mxu0 0
      %657 = vmatpush1.bf16.msra.mxu0 0
      %658 = vmatprep.subr.bf16.mxu0 0
      %659 = vmatpush1.bf16.msra.mxu0 0
      %660 = vmatprep.subr.bf16.mxu0 0
      %661 = vmatpush1.bf16.msra.mxu0 0
      %662 = vmatprep.subr.bf16.mxu0 0
      %663 = vmatpush1.bf16.msra.mxu0 0
      %664 = vmatprep.subr.bf16.mxu0 0
      %665 = vmatpush1.bf16.msra.mxu0 0
      %666 = vmatprep.subr.bf16.mxu0 0
      %667 = vmatpush1.bf16.msra.mxu0 0
      %668 = vmatprep.mubr.bf16.mxu0 0
      %669 = vmatmul.mubr.bf16.gmra.mrb[0].mxu0 %v622
      %v670 = vpop.f32.mrb[0].mxu0
      %v671 = vadd.f32 %v544, %v670
      %v672 = vpop.f32.mrb[0].mxu0
      %v673 = vpop.f32.mrb[0].mxu0
      %v674 = vadd.f32 %v547, %v673
      %v675 = vpop.f32.mrb[0].mxu0
      %676 = vmatprep.mubr.bf16.mxu0 0
      %677 = vmatmul.mubr.bf16.gmra.mrb[0].mxu0 %v625
      %v678 = vpop.f32.mrb[0].mxu0
      %v679 = vadd.f32 %v552, %v678
      %v680 = vpop.f32.mrb[0].mxu0
      %v681 = vpop.f32.mrb[0].mxu0
      %v682 = vadd.f32 %v555, %v681
      %v683 = vpop.f32.mrb[0].mxu0
      %684 = vmatprep.mubr.bf16.mxu0 0
      %685 = vmatmul.mubr.bf16.gmra.mrb[0].mxu0 %v628
      %v686 = vpop.f32.mrb[0].mxu0
      %v687 = vadd.f32 %v560, %v686
      %v688 = vpop.f32.mrb[0].mxu0
      %v689 = vpop.f32.mrb[0].mxu0
      %v690 = vadd.f32 %v563, %v689
      %v691 = vpop.f32.mrb[0].mxu0
      %692 = vmatprep.mubr.bf16.mxu0 0
      %693 = vmatmul.mubr.bf16.gmra.mrb[0].mxu0 %v631
      %v694 = vpop.f32.mrb[0].mxu0
      %v695 = vadd.f32 %v568, %v694
      %v696 = vpop.f32.mrb[0].mxu0
      %v697 = vpop.f32.mrb[0].mxu0
      %v698 = vadd.f32 %v571, %v697
      %v699 = vpop.f32.mrb[0].mxu0
      %700 = vdwg.mxu0
      %v701 = vld [vmem:[%s392] sm:$0xf]
      %v702 = vld [vmem:[%s392 + $0x4] sm:$0xf]
      %v703 = vld [vmem:[%s392 + $0x8] sm:$0xf]
      %v704 = vld [vmem:[%s392 + $0xc] sm:$0xf]
      %v705 = vld [vmem:[%s392 + $0x10] sm:$0xf]
      %v706 = vld [vmem:[%s392 + $0x14] sm:$0xf]
      %v707 = vld [vmem:[%s392 + $0x18] sm:$0xf]
      %v708 = vld [vmem:[%s392 + $0x1c] sm:$0xf]
      %s709 = scalar_lea.vmem %s3, 72
      %v710 = vld [vmem:[%s709] sm:$0xf]
      %v711 = vld [vmem:[%s709 + $0x4] sm:$0xf]
      %v712 = vld [vmem:[%s709 + $0x8] sm:$0xf]
      %v713 = vld [vmem:[%s709 + $0xc] sm:$0xf]
      %v714 = vld [vmem:[%s709 + $0x10] sm:$0xf]
      %v715 = vld [vmem:[%s709 + $0x14] sm:$0xf]
      %v716 = vld [vmem:[%s709 + $0x18] sm:$0xf]
      %v717 = vld [vmem:[%s709 + $0x1c] sm:$0xf]
      %v718 = vld [vmem:[%s709 + $0x20] sm:$0xf]
      %v727 = vunpack.c.l.b16 %v701
      %v728 = vunpack.c.l.b16 %v702
      %v729 = vunpack.c.l.b16 %v703
      %v730 = vunpack.c.l.b16 %v704
      %v731 = vunpack.c.l.b16 %v705
      %v732 = vunpack.c.l.b16 %v706
      %v733 = vunpack.c.l.b16 %v707
      %v734 = vunpack.c.l.b16 %v708
      %v735 = vpack.c.b16 %v728, %v727
      %v736 = vpack.c.b16 %v730, %v729
      %v737 = vpack.c.b16 %v732, %v731
      %v738 = vpack.c.b16 %v734, %v733
      %v748 = vunpack.c.l.b16 %v710
      %v749 = vunpack.c.l.b16 %v711
      %v750 = vunpack.c.l.b16 %v712
      %v751 = vunpack.c.l.b16 %v713
      %v752 = vunpack.c.l.b16 %v714
      %v753 = vunpack.c.l.b16 %v715
      %v754 = vunpack.c.l.b16 %v716
      %v755 = vunpack.c.l.b16 %v717
      %v756 = vunpack.c.l.b16 %v718
      %v757 = vpack.c.b16 %v749, %v748
      %v758 = vpack.c.b16 %v751, %v750
      %v759 = vpack.c.b16 %v753, %v752
      %v760 = vpack.c.b16 %v755, %v754
      %v761 = vpack.c.b16 %v756, %v756
      %v767 = vsel %vm492, %v735, 0
      %v770 = vsel %vm492, %v736, 0
      %v773 = vsel %vm492, %v737, 0
      %v776 = vsel %vm492, %v738, 0
      %v779 = vsel %vm505, %v761, 0
      %781 = vmatprep.subr.bf16.mxu0 0
      %782 = vmatpush1.bf16.msra.mxu0 %v757
      %783 = vmatprep.subr.bf16.mxu0 0
      %784 = vmatpush1.bf16.msra.mxu0 %v758
      %785 = vmatprep.subr.bf16.mxu0 0
      %786 = vmatpush1.bf16.msra.mxu0 %v759
      %787 = vmatprep.subr.bf16.mxu0 0
      %788 = vmatpush1.bf16.msra.mxu0 %v760
      %789 = vmatprep.subr.bf16.mxu0 0
      %790 = vmatpush1.bf16.msra.mxu0 %v779
      %791 = vmatprep.subr.bf16.mxu0 0
      %792 = vmatpush1.bf16.msra.mxu0 0
      %793 = vmatprep.subr.bf16.mxu0 0
      %794 = vmatpush1.bf16.msra.mxu0 0
      %795 = vmatprep.subr.bf16.mxu0 0
      %796 = vmatpush1.bf16.msra.mxu0 0
      %797 = vmatprep.subr.bf16.mxu0 0
      %798 = vmatpush1.bf16.msra.mxu0 0
      %799 = vmatprep.subr.bf16.mxu0 0
      %800 = vmatpush1.bf16.msra.mxu0 0
      %801 = vmatprep.subr.bf16.mxu0 0
      %802 = vmatpush1.bf16.msra.mxu0 0
      %803 = vmatprep.subr.bf16.mxu0 0
      %804 = vmatpush1.bf16.msra.mxu0 0
      %805 = vmatprep.subr.bf16.mxu0 0
      %806 = vmatpush1.bf16.msra.mxu0 0
      %807 = vmatprep.subr.bf16.mxu0 0
      %808 = vmatpush1.bf16.msra.mxu0 0
      %809 = vmatprep.subr.bf16.mxu0 0
      %810 = vmatpush1.bf16.msra.mxu0 0
      %811 = vmatprep.subr.bf16.mxu0 0
      %812 = vmatpush1.bf16.msra.mxu0 0
      %813 = vmatprep.mubr.bf16.mxu0 0
      %814 = vmatmul.mubr.bf16.gmra.mrb[0].mxu0 %v767
      %v815 = vpop.f32.mrb[0].mxu0
      %v816 = vadd.f32 0.0, %v815
      %v817 = vpop.f32.mrb[0].mxu0
      %v818 = vpop.f32.mrb[0].mxu0
      %v819 = vadd.f32 0.0, %v818
      %v820 = vpop.f32.mrb[0].mxu0
      %821 = vmatprep.mubr.bf16.mxu0 0
      %822 = vmatmul.mubr.bf16.gmra.mrb[0].mxu0 %v770
      %v823 = vpop.f32.mrb[0].mxu0
      %v824 = vadd.f32 0.0, %v823
      %v825 = vpop.f32.mrb[0].mxu0
      %v826 = vpop.f32.mrb[0].mxu0
      %v827 = vadd.f32 0.0, %v826
      %v828 = vpop.f32.mrb[0].mxu0
      %829 = vmatprep.mubr.bf16.mxu0 0
      %830 = vmatmul.mubr.bf16.gmra.mrb[0].mxu0 %v773
      %v831 = vpop.f32.mrb[0].mxu0
      %v832 = vadd.f32 0.0, %v831
      %v833 = vpop.f32.mrb[0].mxu0
      %v834 = vpop.f32.mrb[0].mxu0
      %v835 = vadd.f32 0.0, %v834
      %v836 = vpop.f32.mrb[0].mxu0
      %837 = vmatprep.mubr.bf16.mxu0 0
      %838 = vmatmul.mubr.bf16.gmra.mrb[0].mxu0 %v776
      %v839 = vpop.f32.mrb[0].mxu0
      %v840 = vadd.f32 0.0, %v839
      %v841 = vpop.f32.mrb[0].mxu0
      %v842 = vpop.f32.mrb[0].mxu0
      %v843 = vadd.f32 0.0, %v842
      %v844 = vpop.f32.mrb[0].mxu0
      %845 = vdwg.mxu0
      %v846 = vadd.f32 %v671, %v816
      %v847 = vadd.f32 %v674, %v819
      %v848 = vadd.f32 %v679, %v824
      %v849 = vadd.f32 %v682, %v827
      %v850 = vadd.f32 %v687, %v832
      %v851 = vadd.f32 %v690, %v835
      %v852 = vadd.f32 %v695, %v840
      %v853 = vadd.f32 %v698, %v843
      %v854 = vld [vmem:[%s4] sm:$0x1]
      %v856 = vlaneseq
      %v857 = vshrl.u32 %v856, 7
      %v858 = vsub.s32 0, %v857
      %v859 = vrot.slane %v854, %v858
      %v861 = vadd.f32 %v846, %v859
      %v862 = vadd.f32 %v847, %v859
      %v863 = vadd.f32 %v848, %v859
      %v864 = vadd.f32 %v849, %v859
      %v865 = vadd.f32 %v850, %v859
      %v866 = vadd.f32 %v851, %v859
      %v867 = vadd.f32 %v852, %v859
      %v868 = vadd.f32 %v853, %v859
      %v869 = vmax.f32 %v861, 0.0
      %v870 = vmax.f32 %v862, 0.0
      %v871 = vmax.f32 %v863, 0.0
      %v872 = vmax.f32 %v864, 0.0
      %v873 = vmax.f32 %v865, 0.0
      %v874 = vmax.f32 %v866, 0.0
      %v875 = vmax.f32 %v867, 0.0
      %v876 = vmax.f32 %v868, 0.0
      %v877 = vpack.c.bf16 %v870, %v869
      %v878 = vpack.c.bf16 %v872, %v871
      %v879 = vpack.c.bf16 %v874, %v873
      %v880 = vpack.c.bf16 %v876, %v875
      %v885 = vunpack.c.l.b16 %v877
      %v886 = vunpack.c.h.b16 %v877
      %v887 = vunpack.c.l.b16 %v878
      %v888 = vunpack.c.h.b16 %v878
      %v889 = vunpack.c.l.b16 %v879
      %v890 = vunpack.c.h.b16 %v879
      %v891 = vunpack.c.l.b16 %v880
      %v892 = vunpack.c.h.b16 %v880
      %v893 = vpack.c.b16 %v885, %v885
      %v894 = vpack.c.b16 %v886, %v886
      %v895 = vpack.c.b16 %v887, %v887
      %v896 = vpack.c.b16 %v888, %v888
      %v897 = vpack.c.b16 %v889, %v889
      %v898 = vpack.c.b16 %v890, %v890
      %v899 = vpack.c.b16 %v891, %v891
      %v900 = vpack.c.b16 %v892, %v892
      %vm909 = vcmask 60416
      %910 = vst.msk [vmem:[%s407] sm:$0xf] %vm909, %v893
      %911 = vst.msk [vmem:[%s407 + $0x4] sm:$0xf] %vm909, %v894
      %912 = vst.msk [vmem:[%s407 + $0x8] sm:$0xf] %vm909, %v895
      %913 = vst.msk [vmem:[%s407 + $0xc] sm:$0xf] %vm909, %v896
      %914 = vst.msk [vmem:[%s407 + $0x10] sm:$0xf] %vm909, %v897
      %915 = vst.msk [vmem:[%s407 + $0x14] sm:$0xf] %vm909, %v898
      %916 = vst.msk [vmem:[%s407 + $0x18] sm:$0xf] %vm909, %v899
      %917 = vst.msk [vmem:[%s407 + $0x1c] sm:$0xf] %vm909, %v900
      %s918 = smul.u32 8, %s23
      %p919 = scmp.lt.s32.totalorder %s21, 1
      %s920 = scalar_select %p919, %s21, 1
      %p921 = scmp.lt.s32.totalorder %s22, 3
      %s922 = scalar_select %p921, %s22, 3
      %p923 = scmp.lt.s32.totalorder %s918, 7
      %s924 = scalar_select %p923, %s918, 7
      %s925 = smul.addr %s922, 8
      %s926 = sadd.s32 %s924, %s925
      %s927 = smul.addr %s920, 32
      %s928 = sadd.s32 %s926, %s927
      %s929 = smul.addr %s928, 4
      %s930 = scalar_lea.vmem %s5, %s929
      // Predicated region
      $region41: #{_lambda_.7} parent=39 // pred_check
        %p931 = pneg %p193
      $region42: #{_lambda_.7} parent=39 // pred_check_branch
        %933 = sbr.rel (%p931) target = $region44
      $region43: #{_lambda_.7} parent=39 // pred_region
        %s934 = smul.u32 8, %s23
      $region44: #{_lambda_.7} parent=39 // pred_fallthru
        _
    $region40: #{_lambda_.7} parent=5 // pred_fallthru
      _
    %p935 = scmp.le.s32.totalorder 2, %s11
    // Predicated region
    $region45: #{_lambda_.7} parent=5 // pred_check
      %p936 = pneg %p935
    $region46: #{_lambda_.7} parent=5 // pred_check_branch
      %938 = sbr.rel (%p936) target = $region48
    $region47: #{_lambda_.7} parent=5 // pred_region
      %s939 = ssub.s32 %s11, 2
      // Predicated region
      $region49: #{_lambda_.7} parent=47 // pred_check
        %p940 = pneg %p199
      $region50: #{_lambda_.7} parent=47 // pred_check_branch
        %942 = sbr.rel (%p940) target = $region52
      $region51: #{_lambda_.7} parent=47 // pred_region
        %s943 = smul.u32 8, %s26
        %p944 = scmp.lt.s32.totalorder %s24, 1
        %s945 = scalar_select %p944, %s24, 1
        %p946 = scmp.lt.s32.totalorder %s25, 3
        %s947 = scalar_select %p946, %s25, 3
        %p948 = scmp.lt.s32.totalorder %s943, 7
        %s949 = scalar_select %p948, %s943, 7
        %s950 = smul.addr %s947, 8
        %s951 = sadd.s32 %s949, %s950
        %s952 = smul.addr %s945, 32
        %s953 = sadd.s32 %s951, %s952
        %s954 = smul.addr %s953, 4
        %s955 = scalar_lea.vmem %s5, %s954
      $region52: #{_lambda_.7} parent=47 // pred_fallthru
        _
    $region48: #{_lambda_.7} parent=5 // pred_fallthru
      _
  $region6: #{_lambda_.7} parent=0 // loop_footer
    %s15 = sadd.s32 1, %s11
  $region7: #{_lambda_.7} parent=0 // loop_footer_branch
    %10 = sbr.rel target = $region3
  $region8: #{_lambda_.7} parent=0 // loop_exit
    _

// kernel: _lambda_.8
$region0: #{_lambda_.8}
  #allocation0 [shape = 'u32[]', space=smem, size = 0x4, offset = 0x4, fixed_abs, tag = 'smem constant byte address 0x4 - core index']
  #allocation1 [shape = 'u32[144,128]{1,0:T(1,128)}', space=vmem, size = 0x12000, scoped, tag = 'internal scratch']
  %s0 = inlined_call_operand.vmem [shape: bf16[2,6,16,72], index: 0, kind: input, shape index: {}, may-alias: {0,1,2}]
  %s1 = inlined_call_operand.vmem [shape: bf16[2,6,16,72], index: 1, kind: input, shape index: {}, may-alias: {0,1,2}]
  %s2 = inlined_call_operand.vmem [shape: bf16[2,6,16,72], index: 2, kind: input, shape index: {}, may-alias: {0,1,2}]
  %s3 = inlined_call_operand.vmem [shape: bf16[3,72,8], index: 3, kind: input, shape index: {}]
  %s4 = inlined_call_operand.vmem [shape: f32[1,8], index: 4, kind: input, shape index: {}]
  %s5 = inlined_call_operand.vmem [shape: bf16[2,2,16,8], index: 5, kind: output, shape index: {}]
  %s6 = sld [smem:[#allocation0]]
  $region53: #{_lambda_.8} parent=0
    _
  %s8 = ssub.s32 1, %s6
  %s9 = scalar_select 0, %s8, %s6
  loop: start=0, step=1, limit=6
  $region2: #{_lambda_.8} parent=0 // loop_pre_header
    _
  $region3: #{_lambda_.8} parent=0 // loop_header
    %s11 = sphi 0, %s15
    %p12 = scmp.ge.s32.totalorder %s11, 6
    %s18 = sphi 0, %s37
    %s19 = sphi 0, %s33
    %s20 = sphi 0, %s29
    %s21 = sphi 0, %s18
    %s22 = sphi 0, %s19
    %s23 = sphi 0, %s20
    %s24 = sphi 0, %s21
    %s25 = sphi 0, %s22
    %s26 = sphi 0, %s23
    %s46 = sphi 0, %s48
    %s49 = sphi 0, %s46
    %s50 = sphi 0, %s49
    %s66 = sphi 0, %s50
    %s80 = sphi 0, %s82
    %s83 = sphi 0, %s80
    %s84 = sphi 0, %s83
    %s100 = sphi 0, %s84
    %s114 = sphi 0, %s116
    %s117 = sphi 0, %s114
    %s118 = sphi 0, %s117
    %s134 = sphi 0, %s118
    %s138 = sphi 0, %s138
    %s140 = sphi 0, %s138
    %s141 = sphi 0, %s140
    %s155 = sphi 0, %s141
    %s159 = sphi 0, %s159
    %s161 = sphi 0, %s159
    %s162 = sphi 0, %s161
    %s176 = sphi 0, %s162
    %s186 = sphi 0, %s188
    %s189 = sphi 0, %s186
    %s190 = sphi 0, %s189
    %s206 = sphi 0, %s190
  $region4: #{_lambda_.8} parent=0 // loop_header_branch
    %14 = sbr.rel (%p12) target = $region8
  $region5: #{_lambda_.8} parent=0 // loop_body
    %s16 = ssub.s32 %s11, 1
    %s17 = ssub.s32 %s11, 2
    %s27 = sadd.s32 1, %s20
    %p28 = scmp.ge.s32.totalorder %s27, 1
    %s29 = scalar_select %p28, 0, %s27
    %s30 = sadd.s32 1, %s19
    %s31 = scalar_select %p28, %s30, %s19
    %p32 = scmp.ge.s32.totalorder %s31, 2
    %s33 = scalar_select %p32, 0, %s31
    %s34 = sadd.s32 1, %s18
    %s35 = scalar_select %p32, %s34, %s18
    %p36 = scmp.ge.s32.totalorder %s35, 2
    %s37 = scalar_select %p36, 0, %s35
    %s38 = smul.u32 %s19, 2
    %s39 = smul.u32 %s33, 2
    %s40 = ssub.s32 %s18, %s37
    %s41 = ssub.s32 %s38, %s39
    %s42 = sor.u32 %s40, %s41
    %s43 = ssub.s32 %s20, %s29
    %s44 = sor.u32 %s42, %s43
    %p45 = scmp.eq.s32.totalorder %s44, 0
    %s47 = sadd.s32 %s46, 1
    %s48 = scalar_select %p45, %s46, %s47
    %p51 = pneg %p45
    %p52 = scmp.eq.s32.totalorder %s11, 3
    %p53 = por %p51, %p52
    %p54 = scmp.ne.s32.totalorder %s46, %s49
    %p55 = scmp.eq.s32.totalorder %s11, 0
    %p56 = por %p54, %p55
    %p57 = scmp.ne.s32.totalorder %s46, %s49
    %p58 = scmp.eq.s32.totalorder %s16, 3
    %p59 = por %p57, %p58
    %p60 = scmp.ne.s32.totalorder %s49, %s50
    %p61 = scmp.eq.s32.totalorder %s16, 0
    %p62 = por %p60, %p61
    %p63 = scmp.ne.s32.totalorder %s49, %s50
    %p64 = scmp.eq.s32.totalorder %s17, 3
    %p65 = por %p63, %p64
    %p67 = scmp.ne.s32.totalorder %s50, %s66
    %p68 = scmp.eq.s32.totalorder %s17, 0
    %p69 = por %p67, %p68
    %s70 = smul.u32 %s19, 2
    %s71 = sadd.s32 %s70, 1
    %s72 = smul.u32 %s33, 2
    %s73 = sadd.s32 %s72, 1
    %s74 = ssub.s32 %s18, %s37
    %s75 = ssub.s32 %s71, %s73
    %s76 = sor.u32 %s74, %s75
    %s77 = ssub.s32 %s20, %s29
    %s78 = sor.u32 %s76, %s77
    %p79 = scmp.eq.s32.totalorder %s78, 0
    %s81 = sadd.s32 %s80, 1
    %s82 = scalar_select %p79, %s80, %s81
    %p85 = pneg %p79
    %p86 = scmp.eq.s32.totalorder %s11, 3
    %p87 = por %p85, %p86
    %p88 = scmp.ne.s32.totalorder %s80, %s83
    %p89 = scmp.eq.s32.totalorder %s11, 0
    %p90 = por %p88, %p89
    %p91 = scmp.ne.s32.totalorder %s80, %s83
    %p92 = scmp.eq.s32.totalorder %s16, 3
    %p93 = por %p91, %p92
    %p94 = scmp.ne.s32.totalorder %s83, %s84
    %p95 = scmp.eq.s32.totalorder %s16, 0
    %p96 = por %p94, %p95
    %p97 = scmp.ne.s32.totalorder %s83, %s84
    %p98 = scmp.eq.s32.totalorder %s17, 3
    %p99 = por %p97, %p98
    %p101 = scmp.ne.s32.totalorder %s84, %s100
    %p102 = scmp.eq.s32.totalorder %s17, 0
    %p103 = por %p101, %p102
    %s104 = smul.u32 %s19, 2
    %s105 = sadd.s32 %s104, 2
    %s106 = smul.u32 %s33, 2
    %s107 = sadd.s32 %s106, 2
    %s108 = ssub.s32 %s18, %s37
    %s109 = ssub.s32 %s105, %s107
    %s110 = sor.u32 %s108, %s109
    %s111 = ssub.s32 %s20, %s29
    %s112 = sor.u32 %s110, %s111
    %p113 = scmp.eq.s32.totalorder %s112, 0
    %s115 = sadd.s32 %s114, 1
    %s116 = scalar_select %p113, %s114, %s115
    %p119 = pneg %p113
    %p120 = scmp.eq.s32.totalorder %s11, 3
    %p121 = por %p119, %p120
    %p122 = scmp.ne.s32.totalorder %s114, %s117
    %p123 = scmp.eq.s32.totalorder %s11, 0
    %p124 = por %p122, %p123
    %p125 = scmp.ne.s32.totalorder %s114, %s117
    %p126 = scmp.eq.s32.totalorder %s16, 3
    %p127 = por %p125, %p126
    %p128 = scmp.ne.s32.totalorder %s117, %s118
    %p129 = scmp.eq.s32.totalorder %s16, 0
    %p130 = por %p128, %p129
    %p131 = scmp.ne.s32.totalorder %s117, %s118
    %p132 = scmp.eq.s32.totalorder %s17, 3
    %p133 = por %p131, %p132
    %p135 = scmp.ne.s32.totalorder %s118, %s134
    %p136 = scmp.eq.s32.totalorder %s17, 0
    %p137 = por %p135, %p136
    %s139 = sadd.s32 %s138, 1
    %p142 = scmp.eq.s32.totalorder %s11, 3
    %p143 = scmp.ne.s32.totalorder %s138, %s140
    %p144 = scmp.eq.s32.totalorder %s11, 0
    %p145 = por %p143, %p144
    %p146 = scmp.ne.s32.totalorder %s138, %s140
    %p147 = scmp.eq.s32.totalorder %s16, 3
    %p148 = por %p146, %p147
    %p149 = scmp.ne.s32.totalorder %s140, %s141
    %p150 = scmp.eq.s32.totalorder %s16, 0
    %p151 = por %p149, %p150
    %p152 = scmp.ne.s32.totalorder %s140, %s141
    %p153 = scmp.eq.s32.totalorder %s17, 3
    %p154 = por %p152, %p153
    %p156 = scmp.ne.s32.totalorder %s141, %s155
    %p157 = scmp.eq.s32.totalorder %s17, 0
    %p158 = por %p156, %p157
    %s160 = sadd.s32 %s159, 1
    %p163 = scmp.eq.s32.totalorder %s11, 3
    %p164 = scmp.ne.s32.totalorder %s159, %s161
    %p165 = scmp.eq.s32.totalorder %s11, 0
    %p166 = por %p164, %p165
    %p167 = scmp.ne.s32.totalorder %s159, %s161
    %p168 = scmp.eq.s32.totalorder %s16, 3
    %p169 = por %p167, %p168
    %p170 = scmp.ne.s32.totalorder %s161, %s162
    %p171 = scmp.eq.s32.totalorder %s16, 0
    %p172 = por %p170, %p171
    %p173 = scmp.ne.s32.totalorder %s161, %s162
    %p174 = scmp.eq.s32.totalorder %s17, 3
    %p175 = por %p173, %p174
    %p177 = scmp.ne.s32.totalorder %s162, %s176
    %p178 = scmp.eq.s32.totalorder %s17, 0
    %p179 = por %p177, %p178
    %s180 = ssub.s32 %s18, %s37
    %s181 = ssub.s32 %s19, %s33
    %s182 = sor.u32 %s180, %s181
    %s183 = ssub.s32 %s20, %s29
    %s184 = sor.u32 %s182, %s183
    %p185 = scmp.eq.s32.totalorder %s184, 0
    %s187 = sadd.s32 %s186, 1
    %s188 = scalar_select %p185, %s186, %s187
    %p191 = pneg %p185
    %p192 = scmp.eq.s32.totalorder %s11, 3
    %p193 = por %p191, %p192
    %p194 = scmp.ne.s32.totalorder %s186, %s189
    %p195 = scmp.eq.s32.totalorder %s11, 0
    %p196 = por %p194, %p195
    %p197 = scmp.ne.s32.totalorder %s186, %s189
    %p198 = scmp.eq.s32.totalorder %s16, 3
    %p199 = por %p197, %p198
    %p200 = scmp.ne.s32.totalorder %s189, %s190
    %p201 = scmp.eq.s32.totalorder %s16, 0
    %p202 = por %p200, %p201
    %p203 = scmp.ne.s32.totalorder %s189, %s190
    %p204 = scmp.eq.s32.totalorder %s17, 3
    %p205 = por %p203, %p204
    %p207 = scmp.ne.s32.totalorder %s190, %s206
    %p208 = scmp.eq.s32.totalorder %s17, 0
    %p209 = por %p207, %p208
    %p210 = scmp.le.s32.totalorder 1, %s11
    %p211 = scmp.lt.s32.totalorder %s11, 5
    %p212 = pnand %p210, %p211
    %p213 = pneg %p212
    // Predicated region
    $region9: #{_lambda_.8} parent=5 // pred_check
      _
    $region10: #{_lambda_.8} parent=5 // pred_check_branch
      %215 = sbr.rel (%p212) target = $region12
    $region11: #{_lambda_.8} parent=5 // pred_region
      %s216 = ssub.s32 %s11, 1
      // Predicated region
      $region13: #{_lambda_.8} parent=11 // pred_check
        %p217 = pneg %p151
      $region14: #{_lambda_.8} parent=11 // pred_check_branch
        %219 = sbr.rel (%p217) target = $region16
      $region15: #{_lambda_.8} parent=11 // pred_region
        _
      $region16: #{_lambda_.8} parent=11 // pred_fallthru
        _
      // Predicated region
      $region17: #{_lambda_.8} parent=11 // pred_check
        %p220 = pneg %p172
      $region18: #{_lambda_.8} parent=11 // pred_check_branch
        %222 = sbr.rel (%p220) target = $region20
      $region19: #{_lambda_.8} parent=11 // pred_region
        _
      $region20: #{_lambda_.8} parent=11 // pred_fallthru
        _
    $region12: #{_lambda_.8} parent=5 // pred_fallthru
      _
    %p223 = scmp.lt.s32.totalorder %s11, 4
    // Predicated region
    $region21: #{_lambda_.8} parent=5 // pred_check
      %p224 = pneg %p223
    $region22: #{_lambda_.8} parent=5 // pred_check_branch
      %226 = sbr.rel (%p224) target = $region24
    $region23: #{_lambda_.8} parent=5 // pred_region
      // Predicated region
      $region25: #{_lambda_.8} parent=23 // pred_check
        %p227 = pneg %p56
      $region26: #{_lambda_.8} parent=23 // pred_check_branch
        %229 = sbr.rel (%p227) target = $region28
      $region27: #{_lambda_.8} parent=23 // pred_region
        %s230 = smul.u32 %s19, 2
        %s231 = smul.u32 2, %s20
        %p232 = scmp.lt.s32.totalorder %s18, 1
        %s233 = scalar_select %p232, %s18, 1
        %p234 = scmp.lt.s32.totalorder %s230, 5
        %s235 = scalar_select %p234, %s230, 5
        %p236 = scmp.lt.s32.totalorder %s231, 1
        %s237 = scalar_select %p236, %s231, 1
        %s238 = smul.addr %s235, 2
        %s239 = sadd.s32 %s237, %s238
        %s240 = smul.addr %s233, 12
        %s241 = sadd.s32 %s239, %s240
        %s242 = smul.addr %s241, 4
        %s243 = scalar_lea.vmem %s0, %s242
        %s244 = smul.u32 %s19, 2
        %s245 = smul.u32 2, %s20
      $region28: #{_lambda_.8} parent=23 // pred_fallthru
        _
      // Predicated region
      $region29: #{_lambda_.8} parent=23 // pred_check
        %p246 = pneg %p90
      $region30: #{_lambda_.8} parent=23 // pred_check_branch
        %248 = sbr.rel (%p246) target = $region32
      $region31: #{_lambda_.8} parent=23 // pred_region
        %s249 = smul.u32 %s19, 2
        %s250 = sadd.s32 %s249, 1
        %s251 = smul.u32 2, %s20
        %p252 = scmp.lt.s32.totalorder %s18, 1
        %s253 = scalar_select %p252, %s18, 1
        %p254 = scmp.lt.s32.totalorder %s250, 5
        %s255 = scalar_select %p254, %s250, 5
        %p256 = scmp.lt.s32.totalorder %s251, 1
        %s257 = scalar_select %p256, %s251, 1
        %s258 = smul.addr %s255, 2
        %s259 = sadd.s32 %s257, %s258
        %s260 = smul.addr %s253, 12
        %s261 = sadd.s32 %s259, %s260
        %s262 = smul.addr %s261, 4
        %s263 = scalar_lea.vmem %s1, %s262
        %s264 = smul.u32 %s19, 2
        %s265 = sadd.s32 %s264, 1
        %s266 = smul.u32 2, %s20
      $region32: #{_lambda_.8} parent=23 // pred_fallthru
        _
      // Predicated region
      $region33: #{_lambda_.8} parent=23 // pred_check
        %p267 = pneg %p124
      $region34: #{_lambda_.8} parent=23 // pred_check_branch
        %269 = sbr.rel (%p267) target = $region36
      $region35: #{_lambda_.8} parent=23 // pred_region
        %s270 = smul.u32 %s19, 2
        %s271 = sadd.s32 %s270, 2
        %s272 = smul.u32 2, %s20
        %p273 = scmp.lt.s32.totalorder %s18, 1
        %s274 = scalar_select %p273, %s18, 1
        %p275 = scmp.lt.s32.totalorder %s271, 5
        %s276 = scalar_select %p275, %s271, 5
        %p277 = scmp.lt.s32.totalorder %s272, 1
        %s278 = scalar_select %p277, %s272, 1
        %s279 = smul.addr %s276, 2
        %s280 = sadd.s32 %s278, %s279
        %s281 = smul.addr %s274, 12
        %s282 = sadd.s32 %s280, %s281
        %s283 = smul.addr %s282, 4
        %s284 = scalar_lea.vmem %s2, %s283
        %s285 = smul.u32 %s19, 2
        %s286 = sadd.s32 %s285, 2
        %s287 = smul.u32 2, %s20
      $region36: #{_lambda_.8} parent=23 // pred_fallthru
        _
    $region24: #{_lambda_.8} parent=5 // pred_fallthru
      _
    %p288 = scmp.le.s32.totalorder 1, %s11
    %p289 = scmp.lt.s32.totalorder %s11, 5
    %p290 = pnand %p288, %p289
    %p291 = pneg %p290
    // Predicated region
    $region37: #{_lambda_.8} parent=5 // pred_check
      _
    $region38: #{_lambda_.8} parent=5 // pred_check_branch
      %293 = sbr.rel (%p290) target = $region40
    $region39: #{_lambda_.8} parent=5 // pred_region
      %s294 = ssub.s32 %s11, 1
      %s295 = smul.u32 %s22, 2
      %s296 = smul.u32 2, %s23
      %p297 = scmp.lt.s32.totalorder %s21, 1
      %s298 = scalar_select %p297, %s21, 1
      %p299 = scmp.lt.s32.totalorder %s295, 5
      %s300 = scalar_select %p299, %s295, 5
      %p301 = scmp.lt.s32.totalorder %s296, 1
      %s302 = scalar_select %p301, %s296, 1
      %s303 = smul.addr %s300, 2
      %s304 = sadd.s32 %s302, %s303
      %s305 = smul.addr %s298, 12
      %s306 = sadd.s32 %s304, %s305
      %s307 = smul.addr %s306, 4
      %s308 = scalar_lea.vmem %s0, %s307
      %p309 = pneg %p62
      %p310 = pneg %p59
      %s311 = smul.u32 %s22, 2
      %s312 = sadd.s32 %s311, 1
      %s313 = smul.u32 2, %s23
      %p314 = scmp.lt.s32.totalorder %s21, 1
      %s315 = scalar_select %p314, %s21, 1
      %p316 = scmp.lt.s32.totalorder %s312, 5
      %s317 = scalar_select %p316, %s312, 5
      %p318 = scmp.lt.s32.totalorder %s313, 1
      %s319 = scalar_select %p318, %s313, 1
      %s320 = smul.addr %s317, 2
      %s321 = sadd.s32 %s319, %s320
      %s322 = smul.addr %s315, 12
      %s323 = sadd.s32 %s321, %s322
      %s324 = smul.addr %s323, 4
      %s325 = scalar_lea.vmem %s1, %s324
      %p326 = pneg %p96
      %p327 = pneg %p93
      %s328 = smul.u32 %s22, 2
      %s329 = sadd.s32 %s328, 2
      %s330 = smul.u32 2, %s23
      %p331 = scmp.lt.s32.totalorder %s21, 1
      %s332 = scalar_select %p331, %s21, 1
      %p333 = scmp.lt.s32.totalorder %s329, 5
      %s334 = scalar_select %p333, %s329, 5
      %p335 = scmp.lt.s32.totalorder %s330, 1
      %s336 = scalar_select %p335, %s330, 1
      %s337 = smul.addr %s334, 2
      %s338 = sadd.s32 %s336, %s337
      %s339 = smul.addr %s332, 12
      %s340 = sadd.s32 %s338, %s339
      %s341 = smul.addr %s340, 4
      %s342 = scalar_lea.vmem %s2, %s341
      %p343 = pneg %p130
      %p344 = pneg %p127
      %p345 = pneg %p151
      %p346 = pneg %p148
      %p347 = pneg %p172
      %p348 = pneg %p169
      %p349 = pneg %p202
      %p350 = pneg %p199
      %s351 = smul.u32 2, %s23
      %p352 = scmp.lt.s32.totalorder %s21, 1
      %s353 = scalar_select %p352, %s21, 1
      %p354 = scmp.lt.s32.totalorder %s22, 1
      %s355 = scalar_select %p354, %s22, 1
      %p356 = scmp.lt.s32.totalorder %s351, 1
      %s357 = scalar_select %p356, %s351, 1
      %s358 = smul.addr %s355, 2
      %s359 = sadd.s32 %s357, %s358
      %s360 = smul.addr %s353, 4
      %s361 = sadd.s32 %s359, %s360
      %s362 = smul.addr %s361, 4
      %s363 = scalar_lea.vmem %s5, %s362
      %s364 = smul.u32 %s22, 2
      %s365 = smul.u32 2, %s23
      %p366 = scmp.lt.s32.totalorder %s21, 1
      %s367 = scalar_select %p366, %s21, 1
      %p368 = scmp.lt.s32.totalorder %s364, 5
      %s369 = scalar_select %p368, %s364, 5
      %p370 = scmp.lt.s32.totalorder %s365, 1
      %s371 = scalar_select %p370, %s365, 1
      %s372 = smul.addr %s369, 2
      %s373 = sadd.s32 %s371, %s372
      %s374 = smul.addr %s367, 12
      %s375 = sadd.s32 %s373, %s374
      %s376 = smul.addr %s375, 4
      %s377 = scalar_lea.vmem %s0, %s376
      %s378 = smul.u32 %s22, 2
      %s379 = smul.u32 2, %s23
      %s380 = smul.u32 %s22, 2
      %s381 = sadd.s32 %s380, 1
      %s382 = smul.u32 2, %s23
      %p383 = scmp.lt.s32.totalorder %s21, 1
      %s384 = scalar_select %p383, %s21, 1
      %p385 = scmp.lt.s32.totalorder %s381, 5
      %s386 = scalar_select %p385, %s381, 5
      %p387 = scmp.lt.s32.totalorder %s382, 1
      %s388 = scalar_select %p387, %s382, 1
      %s389 = smul.addr %s386, 2
      %s390 = sadd.s32 %s388, %s389
      %s391 = smul.addr %s384, 12
      %s392 = sadd.s32 %s390, %s391
      %s393 = smul.addr %s392, 4
      %s394 = scalar_lea.vmem %s1, %s393
      %s395 = smul.u32 %s22, 2
      %s396 = sadd.s32 %s395, 1
      %s397 = smul.u32 2, %s23
      %s398 = smul.u32 %s22, 2
      %s399 = sadd.s32 %s398, 2
      %s400 = smul.u32 2, %s23
      %p401 = scmp.lt.s32.totalorder %s21, 1
      %s402 = scalar_select %p401, %s21, 1
      %p403 = scmp.lt.s32.totalorder %s399, 5
      %s404 = scalar_select %p403, %s399, 5
      %p405 = scmp.lt.s32.totalorder %s400, 1
      %s406 = scalar_select %p405, %s400, 1
      %s407 = smul.addr %s404, 2
      %s408 = sadd.s32 %s406, %s407
      %s409 = smul.addr %s402, 12
      %s410 = sadd.s32 %s408, %s409
      %s411 = smul.addr %s410, 4
      %s412 = scalar_lea.vmem %s2, %s411
      %s413 = smul.u32 %s22, 2
      %s414 = sadd.s32 %s413, 2
      %s415 = smul.u32 2, %s23
      %s416 = smul.u32 2, %s23
      %p417 = scmp.lt.s32.totalorder %s21, 1
      %s418 = scalar_select %p417, %s21, 1
      %p419 = scmp.lt.s32.totalorder %s22, 1
      %s420 = scalar_select %p419, %s22, 1
      %p421 = scmp.lt.s32.totalorder %s416, 1
      %s422 = scalar_select %p421, %s416, 1
      %s423 = smul.addr %s420, 2
      %s424 = sadd.s32 %s422, %s423
      %s425 = smul.addr %s418, 4
      %s426 = sadd.s32 %s424, %s425
      %s427 = smul.addr %s426, 4
      %s428 = scalar_lea.vmem %s5, %s427
      %s429 = smul.u32 2, %s23
      %v431 = vld [vmem:[%s377] sm:$0xf]
      %v432 = vld [vmem:[%s377 + $0x4] sm:$0xf]
      %v433 = vld [vmem:[%s3] sm:$0xf]
      %v434 = vld [vmem:[%s3 + $0x4] sm:$0xf]
      %v435 = vld [vmem:[%s3 + $0x8] sm:$0xf]
      %v436 = vld [vmem:[%s3 + $0xc] sm:$0xf]
      %v437 = vld [vmem:[%s3 + $0x10] sm:$0xf]
      %v438 = vld [vmem:[%s3 + $0x14] sm:$0xf]
      %v439 = vld [vmem:[%s3 + $0x18] sm:$0xf]
      %v440 = vld [vmem:[%s3 + $0x1c] sm:$0xf]
      %v441 = vld [vmem:[%s3 + $0x20] sm:$0xf]
      %v442 = vld [vmem:[%s394] sm:$0xf]
      %v443 = vld [vmem:[%s394 + $0x4] sm:$0xf]
      %s444 = scalar_lea.vmem %s3, 36
      %v445 = vld [vmem:[%s444] sm:$0xf]
      %v446 = vld [vmem:[%s444 + $0x4] sm:$0xf]
      %v447 = vld [vmem:[%s444 + $0x8] sm:$0xf]
      %v448 = vld [vmem:[%s444 + $0xc] sm:$0xf]
      %v449 = vld [vmem:[%s444 + $0x10] sm:$0xf]
      %v450 = vld [vmem:[%s444 + $0x14] sm:$0xf]
      %v451 = vld [vmem:[%s444 + $0x18] sm:$0xf]
      %v452 = vld [vmem:[%s444 + $0x1c] sm:$0xf]
      %v453 = vld [vmem:[%s444 + $0x20] sm:$0xf]
      %v456 = vunpack.c.l.b16 %v442
      %v457 = vunpack.c.l.b16 %v443
      %v458 = vpack.c.b16 %v457, %v456
      %v468 = vunpack.c.l.b16 %v445
      %v469 = vunpack.c.l.b16 %v446
      %v470 = vunpack.c.l.b16 %v447
      %v471 = vunpack.c.l.b16 %v448
      %v472 = vunpack.c.l.b16 %v449
      %v473 = vunpack.c.l.b16 %v450
      %v474 = vunpack.c.l.b16 %v451
      %v475 = vunpack.c.l.b16 %v452
      %v476 = vunpack.c.l.b16 %v453
      %v477 = vpack.c.b16 %v469, %v468
      %v478 = vpack.c.b16 %v471, %v470
      %v479 = vpack.c.b16 %v473, %v472
      %v480 = vpack.c.b16 %v475, %v474
      %v481 = vpack.c.b16 %v476, %v476
      %vm486 = vcmask 588800
      %v488 = vsel %vm486, %v458, 0
      %vm490 = vcmask 1043456
      %v492 = vsel %vm490, %v481, 0
      %494 = vmatprep.subr.bf16.mxu0 0
      %495 = vmatpush1.bf16.msra.mxu0 %v477
      %496 = vmatprep.subr.bf16.mxu0 0
      %497 = vmatpush1.bf16.msra.mxu0 %v478
      %498 = vmatprep.subr.bf16.mxu0 0
      %499 = vmatpush1.bf16.msra.mxu0 %v479
      %500 = vmatprep.subr.bf16.mxu0 0
      %501 = vmatpush1.bf16.msra.mxu0 %v480
      %502 = vmatprep.subr.bf16.mxu0 0
      %503 = vmatpush1.bf16.msra.mxu0 %v492
      %504 = vmatprep.subr.bf16.mxu0 0
      %505 = vmatpush1.bf16.msra.mxu0 0
      %506 = vmatprep.subr.bf16.mxu0 0
      %507 = vmatpush1.bf16.msra.mxu0 0
      %508 = vmatprep.subr.bf16.mxu0 0
      %509 = vmatpush1.bf16.msra.mxu0 0
      %510 = vmatprep.subr.bf16.mxu0 0
      %511 = vmatpush1.bf16.msra.mxu0 0
      %512 = vmatprep.subr.bf16.mxu0 0
      %513 = vmatpush1.bf16.msra.mxu0 0
      %514 = vmatprep.subr.bf16.mxu0 0
      %515 = vmatpush1.bf16.msra.mxu0 0
      %516 = vmatprep.subr.bf16.mxu0 0
      %517 = vmatpush1.bf16.msra.mxu0 0
      %518 = vmatprep.subr.bf16.mxu0 0
      %519 = vmatpush1.bf16.msra.mxu0 0
      %520 = vmatprep.subr.bf16.mxu0 0
      %521 = vmatpush1.bf16.msra.mxu0 0
      %522 = vmatprep.subr.bf16.mxu0 0
      %523 = vmatpush1.bf16.msra.mxu0 0
      %524 = vmatprep.subr.bf16.mxu0 0
      %525 = vmatpush1.bf16.msra.mxu0 0
      %526 = vmatprep.mubr.bf16.mxu0 0
      %527 = vmatmul.mubr.bf16.gmra.mrb[0].mxu0 %v488
      %v528 = vpop.f32.mrb[0].mxu0
      %v529 = vadd.f32 0.0, %v528
      %v530 = vpop.f32.mrb[0].mxu0
      %v531 = vpop.f32.mrb[0].mxu0
      %v532 = vadd.f32 0.0, %v531
      %v533 = vpop.f32.mrb[0].mxu0
      %534 = vdwg.mxu0
      %v537 = vunpack.c.l.b16 %v431
      %v538 = vunpack.c.l.b16 %v432
      %v539 = vpack.c.b16 %v538, %v537
      %v549 = vunpack.c.l.b16 %v433
      %v550 = vunpack.c.l.b16 %v434
      %v551 = vunpack.c.l.b16 %v435
      %v552 = vunpack.c.l.b16 %v436
      %v553 = vunpack.c.l.b16 %v437
      %v554 = vunpack.c.l.b16 %v438
      %v555 = vunpack.c.l.b16 %v439
      %v556 = vunpack.c.l.b16 %v440
      %v557 = vunpack.c.l.b16 %v441
      %v558 = vpack.c.b16 %v550, %v549
      %v559 = vpack.c.b16 %v552, %v551
      %v560 = vpack.c.b16 %v554, %v553
      %v561 = vpack.c.b16 %v556, %v555
      %v562 = vpack.c.b16 %v557, %v557
      %v568 = vsel %vm486, %v539, 0
      %v571 = vsel %vm490, %v562, 0
      %573 = vmatprep.subr.bf16.mxu0 0
      %574 = vmatpush1.bf16.msra.mxu0 %v558
      %575 = vmatprep.subr.bf16.mxu0 0
      %576 = vmatpush1.bf16.msra.mxu0 %v559
      %577 = vmatprep.subr.bf16.mxu0 0
      %578 = vmatpush1.bf16.msra.mxu0 %v560
      %579 = vmatprep.subr.bf16.mxu0 0
      %580 = vmatpush1.bf16.msra.mxu0 %v561
      %581 = vmatprep.subr.bf16.mxu0 0
      %582 = vmatpush1.bf16.msra.mxu0 %v571
      %583 = vmatprep.subr.bf16.mxu0 0
      %584 = vmatpush1.bf16.msra.mxu0 0
      %585 = vmatprep.subr.bf16.mxu0 0
      %586 = vmatpush1.bf16.msra.mxu0 0
      %587 = vmatprep.subr.bf16.mxu0 0
      %588 = vmatpush1.bf16.msra.mxu0 0
      %589 = vmatprep.subr.bf16.mxu0 0
      %590 = vmatpush1.bf16.msra.mxu0 0
      %591 = vmatprep.subr.bf16.mxu0 0
      %592 = vmatpush1.bf16.msra.mxu0 0
      %593 = vmatprep.subr.bf16.mxu0 0
      %594 = vmatpush1.bf16.msra.mxu0 0
      %595 = vmatprep.subr.bf16.mxu0 0
      %596 = vmatpush1.bf16.msra.mxu0 0
      %597 = vmatprep.subr.bf16.mxu0 0
      %598 = vmatpush1.bf16.msra.mxu0 0
      %599 = vmatprep.subr.bf16.mxu0 0
      %600 = vmatpush1.bf16.msra.mxu0 0
      %601 = vmatprep.subr.bf16.mxu0 0
      %602 = vmatpush1.bf16.msra.mxu0 0
      %603 = vmatprep.subr.bf16.mxu0 0
      %604 = vmatpush1.bf16.msra.mxu0 0
      %605 = vmatprep.mubr.bf16.mxu0 0
      %606 = vmatmul.mubr.bf16.gmra.mrb[0].mxu0 %v568
      %v607 = vpop.f32.mrb[0].mxu0
      %v608 = vadd.f32 %v529, %v607
      %v609 = vpop.f32.mrb[0].mxu0
      %v610 = vpop.f32.mrb[0].mxu0
      %v611 = vadd.f32 %v532, %v610
      %v612 = vpop.f32.mrb[0].mxu0
      %613 = vdwg.mxu0
      %v614 = vld [vmem:[%s412] sm:$0xf]
      %v615 = vld [vmem:[%s412 + $0x4] sm:$0xf]
      %s616 = scalar_lea.vmem %s3, 72
      %v617 = vld [vmem:[%s616] sm:$0xf]
      %v618 = vld [vmem:[%s616 + $0x4] sm:$0xf]
      %v619 = vld [vmem:[%s616 + $0x8] sm:$0xf]
      %v620 = vld [vmem:[%s616 + $0xc] sm:$0xf]
      %v621 = vld [vmem:[%s616 + $0x10] sm:$0xf]
      %v622 = vld [vmem:[%s616 + $0x14] sm:$0xf]
      %v623 = vld [vmem:[%s616 + $0x18] sm:$0xf]
      %v624 = vld [vmem:[%s616 + $0x1c] sm:$0xf]
      %v625 = vld [vmem:[%s616 + $0x20] sm:$0xf]
      %v628 = vunpack.c.l.b16 %v614
      %v629 = vunpack.c.l.b16 %v615
      %v630 = vpack.c.b16 %v629, %v628
      %v640 = vunpack.c.l.b16 %v617
      %v641 = vunpack.c.l.b16 %v618
      %v642 = vunpack.c.l.b16 %v619
      %v643 = vunpack.c.l.b16 %v620
      %v644 = vunpack.c.l.b16 %v621
      %v645 = vunpack.c.l.b16 %v622
      %v646 = vunpack.c.l.b16 %v623
      %v647 = vunpack.c.l.b16 %v624
      %v648 = vunpack.c.l.b16 %v625
      %v649 = vpack.c.b16 %v641, %v640
      %v650 = vpack.c.b16 %v643, %v642
      %v651 = vpack.c.b16 %v645, %v644
      %v652 = vpack.c.b16 %v647, %v646
      %v653 = vpack.c.b16 %v648, %v648
      %v659 = vsel %vm486, %v630, 0
      %v662 = vsel %vm490, %v653, 0
      %664 = vmatprep.subr.bf16.mxu0 0
      %665 = vmatpush1.bf16.msra.mxu0 %v649
      %666 = vmatprep.subr.bf16.mxu0 0
      %667 = vmatpush1.bf16.msra.mxu0 %v650
      %668 = vmatprep.subr.bf16.mxu0 0
      %669 = vmatpush1.bf16.msra.mxu0 %v651
      %670 = vmatprep.subr.bf16.mxu0 0
      %671 = vmatpush1.bf16.msra.mxu0 %v652
      %672 = vmatprep.subr.bf16.mxu0 0
      %673 = vmatpush1.bf16.msra.mxu0 %v662
      %674 = vmatprep.subr.bf16.mxu0 0
      %675 = vmatpush1.bf16.msra.mxu0 0
      %676 = vmatprep.subr.bf16.mxu0 0
      %677 = vmatpush1.bf16.msra.mxu0 0
      %678 = vmatprep.subr.bf16.mxu0 0
      %679 = vmatpush1.bf16.msra.mxu0 0
      %680 = vmatprep.subr.bf16.mxu0 0
      %681 = vmatpush1.bf16.msra.mxu0 0
      %682 = vmatprep.subr.bf16.mxu0 0
      %683 = vmatpush1.bf16.msra.mxu0 0
      %684 = vmatprep.subr.bf16.mxu0 0
      %685 = vmatpush1.bf16.msra.mxu0 0
      %686 = vmatprep.subr.bf16.mxu0 0
      %687 = vmatpush1.bf16.msra.mxu0 0
      %688 = vmatprep.subr.bf16.mxu0 0
      %689 = vmatpush1.bf16.msra.mxu0 0
      %690 = vmatprep.subr.bf16.mxu0 0
      %691 = vmatpush1.bf16.msra.mxu0 0
      %692 = vmatprep.subr.bf16.mxu0 0
      %693 = vmatpush1.bf16.msra.mxu0 0
      %694 = vmatprep.subr.bf16.mxu0 0
      %695 = vmatpush1.bf16.msra.mxu0 0
      %696 = vmatprep.mubr.bf16.mxu0 0
      %697 = vmatmul.mubr.bf16.gmra.mrb[0].mxu0 %v659
      %v698 = vpop.f32.mrb[0].mxu0
      %v699 = vadd.f32 0.0, %v698
      %v700 = vpop.f32.mrb[0].mxu0
      %v701 = vpop.f32.mrb[0].mxu0
      %v702 = vadd.f32 0.0, %v701
      %v703 = vpop.f32.mrb[0].mxu0
      %704 = vdwg.mxu0
      %v705 = vadd.f32 %v608, %v699
      %v706 = vadd.f32 %v611, %v702
      %v707 = vld [vmem:[%s4] sm:$0x1]
      %v709 = vlaneseq
      %v710 = vshrl.u32 %v709, 7
      %v711 = vsub.s32 0, %v710
      %v712 = vrot.slane %v707, %v711
      %v714 = vadd.f32 %v705, %v712
      %v715 = vadd.f32 %v706, %v712
      %v716 = vmax.f32 %v714, 0.0
      %v717 = vmax.f32 %v715, 0.0
      %v718 = vpack.c.bf16 %v717, %v716
      %v720 = vunpack.c.l.b16 %v718
      %v721 = vunpack.c.h.b16 %v718
      %v722 = vpack.c.b16 %v720, %v720
      %v723 = vpack.c.b16 %v721, %v721
      %vm726 = vcmask 60416
      %727 = vst.msk [vmem:[%s428] sm:$0xf] %vm726, %v722
      %728 = vst.msk [vmem:[%s428 + $0x4] sm:$0xf] %vm726, %v723
      %s729 = smul.u32 2, %s23
      %p730 = scmp.lt.s32.totalorder %s21, 1
      %s731 = scalar_select %p730, %s21, 1
      %p732 = scmp.lt.s32.totalorder %s22, 1
      %s733 = scalar_select %p732, %s22, 1
      %p734 = scmp.lt.s32.totalorder %s729, 1
      %s735 = scalar_select %p734, %s729, 1
      %s736 = smul.addr %s733, 2
      %s737 = sadd.s32 %s735, %s736
      %s738 = smul.addr %s731, 4
      %s739 = sadd.s32 %s737, %s738
      %s740 = smul.addr %s739, 4
      %s741 = scalar_lea.vmem %s5, %s740
      // Predicated region
      $region41: #{_lambda_.8} parent=39 // pred_check
        %p742 = pneg %p199
      $region42: #{_lambda_.8} parent=39 // pred_check_branch
        %744 = sbr.rel (%p742) target = $region44
      $region43: #{_lambda_.8} parent=39 // pred_region
        %s745 = smul.u32 2, %s23
      $region44: #{_lambda_.8} parent=39 // pred_fallthru
        _
    $region40: #{_lambda_.8} parent=5 // pred_fallthru
      _
    %p746 = scmp.le.s32.totalorder 2, %s11
    // Predicated region
    $region45: #{_lambda_.8} parent=5 // pred_check
      %p747 = pneg %p746
    $region46: #{_lambda_.8} parent=5 // pred_check_branch
      %749 = sbr.rel (%p747) target = $region48
    $region47: #{_lambda_.8} parent=5 // pred_region
      %s750 = ssub.s32 %s11, 2
      // Predicated region
      $region49: #{_lambda_.8} parent=47 // pred_check
        %p751 = pneg %p205
      $region50: #{_lambda_.8} parent=47 // pred_check_branch
        %753 = sbr.rel (%p751) target = $region52
      $region51: #{_lambda_.8} parent=47 // pred_region
        %s754 = smul.u32 2, %s26
        %p755 = scmp.lt.s32.totalorder %s24, 1
        %s756 = scalar_select %p755, %s24, 1
        %p757 = scmp.lt.s32.totalorder %s25, 1
        %s758 = scalar_select %p757, %s25, 1
        %p759 = scmp.lt.s32.totalorder %s754, 1
        %s760 = scalar_select %p759, %s754, 1
        %s761 = smul.addr %s758, 2
        %s762 = sadd.s32 %s760, %s761
        %s763 = smul.addr %s756, 4
        %s764 = sadd.s32 %s762, %s763
        %s765 = smul.addr %s764, 4
        %s766 = scalar_lea.vmem %s5, %s765
      $region52: #{_lambda_.8} parent=47 // pred_fallthru
        _
    $region48: #{_lambda_.8} parent=5 // pred_fallthru
      _
  $region6: #{_lambda_.8} parent=0 // loop_footer
    %s15 = sadd.s32 1, %s11
  $region7: #{_lambda_.8} parent=0 // loop_footer_branch
    %10 = sbr.rel target = $region3
  $region8: #{_lambda_.8} parent=0 // loop_exit
    _

// kernel: _lambda_.9
$region0: #{_lambda_.9}
  #allocation0 [shape = 'u32[]', space=smem, size = 0x4, offset = 0x4, fixed_abs, tag = 'smem constant byte address 0x4 - core index']
  #allocation1 [shape = 'u32[144,128]{1,0:T(1,128)}', space=vmem, size = 0x12000, scoped, tag = 'internal scratch']
  %s0 = inlined_call_operand.vmem [shape: bf16[2,4,16,72], index: 0, kind: input, shape index: {}, may-alias: {0,1,2}]
  %s1 = inlined_call_operand.vmem [shape: bf16[2,4,16,72], index: 1, kind: input, shape index: {}, may-alias: {0,1,2}]
  %s2 = inlined_call_operand.vmem [shape: bf16[2,4,16,72], index: 2, kind: input, shape index: {}, may-alias: {0,1,2}]
  %s3 = inlined_call_operand.vmem [shape: bf16[3,72,8], index: 3, kind: input, shape index: {}]
  %s4 = inlined_call_operand.vmem [shape: f32[1,8], index: 4, kind: input, shape index: {}]
  %s5 = inlined_call_operand.vmem [shape: bf16[2,2,16,8], index: 5, kind: output, shape index: {}]
  %s6 = sld [smem:[#allocation0]]
  $region53: #{_lambda_.9} parent=0
    _
  %s8 = ssub.s32 1, %s6
  %s9 = scalar_select 0, %s8, %s6
  loop: start=0, step=1, limit=6
  $region2: #{_lambda_.9} parent=0 // loop_pre_header
    _
  $region3: #{_lambda_.9} parent=0 // loop_header
    %s11 = sphi 0, %s15
    %p12 = scmp.ge.s32.totalorder %s11, 6
    %s18 = sphi 0, %s37
    %s19 = sphi 0, %s33
    %s20 = sphi 0, %s29
    %s21 = sphi 0, %s18
    %s22 = sphi 0, %s19
    %s23 = sphi 0, %s20
    %s24 = sphi 0, %s21
    %s25 = sphi 0, %s22
    %s26 = sphi 0, %s23
    %s44 = sphi 0, %s46
    %s47 = sphi 0, %s44
    %s48 = sphi 0, %s47
    %s64 = sphi 0, %s48
    %s76 = sphi 0, %s78
    %s79 = sphi 0, %s76
    %s80 = sphi 0, %s79
    %s96 = sphi 0, %s80
    %s108 = sphi 0, %s110
    %s111 = sphi 0, %s108
    %s112 = sphi 0, %s111
    %s128 = sphi 0, %s112
    %s132 = sphi 0, %s132
    %s134 = sphi 0, %s132
    %s135 = sphi 0, %s134
    %s149 = sphi 0, %s135
    %s153 = sphi 0, %s153
    %s155 = sphi 0, %s153
    %s156 = sphi 0, %s155
    %s170 = sphi 0, %s156
    %s180 = sphi 0, %s182
    %s183 = sphi 0, %s180
    %s184 = sphi 0, %s183
    %s200 = sphi 0, %s184
  $region4: #{_lambda_.9} parent=0 // loop_header_branch
    %14 = sbr.rel (%p12) target = $region8
  $region5: #{_lambda_.9} parent=0 // loop_body
    %s16 = ssub.s32 %s11, 1
    %s17 = ssub.s32 %s11, 2
    %s27 = sadd.s32 1, %s20
    %p28 = scmp.ge.s32.totalorder %s27, 1
    %s29 = scalar_select %p28, 0, %s27
    %s30 = sadd.s32 1, %s19
    %s31 = scalar_select %p28, %s30, %s19
    %p32 = scmp.ge.s32.totalorder %s31, 2
    %s33 = scalar_select %p32, 0, %s31
    %s34 = sadd.s32 1, %s18
    %s35 = scalar_select %p32, %s34, %s18
    %p36 = scmp.ge.s32.totalorder %s35, 2
    %s37 = scalar_select %p36, 0, %s35
    %s38 = ssub.s32 %s18, %s37
    %s39 = ssub.s32 %s19, %s33
    %s40 = sor.u32 %s38, %s39
    %s41 = ssub.s32 %s20, %s29
    %s42 = sor.u32 %s40, %s41
    %p43 = scmp.eq.s32.totalorder %s42, 0
    %s45 = sadd.s32 %s44, 1
    %s46 = scalar_select %p43, %s44, %s45
    %p49 = pneg %p43
    %p50 = scmp.eq.s32.totalorder %s11, 3
    %p51 = por %p49, %p50
    %p52 = scmp.ne.s32.totalorder %s44, %s47
    %p53 = scmp.eq.s32.totalorder %s11, 0
    %p54 = por %p52, %p53
    %p55 = scmp.ne.s32.totalorder %s44, %s47
    %p56 = scmp.eq.s32.totalorder %s16, 3
    %p57 = por %p55, %p56
    %p58 = scmp.ne.s32.totalorder %s47, %s48
    %p59 = scmp.eq.s32.totalorder %s16, 0
    %p60 = por %p58, %p59
    %p61 = scmp.ne.s32.totalorder %s47, %s48
    %p62 = scmp.eq.s32.totalorder %s17, 3
    %p63 = por %p61, %p62
    %p65 = scmp.ne.s32.totalorder %s48, %s64
    %p66 = scmp.eq.s32.totalorder %s17, 0
    %p67 = por %p65, %p66
    %s68 = sadd.s32 %s19, 1
    %s69 = sadd.s32 %s33, 1
    %s70 = ssub.s32 %s18, %s37
    %s71 = ssub.s32 %s68, %s69
    %s72 = sor.u32 %s70, %s71
    %s73 = ssub.s32 %s20, %s29
    %s74 = sor.u32 %s72, %s73
    %p75 = scmp.eq.s32.totalorder %s74, 0
    %s77 = sadd.s32 %s76, 1
    %s78 = scalar_select %p75, %s76, %s77
    %p81 = pneg %p75
    %p82 = scmp.eq.s32.totalorder %s11, 3
    %p83 = por %p81, %p82
    %p84 = scmp.ne.s32.totalorder %s76, %s79
    %p85 = scmp.eq.s32.totalorder %s11, 0
    %p86 = por %p84, %p85
    %p87 = scmp.ne.s32.totalorder %s76, %s79
    %p88 = scmp.eq.s32.totalorder %s16, 3
    %p89 = por %p87, %p88
    %p90 = scmp.ne.s32.totalorder %s79, %s80
    %p91 = scmp.eq.s32.totalorder %s16, 0
    %p92 = por %p90, %p91
    %p93 = scmp.ne.s32.totalorder %s79, %s80
    %p94 = scmp.eq.s32.totalorder %s17, 3
    %p95 = por %p93, %p94
    %p97 = scmp.ne.s32.totalorder %s80, %s96
    %p98 = scmp.eq.s32.totalorder %s17, 0
    %p99 = por %p97, %p98
    %s100 = sadd.s32 %s19, 2
    %s101 = sadd.s32 %s33, 2
    %s102 = ssub.s32 %s18, %s37
    %s103 = ssub.s32 %s100, %s101
    %s104 = sor.u32 %s102, %s103
    %s105 = ssub.s32 %s20, %s29
    %s106 = sor.u32 %s104, %s105
    %p107 = scmp.eq.s32.totalorder %s106, 0
    %s109 = sadd.s32 %s108, 1
    %s110 = scalar_select %p107, %s108, %s109
    %p113 = pneg %p107
    %p114 = scmp.eq.s32.totalorder %s11, 3
    %p115 = por %p113, %p114
    %p116 = scmp.ne.s32.totalorder %s108, %s111
    %p117 = scmp.eq.s32.totalorder %s11, 0
    %p118 = por %p116, %p117
    %p119 = scmp.ne.s32.totalorder %s108, %s111
    %p120 = scmp.eq.s32.totalorder %s16, 3
    %p121 = por %p119, %p120
    %p122 = scmp.ne.s32.totalorder %s111, %s112
    %p123 = scmp.eq.s32.totalorder %s16, 0
    %p124 = por %p122, %p123
    %p125 = scmp.ne.s32.totalorder %s111, %s112
    %p126 = scmp.eq.s32.totalorder %s17, 3
    %p127 = por %p125, %p126
    %p129 = scmp.ne.s32.totalorder %s112, %s128
    %p130 = scmp.eq.s32.totalorder %s17, 0
    %p131 = por %p129, %p130
    %s133 = sadd.s32 %s132, 1
    %p136 = scmp.eq.s32.totalorder %s11, 3
    %p137 = scmp.ne.s32.totalorder %s132, %s134
    %p138 = scmp.eq.s32.totalorder %s11, 0
    %p139 = por %p137, %p138
    %p140 = scmp.ne.s32.totalorder %s132, %s134
    %p141 = scmp.eq.s32.totalorder %s16, 3
    %p142 = por %p140, %p141
    %p143 = scmp.ne.s32.totalorder %s134, %s135
    %p144 = scmp.eq.s32.totalorder %s16, 0
    %p145 = por %p143, %p144
    %p146 = scmp.ne.s32.totalorder %s134, %s135
    %p147 = scmp.eq.s32.totalorder %s17, 3
    %p148 = por %p146, %p147
    %p150 = scmp.ne.s32.totalorder %s135, %s149
    %p151 = scmp.eq.s32.totalorder %s17, 0
    %p152 = por %p150, %p151
    %s154 = sadd.s32 %s153, 1
    %p157 = scmp.eq.s32.totalorder %s11, 3
    %p158 = scmp.ne.s32.totalorder %s153, %s155
    %p159 = scmp.eq.s32.totalorder %s11, 0
    %p160 = por %p158, %p159
    %p161 = scmp.ne.s32.totalorder %s153, %s155
    %p162 = scmp.eq.s32.totalorder %s16, 3
    %p163 = por %p161, %p162
    %p164 = scmp.ne.s32.totalorder %s155, %s156
    %p165 = scmp.eq.s32.totalorder %s16, 0
    %p166 = por %p164, %p165
    %p167 = scmp.ne.s32.totalorder %s155, %s156
    %p168 = scmp.eq.s32.totalorder %s17, 3
    %p169 = por %p167, %p168
    %p171 = scmp.ne.s32.totalorder %s156, %s170
    %p172 = scmp.eq.s32.totalorder %s17, 0
    %p173 = por %p171, %p172
    %s174 = ssub.s32 %s18, %s37
    %s175 = ssub.s32 %s19, %s33
    %s176 = sor.u32 %s174, %s175
    %s177 = ssub.s32 %s20, %s29
    %s178 = sor.u32 %s176, %s177
    %p179 = scmp.eq.s32.totalorder %s178, 0
    %s181 = sadd.s32 %s180, 1
    %s182 = scalar_select %p179, %s180, %s181
    %p185 = pneg %p179
    %p186 = scmp.eq.s32.totalorder %s11, 3
    %p187 = por %p185, %p186
    %p188 = scmp.ne.s32.totalorder %s180, %s183
    %p189 = scmp.eq.s32.totalorder %s11, 0
    %p190 = por %p188, %p189
    %p191 = scmp.ne.s32.totalorder %s180, %s183
    %p192 = scmp.eq.s32.totalorder %s16, 3
    %p193 = por %p191, %p192
    %p194 = scmp.ne.s32.totalorder %s183, %s184
    %p195 = scmp.eq.s32.totalorder %s16, 0
    %p196 = por %p194, %p195
    %p197 = scmp.ne.s32.totalorder %s183, %s184
    %p198 = scmp.eq.s32.totalorder %s17, 3
    %p199 = por %p197, %p198
    %p201 = scmp.ne.s32.totalorder %s184, %s200
    %p202 = scmp.eq.s32.totalorder %s17, 0
    %p203 = por %p201, %p202
    %p204 = scmp.le.s32.totalorder 1, %s11
    %p205 = scmp.lt.s32.totalorder %s11, 5
    %p206 = pnand %p204, %p205
    %p207 = pneg %p206
    // Predicated region
    $region9: #{_lambda_.9} parent=5 // pred_check
      _
    $region10: #{_lambda_.9} parent=5 // pred_check_branch
      %209 = sbr.rel (%p206) target = $region12
    $region11: #{_lambda_.9} parent=5 // pred_region
      %s210 = ssub.s32 %s11, 1
      // Predicated region
      $region13: #{_lambda_.9} parent=11 // pred_check
        %p211 = pneg %p145
      $region14: #{_lambda_.9} parent=11 // pred_check_branch
        %213 = sbr.rel (%p211) target = $region16
      $region15: #{_lambda_.9} parent=11 // pred_region
        _
      $region16: #{_lambda_.9} parent=11 // pred_fallthru
        _
      // Predicated region
      $region17: #{_lambda_.9} parent=11 // pred_check
        %p214 = pneg %p166
      $region18: #{_lambda_.9} parent=11 // pred_check_branch
        %216 = sbr.rel (%p214) target = $region20
      $region19: #{_lambda_.9} parent=11 // pred_region
        _
      $region20: #{_lambda_.9} parent=11 // pred_fallthru
        _
    $region12: #{_lambda_.9} parent=5 // pred_fallthru
      _
    %p217 = scmp.lt.s32.totalorder %s11, 4
    // Predicated region
    $region21: #{_lambda_.9} parent=5 // pred_check
      %p218 = pneg %p217
    $region22: #{_lambda_.9} parent=5 // pred_check_branch
      %220 = sbr.rel (%p218) target = $region24
    $region23: #{_lambda_.9} parent=5 // pred_region
      // Predicated region
      $region25: #{_lambda_.9} parent=23 // pred_check
        %p221 = pneg %p54
      $region26: #{_lambda_.9} parent=23 // pred_check_branch
        %223 = sbr.rel (%p221) target = $region28
      $region27: #{_lambda_.9} parent=23 // pred_region
        %s224 = smul.u32 2, %s20
        %p225 = scmp.lt.s32.totalorder %s18, 1
        %s226 = scalar_select %p225, %s18, 1
        %p227 = scmp.lt.s32.totalorder %s19, 3
        %s228 = scalar_select %p227, %s19, 3
        %p229 = scmp.lt.s32.totalorder %s224, 1
        %s230 = scalar_select %p229, %s224, 1
        %s231 = smul.addr %s228, 2
        %s232 = sadd.s32 %s230, %s231
        %s233 = smul.addr %s226, 8
        %s234 = sadd.s32 %s232, %s233
        %s235 = smul.addr %s234, 4
        %s236 = scalar_lea.vmem %s0, %s235
        %s237 = smul.u32 2, %s20
      $region28: #{_lambda_.9} parent=23 // pred_fallthru
        _
      // Predicated region
      $region29: #{_lambda_.9} parent=23 // pred_check
        %p238 = pneg %p86
      $region30: #{_lambda_.9} parent=23 // pred_check_branch
        %240 = sbr.rel (%p238) target = $region32
      $region31: #{_lambda_.9} parent=23 // pred_region
        %s241 = sadd.s32 %s19, 1
        %s242 = smul.u32 2, %s20
        %p243 = scmp.lt.s32.totalorder %s18, 1
        %s244 = scalar_select %p243, %s18, 1
        %p245 = scmp.lt.s32.totalorder %s241, 3
        %s246 = scalar_select %p245, %s241, 3
        %p247 = scmp.lt.s32.totalorder %s242, 1
        %s248 = scalar_select %p247, %s242, 1
        %s249 = smul.addr %s246, 2
        %s250 = sadd.s32 %s248, %s249
        %s251 = smul.addr %s244, 8
        %s252 = sadd.s32 %s250, %s251
        %s253 = smul.addr %s252, 4
        %s254 = scalar_lea.vmem %s1, %s253
        %s255 = sadd.s32 %s19, 1
        %s256 = smul.u32 2, %s20
      $region32: #{_lambda_.9} parent=23 // pred_fallthru
        _
      // Predicated region
      $region33: #{_lambda_.9} parent=23 // pred_check
        %p257 = pneg %p118
      $region34: #{_lambda_.9} parent=23 // pred_check_branch
        %259 = sbr.rel (%p257) target = $region36
      $region35: #{_lambda_.9} parent=23 // pred_region
        %s260 = sadd.s32 %s19, 2
        %s261 = smul.u32 2, %s20
        %p262 = scmp.lt.s32.totalorder %s18, 1
        %s263 = scalar_select %p262, %s18, 1
        %p264 = scmp.lt.s32.totalorder %s260, 3
        %s265 = scalar_select %p264, %s260, 3
        %p266 = scmp.lt.s32.totalorder %s261, 1
        %s267 = scalar_select %p266, %s261, 1
        %s268 = smul.addr %s265, 2
        %s269 = sadd.s32 %s267, %s268
        %s270 = smul.addr %s263, 8
        %s271 = sadd.s32 %s269, %s270
        %s272 = smul.addr %s271, 4
        %s273 = scalar_lea.vmem %s2, %s272
        %s274 = sadd.s32 %s19, 2
        %s275 = smul.u32 2, %s20
      $region36: #{_lambda_.9} parent=23 // pred_fallthru
        _
    $region24: #{_lambda_.9} parent=5 // pred_fallthru
      _
    %p276 = scmp.le.s32.totalorder 1, %s11
    %p277 = scmp.lt.s32.totalorder %s11, 5
    %p278 = pnand %p276, %p277
    %p279 = pneg %p278
    // Predicated region
    $region37: #{_lambda_.9} parent=5 // pred_check
      _
    $region38: #{_lambda_.9} parent=5 // pred_check_branch
      %281 = sbr.rel (%p278) target = $region40
    $region39: #{_lambda_.9} parent=5 // pred_region
      %s282 = ssub.s32 %s11, 1
      %s283 = smul.u32 2, %s23
      %p284 = scmp.lt.s32.totalorder %s21, 1
      %s285 = scalar_select %p284, %s21, 1
      %p286 = scmp.lt.s32.totalorder %s22, 3
      %s287 = scalar_select %p286, %s22, 3
      %p288 = scmp.lt.s32.totalorder %s283, 1
      %s289 = scalar_select %p288, %s283, 1
      %s290 = smul.addr %s287, 2
      %s291 = sadd.s32 %s289, %s290
      %s292 = smul.addr %s285, 8
      %s293 = sadd.s32 %s291, %s292
      %s294 = smul.addr %s293, 4
      %s295 = scalar_lea.vmem %s0, %s294
      %p296 = pneg %p60
      %p297 = pneg %p57
      %s298 = sadd.s32 %s22, 1
      %s299 = smul.u32 2, %s23
      %p300 = scmp.lt.s32.totalorder %s21, 1
      %s301 = scalar_select %p300, %s21, 1
      %p302 = scmp.lt.s32.totalorder %s298, 3
      %s303 = scalar_select %p302, %s298, 3
      %p304 = scmp.lt.s32.totalorder %s299, 1
      %s305 = scalar_select %p304, %s299, 1
      %s306 = smul.addr %s303, 2
      %s307 = sadd.s32 %s305, %s306
      %s308 = smul.addr %s301, 8
      %s309 = sadd.s32 %s307, %s308
      %s310 = smul.addr %s309, 4
      %s311 = scalar_lea.vmem %s1, %s310
      %p312 = pneg %p92
      %p313 = pneg %p89
      %s314 = sadd.s32 %s22, 2
      %s315 = smul.u32 2, %s23
      %p316 = scmp.lt.s32.totalorder %s21, 1
      %s317 = scalar_select %p316, %s21, 1
      %p318 = scmp.lt.s32.totalorder %s314, 3
      %s319 = scalar_select %p318, %s314, 3
      %p320 = scmp.lt.s32.totalorder %s315, 1
      %s321 = scalar_select %p320, %s315, 1
      %s322 = smul.addr %s319, 2
      %s323 = sadd.s32 %s321, %s322
      %s324 = smul.addr %s317, 8
      %s325 = sadd.s32 %s323, %s324
      %s326 = smul.addr %s325, 4
      %s327 = scalar_lea.vmem %s2, %s326
      %p328 = pneg %p124
      %p329 = pneg %p121
      %p330 = pneg %p145
      %p331 = pneg %p142
      %p332 = pneg %p166
      %p333 = pneg %p163
      %p334 = pneg %p196
      %p335 = pneg %p193
      %s336 = smul.u32 2, %s23
      %p337 = scmp.lt.s32.totalorder %s21, 1
      %s338 = scalar_select %p337, %s21, 1
      %p339 = scmp.lt.s32.totalorder %s22, 1
      %s340 = scalar_select %p339, %s22, 1
      %p341 = scmp.lt.s32.totalorder %s336, 1
      %s342 = scalar_select %p341, %s336, 1
      %s343 = smul.addr %s340, 2
      %s344 = sadd.s32 %s342, %s343
      %s345 = smul.addr %s338, 4
      %s346 = sadd.s32 %s344, %s345
      %s347 = smul.addr %s346, 4
      %s348 = scalar_lea.vmem %s5, %s347
      %s349 = smul.u32 2, %s23
      %p350 = scmp.lt.s32.totalorder %s21, 1
      %s351 = scalar_select %p350, %s21, 1
      %p352 = scmp.lt.s32.totalorder %s22, 3
      %s353 = scalar_select %p352, %s22, 3
      %p354 = scmp.lt.s32.totalorder %s349, 1
      %s355 = scalar_select %p354, %s349, 1
      %s356 = smul.addr %s353, 2
      %s357 = sadd.s32 %s355, %s356
      %s358 = smul.addr %s351, 8
      %s359 = sadd.s32 %s357, %s358
      %s360 = smul.addr %s359, 4
      %s361 = scalar_lea.vmem %s0, %s360
      %s362 = smul.u32 2, %s23
      %s363 = sadd.s32 %s22, 1
      %s364 = smul.u32 2, %s23
      %p365 = scmp.lt.s32.totalorder %s21, 1
      %s366 = scalar_select %p365, %s21, 1
      %p367 = scmp.lt.s32.totalorder %s363, 3
      %s368 = scalar_select %p367, %s363, 3
      %p369 = scmp.lt.s32.totalorder %s364, 1
      %s370 = scalar_select %p369, %s364, 1
      %s371 = smul.addr %s368, 2
      %s372 = sadd.s32 %s370, %s371
      %s373 = smul.addr %s366, 8
      %s374 = sadd.s32 %s372, %s373
      %s375 = smul.addr %s374, 4
      %s376 = scalar_lea.vmem %s1, %s375
      %s377 = sadd.s32 %s22, 1
      %s378 = smul.u32 2, %s23
      %s379 = sadd.s32 %s22, 2
      %s380 = smul.u32 2, %s23
      %p381 = scmp.lt.s32.totalorder %s21, 1
      %s382 = scalar_select %p381, %s21, 1
      %p383 = scmp.lt.s32.totalorder %s379, 3
      %s384 = scalar_select %p383, %s379, 3
      %p385 = scmp.lt.s32.totalorder %s380, 1
      %s386 = scalar_select %p385, %s380, 1
      %s387 = smul.addr %s384, 2
      %s388 = sadd.s32 %s386, %s387
      %s389 = smul.addr %s382, 8
      %s390 = sadd.s32 %s388, %s389
      %s391 = smul.addr %s390, 4
      %s392 = scalar_lea.vmem %s2, %s391
      %s393 = sadd.s32 %s22, 2
      %s394 = smul.u32 2, %s23
      %s395 = smul.u32 2, %s23
      %p396 = scmp.lt.s32.totalorder %s21, 1
      %s397 = scalar_select %p396, %s21, 1
      %p398 = scmp.lt.s32.totalorder %s22, 1
      %s399 = scalar_select %p398, %s22, 1
      %p400 = scmp.lt.s32.totalorder %s395, 1
      %s401 = scalar_select %p400, %s395, 1
      %s402 = smul.addr %s399, 2
      %s403 = sadd.s32 %s401, %s402
      %s404 = smul.addr %s397, 4
      %s405 = sadd.s32 %s403, %s404
      %s406 = smul.addr %s405, 4
      %s407 = scalar_lea.vmem %s5, %s406
      %s408 = smul.u32 2, %s23
      %v410 = vld [vmem:[%s361] sm:$0xf]
      %v411 = vld [vmem:[%s361 + $0x4] sm:$0xf]
      %v412 = vld [vmem:[%s3] sm:$0xf]
      %v413 = vld [vmem:[%s3 + $0x4] sm:$0xf]
      %v414 = vld [vmem:[%s3 + $0x8] sm:$0xf]
      %v415 = vld [vmem:[%s3 + $0xc] sm:$0xf]
      %v416 = vld [vmem:[%s3 + $0x10] sm:$0xf]
      %v417 = vld [vmem:[%s3 + $0x14] sm:$0xf]
      %v418 = vld [vmem:[%s3 + $0x18] sm:$0xf]
      %v419 = vld [vmem:[%s3 + $0x1c] sm:$0xf]
      %v420 = vld [vmem:[%s3 + $0x20] sm:$0xf]
      %v421 = vld [vmem:[%s376] sm:$0xf]
      %v422 = vld [vmem:[%s376 + $0x4] sm:$0xf]
      %s423 = scalar_lea.vmem %s3, 36
      %v424 = vld [vmem:[%s423] sm:$0xf]
      %v425 = vld [vmem:[%s423 + $0x4] sm:$0xf]
      %v426 = vld [vmem:[%s423 + $0x8] sm:$0xf]
      %v427 = vld [vmem:[%s423 + $0xc] sm:$0xf]
      %v428 = vld [vmem:[%s423 + $0x10] sm:$0xf]
      %v429 = vld [vmem:[%s423 + $0x14] sm:$0xf]
      %v430 = vld [vmem:[%s423 + $0x18] sm:$0xf]
      %v431 = vld [vmem:[%s423 + $0x1c] sm:$0xf]
      %v432 = vld [vmem:[%s423 + $0x20] sm:$0xf]
      %v435 = vunpack.c.l.b16 %v421
      %v436 = vunpack.c.l.b16 %v422
      %v437 = vpack.c.b16 %v436, %v435
      %v447 = vunpack.c.l.b16 %v424
      %v448 = vunpack.c.l.b16 %v425
      %v449 = vunpack.c.l.b16 %v426
      %v450 = vunpack.c.l.b16 %v427
      %v451 = vunpack.c.l.b16 %v428
      %v452 = vunpack.c.l.b16 %v429
      %v453 = vunpack.c.l.b16 %v430
      %v454 = vunpack.c.l.b16 %v431
      %v455 = vunpack.c.l.b16 %v432
      %v456 = vpack.c.b16 %v448, %v447
      %v457 = vpack.c.b16 %v450, %v449
      %v458 = vpack.c.b16 %v452, %v451
      %v459 = vpack.c.b16 %v454, %v453
      %v460 = vpack.c.b16 %v455, %v455
      %vm465 = vcmask 588800
      %v467 = vsel %vm465, %v437, 0
      %vm469 = vcmask 1043456
      %v471 = vsel %vm469, %v460, 0
      %473 = vmatprep.subr.bf16.mxu0 0
      %474 = vmatpush1.bf16.msra.mxu0 %v456
      %475 = vmatprep.subr.bf16.mxu0 0
      %476 = vmatpush1.bf16.msra.mxu0 %v457
      %477 = vmatprep.subr.bf16.mxu0 0
      %478 = vmatpush1.bf16.msra.mxu0 %v458
      %479 = vmatprep.subr.bf16.mxu0 0
      %480 = vmatpush1.bf16.msra.mxu0 %v459
      %481 = vmatprep.subr.bf16.mxu0 0
      %482 = vmatpush1.bf16.msra.mxu0 %v471
      %483 = vmatprep.subr.bf16.mxu0 0
      %484 = vmatpush1.bf16.msra.mxu0 0
      %485 = vmatprep.subr.bf16.mxu0 0
      %486 = vmatpush1.bf16.msra.mxu0 0
      %487 = vmatprep.subr.bf16.mxu0 0
      %488 = vmatpush1.bf16.msra.mxu0 0
      %489 = vmatprep.subr.bf16.mxu0 0
      %490 = vmatpush1.bf16.msra.mxu0 0
      %491 = vmatprep.subr.bf16.mxu0 0
      %492 = vmatpush1.bf16.msra.mxu0 0
      %493 = vmatprep.subr.bf16.mxu0 0
      %494 = vmatpush1.bf16.msra.mxu0 0
      %495 = vmatprep.subr.bf16.mxu0 0
      %496 = vmatpush1.bf16.msra.mxu0 0
      %497 = vmatprep.subr.bf16.mxu0 0
      %498 = vmatpush1.bf16.msra.mxu0 0
      %499 = vmatprep.subr.bf16.mxu0 0
      %500 = vmatpush1.bf16.msra.mxu0 0
      %501 = vmatprep.subr.bf16.mxu0 0
      %502 = vmatpush1.bf16.msra.mxu0 0
      %503 = vmatprep.subr.bf16.mxu0 0
      %504 = vmatpush1.bf16.msra.mxu0 0
      %505 = vmatprep.mubr.bf16.mxu0 0
      %506 = vmatmul.mubr.bf16.gmra.mrb[0].mxu0 %v467
      %v507 = vpop.f32.mrb[0].mxu0
      %v508 = vadd.f32 0.0, %v507
      %v509 = vpop.f32.mrb[0].mxu0
      %v510 = vpop.f32.mrb[0].mxu0
      %v511 = vadd.f32 0.0, %v510
      %v512 = vpop.f32.mrb[0].mxu0
      %513 = vdwg.mxu0
      %v516 = vunpack.c.l.b16 %v410
      %v517 = vunpack.c.l.b16 %v411
      %v518 = vpack.c.b16 %v517, %v516
      %v528 = vunpack.c.l.b16 %v412
      %v529 = vunpack.c.l.b16 %v413
      %v530 = vunpack.c.l.b16 %v414
      %v531 = vunpack.c.l.b16 %v415
      %v532 = vunpack.c.l.b16 %v416
      %v533 = vunpack.c.l.b16 %v417
      %v534 = vunpack.c.l.b16 %v418
      %v535 = vunpack.c.l.b16 %v419
      %v536 = vunpack.c.l.b16 %v420
      %v537 = vpack.c.b16 %v529, %v528
      %v538 = vpack.c.b16 %v531, %v530
      %v539 = vpack.c.b16 %v533, %v532
      %v540 = vpack.c.b16 %v535, %v534
      %v541 = vpack.c.b16 %v536, %v536
      %v547 = vsel %vm465, %v518, 0
      %v550 = vsel %vm469, %v541, 0
      %552 = vmatprep.subr.bf16.mxu0 0
      %553 = vmatpush1.bf16.msra.mxu0 %v537
      %554 = vmatprep.subr.bf16.mxu0 0
      %555 = vmatpush1.bf16.msra.mxu0 %v538
      %556 = vmatprep.subr.bf16.mxu0 0
      %557 = vmatpush1.bf16.msra.mxu0 %v539
      %558 = vmatprep.subr.bf16.mxu0 0
      %559 = vmatpush1.bf16.msra.mxu0 %v540
      %560 = vmatprep.subr.bf16.mxu0 0
      %561 = vmatpush1.bf16.msra.mxu0 %v550
      %562 = vmatprep.subr.bf16.mxu0 0
      %563 = vmatpush1.bf16.msra.mxu0 0
      %564 = vmatprep.subr.bf16.mxu0 0
      %565 = vmatpush1.bf16.msra.mxu0 0
      %566 = vmatprep.subr.bf16.mxu0 0
      %567 = vmatpush1.bf16.msra.mxu0 0
      %568 = vmatprep.subr.bf16.mxu0 0
      %569 = vmatpush1.bf16.msra.mxu0 0
      %570 = vmatprep.subr.bf16.mxu0 0
      %571 = vmatpush1.bf16.msra.mxu0 0
      %572 = vmatprep.subr.bf16.mxu0 0
      %573 = vmatpush1.bf16.msra.mxu0 0
      %574 = vmatprep.subr.bf16.mxu0 0
      %575 = vmatpush1.bf16.msra.mxu0 0
      %576 = vmatprep.subr.bf16.mxu0 0
      %577 = vmatpush1.bf16.msra.mxu0 0
      %578 = vmatprep.subr.bf16.mxu0 0
      %579 = vmatpush1.bf16.msra.mxu0 0
      %580 = vmatprep.subr.bf16.mxu0 0
      %581 = vmatpush1.bf16.msra.mxu0 0
      %582 = vmatprep.subr.bf16.mxu0 0
      %583 = vmatpush1.bf16.msra.mxu0 0
      %584 = vmatprep.mubr.bf16.mxu0 0
      %585 = vmatmul.mubr.bf16.gmra.mrb[0].mxu0 %v547
      %v586 = vpop.f32.mrb[0].mxu0
      %v587 = vadd.f32 %v508, %v586
      %v588 = vpop.f32.mrb[0].mxu0
      %v589 = vpop.f32.mrb[0].mxu0
      %v590 = vadd.f32 %v511, %v589
      %v591 = vpop.f32.mrb[0].mxu0
      %592 = vdwg.mxu0
      %v593 = vld [vmem:[%s392] sm:$0xf]
      %v594 = vld [vmem:[%s392 + $0x4] sm:$0xf]
      %s595 = scalar_lea.vmem %s3, 72
      %v596 = vld [vmem:[%s595] sm:$0xf]
      %v597 = vld [vmem:[%s595 + $0x4] sm:$0xf]
      %v598 = vld [vmem:[%s595 + $0x8] sm:$0xf]
      %v599 = vld [vmem:[%s595 + $0xc] sm:$0xf]
      %v600 = vld [vmem:[%s595 + $0x10] sm:$0xf]
      %v601 = vld [vmem:[%s595 + $0x14] sm:$0xf]
      %v602 = vld [vmem:[%s595 + $0x18] sm:$0xf]
      %v603 = vld [vmem:[%s595 + $0x1c] sm:$0xf]
      %v604 = vld [vmem:[%s595 + $0x20] sm:$0xf]
      %v607 = vunpack.c.l.b16 %v593
      %v608 = vunpack.c.l.b16 %v594
      %v609 = vpack.c.b16 %v608, %v607
      %v619 = vunpack.c.l.b16 %v596
      %v620 = vunpack.c.l.b16 %v597
      %v621 = vunpack.c.l.b16 %v598
      %v622 = vunpack.c.l.b16 %v599
      %v623 = vunpack.c.l.b16 %v600
      %v624 = vunpack.c.l.b16 %v601
      %v625 = vunpack.c.l.b16 %v602
      %v626 = vunpack.c.l.b16 %v603
      %v627 = vunpack.c.l.b16 %v604
      %v628 = vpack.c.b16 %v620, %v619
      %v629 = vpack.c.b16 %v622, %v621
      %v630 = vpack.c.b16 %v624, %v623
      %v631 = vpack.c.b16 %v626, %v625
      %v632 = vpack.c.b16 %v627, %v627
      %v638 = vsel %vm465, %v609, 0
      %v641 = vsel %vm469, %v632, 0
      %643 = vmatprep.subr.bf16.mxu0 0
      %644 = vmatpush1.bf16.msra.mxu0 %v628
      %645 = vmatprep.subr.bf16.mxu0 0
      %646 = vmatpush1.bf16.msra.mxu0 %v629
      %647 = vmatprep.subr.bf16.mxu0 0
      %648 = vmatpush1.bf16.msra.mxu0 %v630
      %649 = vmatprep.subr.bf16.mxu0 0
      %650 = vmatpush1.bf16.msra.mxu0 %v631
      %651 = vmatprep.subr.bf16.mxu0 0
      %652 = vmatpush1.bf16.msra.mxu0 %v641
      %653 = vmatprep.subr.bf16.mxu0 0
      %654 = vmatpush1.bf16.msra.mxu0 0
      %655 = vmatprep.subr.bf16.mxu0 0
      %656 = vmatpush1.bf16.msra.mxu0 0
      %657 = vmatprep.subr.bf16.mxu0 0
      %658 = vmatpush1.bf16.msra.mxu0 0
      %659 = vmatprep.subr.bf16.mxu0 0
      %660 = vmatpush1.bf16.msra.mxu0 0
      %661 = vmatprep.subr.bf16.mxu0 0
      %662 = vmatpush1.bf16.msra.mxu0 0
      %663 = vmatprep.subr.bf16.mxu0 0
      %664 = vmatpush1.bf16.msra.mxu0 0
      %665 = vmatprep.subr.bf16.mxu0 0
      %666 = vmatpush1.bf16.msra.mxu0 0
      %667 = vmatprep.subr.bf16.mxu0 0
      %668 = vmatpush1.bf16.msra.mxu0 0
      %669 = vmatprep.subr.bf16.mxu0 0
      %670 = vmatpush1.bf16.msra.mxu0 0
      %671 = vmatprep.subr.bf16.mxu0 0
      %672 = vmatpush1.bf16.msra.mxu0 0
      %673 = vmatprep.subr.bf16.mxu0 0
      %674 = vmatpush1.bf16.msra.mxu0 0
      %675 = vmatprep.mubr.bf16.mxu0 0
      %676 = vmatmul.mubr.bf16.gmra.mrb[0].mxu0 %v638
      %v677 = vpop.f32.mrb[0].mxu0
      %v678 = vadd.f32 0.0, %v677
      %v679 = vpop.f32.mrb[0].mxu0
      %v680 = vpop.f32.mrb[0].mxu0
      %v681 = vadd.f32 0.0, %v680
      %v682 = vpop.f32.mrb[0].mxu0
      %683 = vdwg.mxu0
      %v684 = vadd.f32 %v587, %v678
      %v685 = vadd.f32 %v590, %v681
      %v686 = vld [vmem:[%s4] sm:$0x1]
      %v688 = vlaneseq
      %v689 = vshrl.u32 %v688, 7
      %v690 = vsub.s32 0, %v689
      %v691 = vrot.slane %v686, %v690
      %v693 = vadd.f32 %v684, %v691
      %v694 = vadd.f32 %v685, %v691
      %v695 = vmax.f32 %v693, 0.0
      %v696 = vmax.f32 %v694, 0.0
      %v697 = vpack.c.bf16 %v696, %v695
      %v699 = vunpack.c.l.b16 %v697
      %v700 = vunpack.c.h.b16 %v697
      %v701 = vpack.c.b16 %v699, %v699
      %v702 = vpack.c.b16 %v700, %v700
      %vm705 = vcmask 60416
      %706 = vst.msk [vmem:[%s407] sm:$0xf] %vm705, %v701
      %707 = vst.msk [vmem:[%s407 + $0x4] sm:$0xf] %vm705, %v702
      %s708 = smul.u32 2, %s23
      %p709 = scmp.lt.s32.totalorder %s21, 1
      %s710 = scalar_select %p709, %s21, 1
      %p711 = scmp.lt.s32.totalorder %s22, 1
      %s712 = scalar_select %p711, %s22, 1
      %p713 = scmp.lt.s32.totalorder %s708, 1
      %s714 = scalar_select %p713, %s708, 1
      %s715 = smul.addr %s712, 2
      %s716 = sadd.s32 %s714, %s715
      %s717 = smul.addr %s710, 4
      %s718 = sadd.s32 %s716, %s717
      %s719 = smul.addr %s718, 4
      %s720 = scalar_lea.vmem %s5, %s719
      // Predicated region
      $region41: #{_lambda_.9} parent=39 // pred_check
        %p721 = pneg %p193
      $region42: #{_lambda_.9} parent=39 // pred_check_branch
        %723 = sbr.rel (%p721) target = $region44
      $region43: #{_lambda_.9} parent=39 // pred_region
        %s724 = smul.u32 2, %s23
      $region44: #{_lambda_.9} parent=39 // pred_fallthru
        _
    $region40: #{_lambda_.9} parent=5 // pred_fallthru
      _
    %p725 = scmp.le.s32.totalorder 2, %s11
    // Predicated region
    $region45: #{_lambda_.9} parent=5 // pred_check
      %p726 = pneg %p725
    $region46: #{_lambda_.9} parent=5 // pred_check_branch
      %728 = sbr.rel (%p726) target = $region48
    $region47: #{_lambda_.9} parent=5 // pred_region
      %s729 = ssub.s32 %s11, 2
      // Predicated region
      $region49: #{_lambda_.9} parent=47 // pred_check
        %p730 = pneg %p199
      $region50: #{_lambda_.9} parent=47 // pred_check_branch
        %732 = sbr.rel (%p730) target = $region52
      $region51: #{_lambda_.9} parent=47 // pred_region
        %s733 = smul.u32 2, %s26
        %p734 = scmp.lt.s32.totalorder %s24, 1
        %s735 = scalar_select %p734, %s24, 1
        %p736 = scmp.lt.s32.totalorder %s25, 1
        %s737 = scalar_select %p736, %s25, 1
        %p738 = scmp.lt.s32.totalorder %s733, 1
        %s739 = scalar_select %p738, %s733, 1
        %s740 = smul.addr %s737, 2
        %s741 = sadd.s32 %s739, %s740
        %s742 = smul.addr %s735, 4
        %s743 = sadd.s32 %s741, %s742
        %s744 = smul.addr %s743, 4
        %s745 = scalar_lea.vmem %s5, %s744
      $region52: #{_lambda_.9} parent=47 // pred_fallthru
        _
    $region48: #{_lambda_.9} parent=5 // pred_fallthru
      _
  $region6: #{_lambda_.9} parent=0 // loop_footer
    %s15 = sadd.s32 1, %s11
  $region7: #{_lambda_.9} parent=0 // loop_footer_branch
    %10 = sbr.rel target = $region3
  $region8: #{_lambda_.9} parent=0 // loop_exit
    _

// kernel: tile.13
$region0: #{tile.13}
  #allocation0 [shape = 's32[1]{0}', space=sflag, size = 0x4, scoped, tag = 'scoped memory for tile.13']
  %s0 = inlined_call_operand.vmem [shape: f32[8], index: 0, kind: input, shape index: {}]
  %s1 = inlined_call_operand.vmem [shape: f32[8,8], index: 1, kind: output, shape index: {}]
  // Predicated region
  $region2: #{tile.13} parent=0 // pred_check
    _
  $region3: #{tile.13} parent=0 // pred_check_branch
    %3 = sbr.rel (0) target = $region5
  $region4: #{tile.13} parent=0 // pred_region
    _
  $region5: #{tile.13} parent=0 // pred_fallthru
    _
  %v4 = vld [vmem:[%s0] ss:$0 sm:$0xff]
  %5 = vst [vmem:[%s1] sm:$0xff] %v4

// kernel: tile.14
$region0: #{tile.14}
  %s0 = inlined_call_operand.vmem [shape: f32[8,8], index: 0, kind: input, shape index: {}]
  %s1 = inlined_call_operand.vmem [shape: f32[1,64], index: 1, kind: output, shape index: {}]
  $region1: #{tile.14} parent=0
    #allocation0 [shape = 'u8[4096]{0}', space=vmem, size = 0x1000, scoped, tag = 'scoped mem for output reshape']
    %v2 = vld [vmem:[%s0] sm:$0x1]
    %vm3 = vcmask 64512
    %4 = vst.msk [vmem:[#allocation0] sm:$0x1] %vm3, %v2
    %s5 = scalar_lea.vmem %s0, 7
    %v6 = vld [vmem:[%s5] sm:$0x1]
    %7 = vrot.lane.b32.xlu0 %v6, 56
    %v8 = vpop.permute.xlu0 %7
    %vm9 = vcmask 523712
    %10 = vst.msk [vmem:[#allocation0] sm:$0x1] %vm9, %v8
    %s11 = scalar_lea.vmem %s0, 6
    %v12 = vld [vmem:[%s11] sm:$0x1]
    %13 = vrot.lane.b32.xlu0 %v12, 48
    %v14 = vpop.permute.xlu0 %13
    %vm15 = vcmask 458112
    %16 = vst.msk [vmem:[#allocation0] sm:$0x1] %vm15, %v14
    %s17 = scalar_lea.vmem %s0, 5
    %v18 = vld [vmem:[%s17] sm:$0x1]
    %19 = vrot.lane.b32.xlu0 %v18, 40
    %v20 = vpop.permute.xlu0 %19
    %vm21 = vcmask 392512
    %22 = vst.msk [vmem:[#allocation0] sm:$0x1] %vm21, %v20
    %s23 = scalar_lea.vmem %s0, 4
    %v24 = vld [vmem:[%s23] sm:$0x1]
    %25 = vrot.lane.b32.xlu0 %v24, 32
    %v26 = vpop.permute.xlu0 %25
    %vm27 = vcmask 326912
    %28 = vst.msk [vmem:[#allocation0] sm:$0x1] %vm27, %v26
    %s29 = scalar_lea.vmem %s0, 3
    %v30 = vld [vmem:[%s29] sm:$0x1]
    %31 = vrot.lane.b32.xlu0 %v30, 24
    %v32 = vpop.permute.xlu0 %31
    %vm33 = vcmask 261312
    %34 = vst.msk [vmem:[#allocation0] sm:$0x1] %vm33, %v32
    %s35 = scalar_lea.vmem %s0, 2
    %v36 = vld [vmem:[%s35] sm:$0x1]
    %37 = vrot.lane.b32.xlu0 %v36, 16
    %v38 = vpop.permute.xlu0 %37
    %vm39 = vcmask 195712
    %40 = vst.msk [vmem:[#allocation0] sm:$0x1] %vm39, %v38
    %s41 = scalar_lea.vmem %s0, 1
    %v42 = vld [vmem:[%s41] sm:$0x1]
    %43 = vrot.lane.b32.xlu0 %v42, 8
    %v44 = vpop.permute.xlu0 %43
    %vm45 = vcmask 130112
    %46 = vst.msk [vmem:[#allocation0] sm:$0x1] %vm45, %v44
    %s48 = sshllo.u32 0, 1
    %v50 = vld [vmem:[#allocation0] sm:%s48]
    %s51 = sshllo.u32 0, 1
    %52 = vst [vmem:[%s1] sm:%s51] %v50

// kernel: _lambda_.10
$region0: #{_lambda_.10}
  #allocation0 [shape = 'u32[]', space=smem, size = 0x4, offset = 0x4, fixed_abs, tag = 'smem constant byte address 0x4 - core index']
  #allocation1 [shape = 'u32[144,128]{1,0:T(1,128)}', space=vmem, size = 0x12000, scoped, tag = 'internal scratch']
  %s0 = inlined_call_operand.vmem [shape: bf16[2,3,16,32], index: 0, kind: input, shape index: {}, may-alias: {0,1}]
  %s1 = inlined_call_operand.vmem [shape: bf16[2,3,16,32], index: 1, kind: input, shape index: {}, may-alias: {0,1}]
  %s2 = inlined_call_operand.vmem [shape: bf16[2,32,64], index: 2, kind: input, shape index: {}]
  %s3 = inlined_call_operand.vmem [shape: f32[1,64], index: 3, kind: input, shape index: {}]
  %s4 = inlined_call_operand.vmem [shape: bf16[2,2,16,64], index: 4, kind: input, shape index: {}]
  %s5 = inlined_call_operand.vmem [shape: bf16[2,2,16,64], index: 5, kind: output, shape index: {}]
  %s6 = sld [smem:[#allocation0]]
  $region53: #{_lambda_.10} parent=0
    _
  %s8 = ssub.s32 1, %s6
  %s9 = scalar_select 0, %s8, %s6
  loop: start=0, step=1, limit=6
  $region2: #{_lambda_.10} parent=0 // loop_pre_header
    _
  $region3: #{_lambda_.10} parent=0 // loop_header
    %s11 = sphi 0, %s15
    %p12 = scmp.ge.s32.totalorder %s11, 6
    %s18 = sphi 0, %s37
    %s19 = sphi 0, %s33
    %s20 = sphi 0, %s29
    %s21 = sphi 0, %s18
    %s22 = sphi 0, %s19
    %s23 = sphi 0, %s20
    %s24 = sphi 0, %s21
    %s25 = sphi 0, %s22
    %s26 = sphi 0, %s23
    %s44 = sphi 0, %s46
    %s47 = sphi 0, %s44
    %s48 = sphi 0, %s47
    %s64 = sphi 0, %s48
    %s76 = sphi 0, %s78
    %s79 = sphi 0, %s76
    %s80 = sphi 0, %s79
    %s96 = sphi 0, %s80
    %s100 = sphi 0, %s100
    %s102 = sphi 0, %s100
    %s103 = sphi 0, %s102
    %s117 = sphi 0, %s103
    %s121 = sphi 0, %s121
    %s123 = sphi 0, %s121
    %s124 = sphi 0, %s123
    %s138 = sphi 0, %s124
    %s148 = sphi 0, %s150
    %s151 = sphi 0, %s148
    %s152 = sphi 0, %s151
    %s168 = sphi 0, %s152
    %s178 = sphi 0, %s180
    %s181 = sphi 0, %s178
    %s182 = sphi 0, %s181
    %s198 = sphi 0, %s182
  $region4: #{_lambda_.10} parent=0 // loop_header_branch
    %14 = sbr.rel (%p12) target = $region8
  $region5: #{_lambda_.10} parent=0 // loop_body
    %s16 = ssub.s32 %s11, 1
    %s17 = ssub.s32 %s11, 2
    %s27 = sadd.s32 1, %s20
    %p28 = scmp.ge.s32.totalorder %s27, 1
    %s29 = scalar_select %p28, 0, %s27
    %s30 = sadd.s32 1, %s19
    %s31 = scalar_select %p28, %s30, %s19
    %p32 = scmp.ge.s32.totalorder %s31, 2
    %s33 = scalar_select %p32, 0, %s31
    %s34 = sadd.s32 1, %s18
    %s35 = scalar_select %p32, %s34, %s18
    %p36 = scmp.ge.s32.totalorder %s35, 2
    %s37 = scalar_select %p36, 0, %s35
    %s38 = ssub.s32 %s18, %s37
    %s39 = ssub.s32 %s19, %s33
    %s40 = sor.u32 %s38, %s39
    %s41 = ssub.s32 %s20, %s29
    %s42 = sor.u32 %s40, %s41
    %p43 = scmp.eq.s32.totalorder %s42, 0
    %s45 = sadd.s32 %s44, 1
    %s46 = scalar_select %p43, %s44, %s45
    %p49 = pneg %p43
    %p50 = scmp.eq.s32.totalorder %s11, 3
    %p51 = por %p49, %p50
    %p52 = scmp.ne.s32.totalorder %s44, %s47
    %p53 = scmp.eq.s32.totalorder %s11, 0
    %p54 = por %p52, %p53
    %p55 = scmp.ne.s32.totalorder %s44, %s47
    %p56 = scmp.eq.s32.totalorder %s16, 3
    %p57 = por %p55, %p56
    %p58 = scmp.ne.s32.totalorder %s47, %s48
    %p59 = scmp.eq.s32.totalorder %s16, 0
    %p60 = por %p58, %p59
    %p61 = scmp.ne.s32.totalorder %s47, %s48
    %p62 = scmp.eq.s32.totalorder %s17, 3
    %p63 = por %p61, %p62
    %p65 = scmp.ne.s32.totalorder %s48, %s64
    %p66 = scmp.eq.s32.totalorder %s17, 0
    %p67 = por %p65, %p66
    %s68 = sadd.s32 %s19, 1
    %s69 = sadd.s32 %s33, 1
    %s70 = ssub.s32 %s18, %s37
    %s71 = ssub.s32 %s68, %s69
    %s72 = sor.u32 %s70, %s71
    %s73 = ssub.s32 %s20, %s29
    %s74 = sor.u32 %s72, %s73
    %p75 = scmp.eq.s32.totalorder %s74, 0
    %s77 = sadd.s32 %s76, 1
    %s78 = scalar_select %p75, %s76, %s77
    %p81 = pneg %p75
    %p82 = scmp.eq.s32.totalorder %s11, 3
    %p83 = por %p81, %p82
    %p84 = scmp.ne.s32.totalorder %s76, %s79
    %p85 = scmp.eq.s32.totalorder %s11, 0
    %p86 = por %p84, %p85
    %p87 = scmp.ne.s32.totalorder %s76, %s79
    %p88 = scmp.eq.s32.totalorder %s16, 3
    %p89 = por %p87, %p88
    %p90 = scmp.ne.s32.totalorder %s79, %s80
    %p91 = scmp.eq.s32.totalorder %s16, 0
    %p92 = por %p90, %p91
    %p93 = scmp.ne.s32.totalorder %s79, %s80
    %p94 = scmp.eq.s32.totalorder %s17, 3
    %p95 = por %p93, %p94
    %p97 = scmp.ne.s32.totalorder %s80, %s96
    %p98 = scmp.eq.s32.totalorder %s17, 0
    %p99 = por %p97, %p98
    %s101 = sadd.s32 %s100, 1
    %p104 = scmp.eq.s32.totalorder %s11, 3
    %p105 = scmp.ne.s32.totalorder %s100, %s102
    %p106 = scmp.eq.s32.totalorder %s11, 0
    %p107 = por %p105, %p106
    %p108 = scmp.ne.s32.totalorder %s100, %s102
    %p109 = scmp.eq.s32.totalorder %s16, 3
    %p110 = por %p108, %p109
    %p111 = scmp.ne.s32.totalorder %s102, %s103
    %p112 = scmp.eq.s32.totalorder %s16, 0
    %p113 = por %p111, %p112
    %p114 = scmp.ne.s32.totalorder %s102, %s103
    %p115 = scmp.eq.s32.totalorder %s17, 3
    %p116 = por %p114, %p115
    %p118 = scmp.ne.s32.totalorder %s103, %s117
    %p119 = scmp.eq.s32.totalorder %s17, 0
    %p120 = por %p118, %p119
    %s122 = sadd.s32 %s121, 1
    %p125 = scmp.eq.s32.totalorder %s11, 3
    %p126 = scmp.ne.s32.totalorder %s121, %s123
    %p127 = scmp.eq.s32.totalorder %s11, 0
    %p128 = por %p126, %p127
    %p129 = scmp.ne.s32.totalorder %s121, %s123
    %p130 = scmp.eq.s32.totalorder %s16, 3
    %p131 = por %p129, %p130
    %p132 = scmp.ne.s32.totalorder %s123, %s124
    %p133 = scmp.eq.s32.totalorder %s16, 0
    %p134 = por %p132, %p133
    %p135 = scmp.ne.s32.totalorder %s123, %s124
    %p136 = scmp.eq.s32.totalorder %s17, 3
    %p137 = por %p135, %p136
    %p139 = scmp.ne.s32.totalorder %s124, %s138
    %p140 = scmp.eq.s32.totalorder %s17, 0
    %p141 = por %p139, %p140
    %s142 = ssub.s32 %s18, %s37
    %s143 = ssub.s32 %s19, %s33
    %s144 = sor.u32 %s142, %s143
    %s145 = ssub.s32 %s20, %s29
    %s146 = sor.u32 %s144, %s145
    %p147 = scmp.eq.s32.totalorder %s146, 0
    %s149 = sadd.s32 %s148, 1
    %s150 = scalar_select %p147, %s148, %s149
    %p153 = pneg %p147
    %p154 = scmp.eq.s32.totalorder %s11, 3
    %p155 = por %p153, %p154
    %p156 = scmp.ne.s32.totalorder %s148, %s151
    %p157 = scmp.eq.s32.totalorder %s11, 0
    %p158 = por %p156, %p157
    %p159 = scmp.ne.s32.totalorder %s148, %s151
    %p160 = scmp.eq.s32.totalorder %s16, 3
    %p161 = por %p159, %p160
    %p162 = scmp.ne.s32.totalorder %s151, %s152
    %p163 = scmp.eq.s32.totalorder %s16, 0
    %p164 = por %p162, %p163
    %p165 = scmp.ne.s32.totalorder %s151, %s152
    %p166 = scmp.eq.s32.totalorder %s17, 3
    %p167 = por %p165, %p166
    %p169 = scmp.ne.s32.totalorder %s152, %s168
    %p170 = scmp.eq.s32.totalorder %s17, 0
    %p171 = por %p169, %p170
    %s172 = ssub.s32 %s18, %s37
    %s173 = ssub.s32 %s19, %s33
    %s174 = sor.u32 %s172, %s173
    %s175 = ssub.s32 %s20, %s29
    %s176 = sor.u32 %s174, %s175
    %p177 = scmp.eq.s32.totalorder %s176, 0
    %s179 = sadd.s32 %s178, 1
    %s180 = scalar_select %p177, %s178, %s179
    %p183 = pneg %p177
    %p184 = scmp.eq.s32.totalorder %s11, 3
    %p185 = por %p183, %p184
    %p186 = scmp.ne.s32.totalorder %s178, %s181
    %p187 = scmp.eq.s32.totalorder %s11, 0
    %p188 = por %p186, %p187
    %p189 = scmp.ne.s32.totalorder %s178, %s181
    %p190 = scmp.eq.s32.totalorder %s16, 3
    %p191 = por %p189, %p190
    %p192 = scmp.ne.s32.totalorder %s181, %s182
    %p193 = scmp.eq.s32.totalorder %s16, 0
    %p194 = por %p192, %p193
    %p195 = scmp.ne.s32.totalorder %s181, %s182
    %p196 = scmp.eq.s32.totalorder %s17, 3
    %p197 = por %p195, %p196
    %p199 = scmp.ne.s32.totalorder %s182, %s198
    %p200 = scmp.eq.s32.totalorder %s17, 0
    %p201 = por %p199, %p200
    %p202 = scmp.le.s32.totalorder 1, %s11
    %p203 = scmp.lt.s32.totalorder %s11, 5
    %p204 = pnand %p202, %p203
    %p205 = pneg %p204
    // Predicated region
    $region9: #{_lambda_.10} parent=5 // pred_check
      _
    $region10: #{_lambda_.10} parent=5 // pred_check_branch
      %207 = sbr.rel (%p204) target = $region12
    $region11: #{_lambda_.10} parent=5 // pred_region
      %s208 = ssub.s32 %s11, 1
      // Predicated region
      $region13: #{_lambda_.10} parent=11 // pred_check
        %p209 = pneg %p113
      $region14: #{_lambda_.10} parent=11 // pred_check_branch
        %211 = sbr.rel (%p209) target = $region16
      $region15: #{_lambda_.10} parent=11 // pred_region
        _
      $region16: #{_lambda_.10} parent=11 // pred_fallthru
        _
      // Predicated region
      $region17: #{_lambda_.10} parent=11 // pred_check
        %p212 = pneg %p134
      $region18: #{_lambda_.10} parent=11 // pred_check_branch
        %214 = sbr.rel (%p212) target = $region20
      $region19: #{_lambda_.10} parent=11 // pred_region
        _
      $region20: #{_lambda_.10} parent=11 // pred_fallthru
        _
    $region12: #{_lambda_.10} parent=5 // pred_fallthru
      _
    %p215 = scmp.lt.s32.totalorder %s11, 4
    // Predicated region
    $region21: #{_lambda_.10} parent=5 // pred_check
      %p216 = pneg %p215
    $region22: #{_lambda_.10} parent=5 // pred_check_branch
      %218 = sbr.rel (%p216) target = $region24
    $region23: #{_lambda_.10} parent=5 // pred_region
      // Predicated region
      $region25: #{_lambda_.10} parent=23 // pred_check
        %p219 = pneg %p54
      $region26: #{_lambda_.10} parent=23 // pred_check_branch
        %221 = sbr.rel (%p219) target = $region28
      $region27: #{_lambda_.10} parent=23 // pred_region
        %s222 = smul.u32 2, %s20
        %p223 = scmp.lt.s32.totalorder %s18, 1
        %s224 = scalar_select %p223, %s18, 1
        %p225 = scmp.lt.s32.totalorder %s19, 2
        %s226 = scalar_select %p225, %s19, 2
        %p227 = scmp.lt.s32.totalorder %s222, 1
        %s228 = scalar_select %p227, %s222, 1
        %s229 = smul.addr %s226, 2
        %s230 = sadd.s32 %s228, %s229
        %s231 = smul.addr %s224, 6
        %s232 = sadd.s32 %s230, %s231
        %s233 = smul.addr %s232, 4
        %s234 = scalar_lea.vmem %s0, %s233
        %s235 = smul.u32 2, %s20
      $region28: #{_lambda_.10} parent=23 // pred_fallthru
        _
      // Predicated region
      $region29: #{_lambda_.10} parent=23 // pred_check
        %p236 = pneg %p86
      $region30: #{_lambda_.10} parent=23 // pred_check_branch
        %238 = sbr.rel (%p236) target = $region32
      $region31: #{_lambda_.10} parent=23 // pred_region
        %s239 = sadd.s32 %s19, 1
        %s240 = smul.u32 2, %s20
        %p241 = scmp.lt.s32.totalorder %s18, 1
        %s242 = scalar_select %p241, %s18, 1
        %p243 = scmp.lt.s32.totalorder %s239, 2
        %s244 = scalar_select %p243, %s239, 2
        %p245 = scmp.lt.s32.totalorder %s240, 1
        %s246 = scalar_select %p245, %s240, 1
        %s247 = smul.addr %s244, 2
        %s248 = sadd.s32 %s246, %s247
        %s249 = smul.addr %s242, 6
        %s250 = sadd.s32 %s248, %s249
        %s251 = smul.addr %s250, 4
        %s252 = scalar_lea.vmem %s1, %s251
        %s253 = sadd.s32 %s19, 1
        %s254 = smul.u32 2, %s20
      $region32: #{_lambda_.10} parent=23 // pred_fallthru
        _
      // Predicated region
      $region33: #{_lambda_.10} parent=23 // pred_check
        %p255 = pneg %p158
      $region34: #{_lambda_.10} parent=23 // pred_check_branch
        %257 = sbr.rel (%p255) target = $region36
      $region35: #{_lambda_.10} parent=23 // pred_region
        %s258 = smul.u32 2, %s20
        %p259 = scmp.lt.s32.totalorder %s18, 1
        %s260 = scalar_select %p259, %s18, 1
        %p261 = scmp.lt.s32.totalorder %s19, 1
        %s262 = scalar_select %p261, %s19, 1
        %p263 = scmp.lt.s32.totalorder %s258, 1
        %s264 = scalar_select %p263, %s258, 1
        %s265 = smul.addr %s262, 2
        %s266 = sadd.s32 %s264, %s265
        %s267 = smul.addr %s260, 4
        %s268 = sadd.s32 %s266, %s267
        %s269 = smul.addr %s268, 4
        %s270 = scalar_lea.vmem %s4, %s269
        %s271 = smul.u32 2, %s20
      $region36: #{_lambda_.10} parent=23 // pred_fallthru
        _
    $region24: #{_lambda_.10} parent=5 // pred_fallthru
      _
    %p272 = scmp.le.s32.totalorder 1, %s11
    %p273 = scmp.lt.s32.totalorder %s11, 5
    %p274 = pnand %p272, %p273
    %p275 = pneg %p274
    // Predicated region
    $region37: #{_lambda_.10} parent=5 // pred_check
      _
    $region38: #{_lambda_.10} parent=5 // pred_check_branch
      %277 = sbr.rel (%p274) target = $region40
    $region39: #{_lambda_.10} parent=5 // pred_region
      %s278 = ssub.s32 %s11, 1
      %s279 = smul.u32 2, %s23
      %p280 = scmp.lt.s32.totalorder %s21, 1
      %s281 = scalar_select %p280, %s21, 1
      %p282 = scmp.lt.s32.totalorder %s22, 2
      %s283 = scalar_select %p282, %s22, 2
      %p284 = scmp.lt.s32.totalorder %s279, 1
      %s285 = scalar_select %p284, %s279, 1
      %s286 = smul.addr %s283, 2
      %s287 = sadd.s32 %s285, %s286
      %s288 = smul.addr %s281, 6
      %s289 = sadd.s32 %s287, %s288
      %s290 = smul.addr %s289, 4
      %s291 = scalar_lea.vmem %s0, %s290
      %p292 = pneg %p60
      %p293 = pneg %p57
      %s294 = sadd.s32 %s22, 1
      %s295 = smul.u32 2, %s23
      %p296 = scmp.lt.s32.totalorder %s21, 1
      %s297 = scalar_select %p296, %s21, 1
      %p298 = scmp.lt.s32.totalorder %s294, 2
      %s299 = scalar_select %p298, %s294, 2
      %p300 = scmp.lt.s32.totalorder %s295, 1
      %s301 = scalar_select %p300, %s295, 1
      %s302 = smul.addr %s299, 2
      %s303 = sadd.s32 %s301, %s302
      %s304 = smul.addr %s297, 6
      %s305 = sadd.s32 %s303, %s304
      %s306 = smul.addr %s305, 4
      %s307 = scalar_lea.vmem %s1, %s306
      %p308 = pneg %p92
      %p309 = pneg %p89
      %p310 = pneg %p113
      %p311 = pneg %p110
      %p312 = pneg %p134
      %p313 = pneg %p131
      %s314 = smul.u32 2, %s23
      %p315 = scmp.lt.s32.totalorder %s21, 1
      %s316 = scalar_select %p315, %s21, 1
      %p317 = scmp.lt.s32.totalorder %s22, 1
      %s318 = scalar_select %p317, %s22, 1
      %p319 = scmp.lt.s32.totalorder %s314, 1
      %s320 = scalar_select %p319, %s314, 1
      %s321 = smul.addr %s318, 2
      %s322 = sadd.s32 %s320, %s321
      %s323 = smul.addr %s316, 4
      %s324 = sadd.s32 %s322, %s323
      %s325 = smul.addr %s324, 4
      %s326 = scalar_lea.vmem %s4, %s325
      %p327 = pneg %p164
      %p328 = pneg %p161
      %p329 = pneg %p194
      %p330 = pneg %p191
      %s331 = smul.u32 2, %s23
      %p332 = scmp.lt.s32.totalorder %s21, 1
      %s333 = scalar_select %p332, %s21, 1
      %p334 = scmp.lt.s32.totalorder %s22, 1
      %s335 = scalar_select %p334, %s22, 1
      %p336 = scmp.lt.s32.totalorder %s331, 1
      %s337 = scalar_select %p336, %s331, 1
      %s338 = smul.addr %s335, 2
      %s339 = sadd.s32 %s337, %s338
      %s340 = smul.addr %s333, 4
      %s341 = sadd.s32 %s339, %s340
      %s342 = smul.addr %s341, 4
      %s343 = scalar_lea.vmem %s5, %s342
      %s344 = smul.u32 2, %s23
      %p345 = scmp.lt.s32.totalorder %s21, 1
      %s346 = scalar_select %p345, %s21, 1
      %p347 = scmp.lt.s32.totalorder %s22, 2
      %s348 = scalar_select %p347, %s22, 2
      %p349 = scmp.lt.s32.totalorder %s344, 1
      %s350 = scalar_select %p349, %s344, 1
      %s351 = smul.addr %s348, 2
      %s352 = sadd.s32 %s350, %s351
      %s353 = smul.addr %s346, 6
      %s354 = sadd.s32 %s352, %s353
      %s355 = smul.addr %s354, 4
      %s356 = scalar_lea.vmem %s0, %s355
      %s357 = smul.u32 2, %s23
      %s358 = sadd.s32 %s22, 1
      %s359 = smul.u32 2, %s23
      %p360 = scmp.lt.s32.totalorder %s21, 1
      %s361 = scalar_select %p360, %s21, 1
      %p362 = scmp.lt.s32.totalorder %s358, 2
      %s363 = scalar_select %p362, %s358, 2
      %p364 = scmp.lt.s32.totalorder %s359, 1
      %s365 = scalar_select %p364, %s359, 1
      %s366 = smul.addr %s363, 2
      %s367 = sadd.s32 %s365, %s366
      %s368 = smul.addr %s361, 6
      %s369 = sadd.s32 %s367, %s368
      %s370 = smul.addr %s369, 4
      %s371 = scalar_lea.vmem %s1, %s370
      %s372 = sadd.s32 %s22, 1
      %s373 = smul.u32 2, %s23
      %s374 = smul.u32 2, %s23
      %p375 = scmp.lt.s32.totalorder %s21, 1
      %s376 = scalar_select %p375, %s21, 1
      %p377 = scmp.lt.s32.totalorder %s22, 1
      %s378 = scalar_select %p377, %s22, 1
      %p379 = scmp.lt.s32.totalorder %s374, 1
      %s380 = scalar_select %p379, %s374, 1
      %s381 = smul.addr %s378, 2
      %s382 = sadd.s32 %s380, %s381
      %s383 = smul.addr %s376, 4
      %s384 = sadd.s32 %s382, %s383
      %s385 = smul.addr %s384, 4
      %s386 = scalar_lea.vmem %s4, %s385
      %s387 = smul.u32 2, %s23
      %s388 = smul.u32 2, %s23
      %p389 = scmp.lt.s32.totalorder %s21, 1
      %s390 = scalar_select %p389, %s21, 1
      %p391 = scmp.lt.s32.totalorder %s22, 1
      %s392 = scalar_select %p391, %s22, 1
      %p393 = scmp.lt.s32.totalorder %s388, 1
      %s394 = scalar_select %p393, %s388, 1
      %s395 = smul.addr %s392, 2
      %s396 = sadd.s32 %s394, %s395
      %s397 = smul.addr %s390, 4
      %s398 = sadd.s32 %s396, %s397
      %s399 = smul.addr %s398, 4
      %s400 = scalar_lea.vmem %s5, %s399
      %s401 = smul.u32 2, %s23
      %v403 = vld [vmem:[%s356] sm:$0xf]
      %v404 = vld [vmem:[%s356 + $0x4] sm:$0xf]
      %v405 = vld [vmem:[%s2] sm:$0xf]
      %v406 = vld [vmem:[%s2 + $0x4] sm:$0xf]
      %v407 = vld [vmem:[%s2 + $0x8] sm:$0xf]
      %v408 = vld [vmem:[%s2 + $0xc] sm:$0xf]
      %v409 = vld [vmem:[%s371] sm:$0xf]
      %v410 = vld [vmem:[%s371 + $0x4] sm:$0xf]
      %s411 = scalar_lea.vmem %s2, 16
      %v412 = vld [vmem:[%s411] sm:$0xf]
      %v413 = vld [vmem:[%s411 + $0x4] sm:$0xf]
      %v414 = vld [vmem:[%s411 + $0x8] sm:$0xf]
      %v415 = vld [vmem:[%s411 + $0xc] sm:$0xf]
      %v418 = vunpack.c.l.b16 %v409
      %v419 = vunpack.c.l.b16 %v410
      %v420 = vpack.c.b16 %v419, %v418
      %v425 = vunpack.c.l.b16 %v412
      %v426 = vunpack.c.l.b16 %v413
      %v427 = vunpack.c.l.b16 %v414
      %v428 = vunpack.c.l.b16 %v415
      %v429 = vpack.c.b16 %v426, %v425
      %v430 = vpack.c.b16 %v428, %v427
      %vm433 = vcmask 261120
      %v435 = vsel %vm433, %v420, 0
      %437 = vmatprep.subr.bf16.mxu0 0
      %438 = vmatpush1.bf16.msra.mxu0 %v429
      %439 = vmatprep.subr.bf16.mxu0 0
      %440 = vmatpush1.bf16.msra.mxu0 %v430
      %441 = vmatprep.subr.bf16.mxu0 0
      %442 = vmatpush1.bf16.msra.mxu0 0
      %443 = vmatprep.subr.bf16.mxu0 0
      %444 = vmatpush1.bf16.msra.mxu0 0
      %445 = vmatprep.subr.bf16.mxu0 0
      %446 = vmatpush1.bf16.msra.mxu0 0
      %447 = vmatprep.subr.bf16.mxu0 0
      %448 = vmatpush1.bf16.msra.mxu0 0
      %449 = vmatprep.subr.bf16.mxu0 0
      %450 = vmatpush1.bf16.msra.mxu0 0
      %451 = vmatprep.subr.bf16.mxu0 0
      %452 = vmatpush1.bf16.msra.mxu0 0
      %453 = vmatprep.subr.bf16.mxu0 0
      %454 = vmatpush1.bf16.msra.mxu0 0
      %455 = vmatprep.subr.bf16.mxu0 0
      %456 = vmatpush1.bf16.msra.mxu0 0
      %457 = vmatprep.subr.bf16.mxu0 0
      %458 = vmatpush1.bf16.msra.mxu0 0
      %459 = vmatprep.subr.bf16.mxu0 0
      %460 = vmatpush1.bf16.msra.mxu0 0
      %461 = vmatprep.subr.bf16.mxu0 0
      %462 = vmatpush1.bf16.msra.mxu0 0
      %463 = vmatprep.subr.bf16.mxu0 0
      %464 = vmatpush1.bf16.msra.mxu0 0
      %465 = vmatprep.subr.bf16.mxu0 0
      %466 = vmatpush1.bf16.msra.mxu0 0
      %467 = vmatprep.subr.bf16.mxu0 0
      %468 = vmatpush1.bf16.msra.mxu0 0
      %469 = vmatprep.mubr.bf16.mxu0 0
      %470 = vmatmul.mubr.bf16.gmra.mrb[0].mxu0 %v435
      %v471 = vpop.f32.mrb[0].mxu0
      %v472 = vadd.f32 0.0, %v471
      %v473 = vpop.f32.mrb[0].mxu0
      %v474 = vpop.f32.mrb[0].mxu0
      %v475 = vadd.f32 0.0, %v474
      %v476 = vpop.f32.mrb[0].mxu0
      %477 = vdwg.mxu0
      %v480 = vunpack.c.l.b16 %v403
      %v481 = vunpack.c.l.b16 %v404
      %v482 = vpack.c.b16 %v481, %v480
      %v487 = vunpack.c.l.b16 %v405
      %v488 = vunpack.c.l.b16 %v406
      %v489 = vunpack.c.l.b16 %v407
      %v490 = vunpack.c.l.b16 %v408
      %v491 = vpack.c.b16 %v488, %v487
      %v492 = vpack.c.b16 %v490, %v489
      %v496 = vsel %vm433, %v482, 0
      %498 = vmatprep.subr.bf16.mxu0 0
      %499 = vmatpush1.bf16.msra.mxu0 %v491
      %500 = vmatprep.subr.bf16.mxu0 0
      %501 = vmatpush1.bf16.msra.mxu0 %v492
      %502 = vmatprep.subr.bf16.mxu0 0
      %503 = vmatpush1.bf16.msra.mxu0 0
      %504 = vmatprep.subr.bf16.mxu0 0
      %505 = vmatpush1.bf16.msra.mxu0 0
      %506 = vmatprep.subr.bf16.mxu0 0
      %507 = vmatpush1.bf16.msra.mxu0 0
      %508 = vmatprep.subr.bf16.mxu0 0
      %509 = vmatpush1.bf16.msra.mxu0 0
      %510 = vmatprep.subr.bf16.mxu0 0
      %511 = vmatpush1.bf16.msra.mxu0 0
      %512 = vmatprep.subr.bf16.mxu0 0
      %513 = vmatpush1.bf16.msra.mxu0 0
      %514 = vmatprep.subr.bf16.mxu0 0
      %515 = vmatpush1.bf16.msra.mxu0 0
      %516 = vmatprep.subr.bf16.mxu0 0
      %517 = vmatpush1.bf16.msra.mxu0 0
      %518 = vmatprep.subr.bf16.mxu0 0
      %519 = vmatpush1.bf16.msra.mxu0 0
      %520 = vmatprep.subr.bf16.mxu0 0
      %521 = vmatpush1.bf16.msra.mxu0 0
      %522 = vmatprep.subr.bf16.mxu0 0
      %523 = vmatpush1.bf16.msra.mxu0 0
      %524 = vmatprep.subr.bf16.mxu0 0
      %525 = vmatpush1.bf16.msra.mxu0 0
      %526 = vmatprep.subr.bf16.mxu0 0
      %527 = vmatpush1.bf16.msra.mxu0 0
      %528 = vmatprep.subr.bf16.mxu0 0
      %529 = vmatpush1.bf16.msra.mxu0 0
      %530 = vmatprep.mubr.bf16.mxu0 0
      %531 = vmatmul.mubr.bf16.gmra.mrb[0].mxu0 %v496
      %v532 = vpop.f32.mrb[0].mxu0
      %v533 = vadd.f32 %v472, %v532
      %v534 = vpop.f32.mrb[0].mxu0
      %v535 = vpop.f32.mrb[0].mxu0
      %v536 = vadd.f32 %v475, %v535
      %v537 = vpop.f32.mrb[0].mxu0
      %538 = vdwg.mxu0
      %v539 = vld [vmem:[%s3] sm:$0x1]
      %v541 = vlaneseq
      %v542 = vshrl.u32 %v541, 7
      %v543 = vsub.s32 0, %v542
      %v544 = vrot.slane %v539, %v543
      %v546 = vadd.f32 %v533, %v544
      %v547 = vadd.f32 %v536, %v544
      %v548 = vld [vmem:[%s386] sm:$0xf]
      %v549 = vld [vmem:[%s386 + $0x4] sm:$0xf]
      %v550 = vunpack.c.l.bf16 %v548
      %v551 = vunpack.c.l.bf16 %v549
      %v552 = vadd.f32 %v546, %v550
      %v553 = vadd.f32 %v547, %v551
      %v554 = vmax.f32 %v552, 0.0
      %v555 = vmax.f32 %v553, 0.0
      %v556 = vpack.c.bf16 %v555, %v554
      %v558 = vunpack.c.l.b16 %v556
      %v559 = vunpack.c.h.b16 %v556
      %v560 = vpack.c.b16 %v558, %v558
      %v561 = vpack.c.b16 %v559, %v559
      %vm564 = vcmask 519168
      %565 = vst.msk [vmem:[%s400] sm:$0xf] %vm564, %v560
      %566 = vst.msk [vmem:[%s400 + $0x4] sm:$0xf] %vm564, %v561
      %s567 = smul.u32 2, %s23
      %p568 = scmp.lt.s32.totalorder %s21, 1
      %s569 = scalar_select %p568, %s21, 1
      %p570 = scmp.lt.s32.totalorder %s22, 1
      %s571 = scalar_select %p570, %s22, 1
      %p572 = scmp.lt.s32.totalorder %s567, 1
      %s573 = scalar_select %p572, %s567, 1
      %s574 = smul.addr %s571, 2
      %s575 = sadd.s32 %s573, %s574
      %s576 = smul.addr %s569, 4
      %s577 = sadd.s32 %s575, %s576
      %s578 = smul.addr %s577, 4
      %s579 = scalar_lea.vmem %s5, %s578
      // Predicated region
      $region41: #{_lambda_.10} parent=39 // pred_check
        %p580 = pneg %p191
      $region42: #{_lambda_.10} parent=39 // pred_check_branch
        %582 = sbr.rel (%p580) target = $region44
      $region43: #{_lambda_.10} parent=39 // pred_region
        %s583 = smul.u32 2, %s23
      $region44: #{_lambda_.10} parent=39 // pred_fallthru
        _
    $region40: #{_lambda_.10} parent=5 // pred_fallthru
      _
    %p584 = scmp.le.s32.totalorder 2, %s11
    // Predicated region
    $region45: #{_lambda_.10} parent=5 // pred_check
      %p585 = pneg %p584
    $region46: #{_lambda_.10} parent=5 // pred_check_branch
      %587 = sbr.rel (%p585) target = $region48
    $region47: #{_lambda_.10} parent=5 // pred_region
      %s588 = ssub.s32 %s11, 2
      // Predicated region
      $region49: #{_lambda_.10} parent=47 // pred_check
        %p589 = pneg %p197
      $region50: #{_lambda_.10} parent=47 // pred_check_branch
        %591 = sbr.rel (%p589) target = $region52
      $region51: #{_lambda_.10} parent=47 // pred_region
        %s592 = smul.u32 2, %s26
        %p593 = scmp.lt.s32.totalorder %s24, 1
        %s594 = scalar_select %p593, %s24, 1
        %p595 = scmp.lt.s32.totalorder %s25, 1
        %s596 = scalar_select %p595, %s25, 1
        %p597 = scmp.lt.s32.totalorder %s592, 1
        %s598 = scalar_select %p597, %s592, 1
        %s599 = smul.addr %s596, 2
        %s600 = sadd.s32 %s598, %s599
        %s601 = smul.addr %s594, 4
        %s602 = sadd.s32 %s600, %s601
        %s603 = smul.addr %s602, 4
        %s604 = scalar_lea.vmem %s5, %s603
      $region52: #{_lambda_.10} parent=47 // pred_fallthru
        _
    $region48: #{_lambda_.10} parent=5 // pred_fallthru
      _
  $region6: #{_lambda_.10} parent=0 // loop_footer
    %s15 = sadd.s32 1, %s11
  $region7: #{_lambda_.10} parent=0 // loop_footer_branch
    %10 = sbr.rel target = $region3
  $region8: #{_lambda_.10} parent=0 // loop_exit
    _

// kernel: tile.18
$region0: #{tile.18}
  #allocation0 [shape = 's32[1]{0}', space=sflag, size = 0x4, scoped, tag = 'scoped memory for tile.18']
  %s0 = inlined_call_operand.vmem [shape: f32[4], index: 0, kind: input, shape index: {}]
  %s1 = inlined_call_operand.vmem [shape: f32[8,4], index: 1, kind: output, shape index: {}]
  // Predicated region
  $region2: #{tile.18} parent=0 // pred_check
    _
  $region3: #{tile.18} parent=0 // pred_check_branch
    %3 = sbr.rel (0) target = $region5
  $region4: #{tile.18} parent=0 // pred_region
    _
  $region5: #{tile.18} parent=0 // pred_fallthru
    _
  %v4 = vld [vmem:[%s0] ss:$0 sm:$0xff]
  %5 = vst [vmem:[%s1] sm:$0xff] %v4

// kernel: tile.19
$region0: #{tile.19}
  %s0 = inlined_call_operand.vmem [shape: f32[8,4], index: 0, kind: input, shape index: {}]
  %s1 = inlined_call_operand.vmem [shape: f32[1,32], index: 1, kind: output, shape index: {}]
  $region1: #{tile.19} parent=0
    #allocation0 [shape = 'u8[4096]{0}', space=vmem, size = 0x1000, scoped, tag = 'scoped mem for output reshape']
    %v2 = vld [vmem:[%s0] sm:$0x1]
    %vm3 = vcmask 31744
    %4 = vst.msk [vmem:[#allocation0] sm:$0x1] %vm3, %v2
    %s5 = scalar_lea.vmem %s0, 7
    %v6 = vld [vmem:[%s5] sm:$0x1]
    %7 = vrot.lane.b32.xlu0 %v6, 28
    %v8 = vpop.permute.xlu0 %7
    %vm9 = vcmask 261344
    %10 = vst.msk [vmem:[#allocation0] sm:$0x1] %vm9, %v8
    %s11 = scalar_lea.vmem %s0, 6
    %v12 = vld [vmem:[%s11] sm:$0x1]
    %13 = vrot.lane.b32.xlu0 %v12, 24
    %v14 = vpop.permute.xlu0 %13
    %vm15 = vcmask 228544
    %16 = vst.msk [vmem:[#allocation0] sm:$0x1] %vm15, %v14
    %s17 = scalar_lea.vmem %s0, 5
    %v18 = vld [vmem:[%s17] sm:$0x1]
    %19 = vrot.lane.b32.xlu0 %v18, 20
    %v20 = vpop.permute.xlu0 %19
    %vm21 = vcmask 195744
    %22 = vst.msk [vmem:[#allocation0] sm:$0x1] %vm21, %v20
    %s23 = scalar_lea.vmem %s0, 4
    %v24 = vld [vmem:[%s23] sm:$0x1]
    %25 = vrot.lane.b32.xlu0 %v24, 16
    %v26 = vpop.permute.xlu0 %25
    %vm27 = vcmask 162944
    %28 = vst.msk [vmem:[#allocation0] sm:$0x1] %vm27, %v26
    %s29 = scalar_lea.vmem %s0, 3
    %v30 = vld [vmem:[%s29] sm:$0x1]
    %31 = vrot.lane.b32.xlu0 %v30, 12
    %v32 = vpop.permute.xlu0 %31
    %vm33 = vcmask 130144
    %34 = vst.msk [vmem:[#allocation0] sm:$0x1] %vm33, %v32
    %s35 = scalar_lea.vmem %s0, 2
    %v36 = vld [vmem:[%s35] sm:$0x1]
    %37 = vrot.lane.b32.xlu0 %v36, 8
    %v38 = vpop.permute.xlu0 %37
    %vm39 = vcmask 97344
    %40 = vst.msk [vmem:[#allocation0] sm:$0x1] %vm39, %v38
    %s41 = scalar_lea.vmem %s0, 1
    %v42 = vld [vmem:[%s41] sm:$0x1]
    %43 = vrot.lane.b32.xlu0 %v42, 4
    %v44 = vpop.permute.xlu0 %43
    %vm45 = vcmask 64544
    %46 = vst.msk [vmem:[#allocation0] sm:$0x1] %vm45, %v44
    %s48 = sshllo.u32 0, 1
    %v50 = vld [vmem:[#allocation0] sm:%s48]
    %s51 = sshllo.u32 0, 1
    %52 = vst [vmem:[%s1] sm:%s51] %v50

// kernel: _lambda_.11
$region0: #{_lambda_.11}
  #allocation0 [shape = 'u32[]', space=smem, size = 0x4, offset = 0x4, fixed_abs, tag = 'smem constant byte address 0x4 - core index']
  #allocation1 [shape = 'u32[144,128]{1,0:T(1,128)}', space=vmem, size = 0x12000, scoped, tag = 'internal scratch']
  %s0 = inlined_call_operand.vmem [shape: bf16[2,5,64,32], index: 0, kind: input, shape index: {}, may-alias: {0,1}]
  %s1 = inlined_call_operand.vmem [shape: bf16[2,5,64,32], index: 1, kind: input, shape index: {}, may-alias: {0,1}]
  %s2 = inlined_call_operand.vmem [shape: bf16[2,32,32], index: 2, kind: input, shape index: {}]
  %s3 = inlined_call_operand.vmem [shape: f32[1,32], index: 3, kind: input, shape index: {}]
  %s4 = inlined_call_operand.vmem [shape: bf16[2,4,64,32], index: 4, kind: output, shape index: {}]
  %s5 = sld [smem:[#allocation0]]
  $region49: #{_lambda_.11} parent=0
    _
  %s7 = ssub.s32 1, %s5
  %s8 = scalar_select 0, %s7, %s5
  loop: start=0, step=1, limit=10
  $region2: #{_lambda_.11} parent=0 // loop_pre_header
    _
  $region3: #{_lambda_.11} parent=0 // loop_header
    %s10 = sphi 0, %s14
    %p11 = scmp.ge.s32.totalorder %s10, 10
    %s17 = sphi 0, %s36
    %s18 = sphi 0, %s32
    %s19 = sphi 0, %s28
    %s20 = sphi 0, %s17
    %s21 = sphi 0, %s18
    %s22 = sphi 0, %s19
    %s23 = sphi 0, %s20
    %s24 = sphi 0, %s21
    %s25 = sphi 0, %s22
    %s43 = sphi 0, %s45
    %s46 = sphi 0, %s43
    %s47 = sphi 0, %s46
    %s63 = sphi 0, %s47
    %s75 = sphi 0, %s77
    %s78 = sphi 0, %s75
    %s79 = sphi 0, %s78
    %s95 = sphi 0, %s79
    %s99 = sphi 0, %s99
    %s101 = sphi 0, %s99
    %s102 = sphi 0, %s101
    %s116 = sphi 0, %s102
    %s120 = sphi 0, %s120
    %s122 = sphi 0, %s120
    %s123 = sphi 0, %s122
    %s137 = sphi 0, %s123
    %s147 = sphi 0, %s149
    %s150 = sphi 0, %s147
    %s151 = sphi 0, %s150
    %s167 = sphi 0, %s151
  $region4: #{_lambda_.11} parent=0 // loop_header_branch
    %13 = sbr.rel (%p11) target = $region8
  $region5: #{_lambda_.11} parent=0 // loop_body
    %s15 = ssub.s32 %s10, 1
    %s16 = ssub.s32 %s10, 2
    %s26 = sadd.s32 1, %s19
    %p27 = scmp.ge.s32.totalorder %s26, 1
    %s28 = scalar_select %p27, 0, %s26
    %s29 = sadd.s32 1, %s18
    %s30 = scalar_select %p27, %s29, %s18
    %p31 = scmp.ge.s32.totalorder %s30, 4
    %s32 = scalar_select %p31, 0, %s30
    %s33 = sadd.s32 1, %s17
    %s34 = scalar_select %p31, %s33, %s17
    %p35 = scmp.ge.s32.totalorder %s34, 2
    %s36 = scalar_select %p35, 0, %s34
    %s37 = ssub.s32 %s17, %s36
    %s38 = ssub.s32 %s18, %s32
    %s39 = sor.u32 %s37, %s38
    %s40 = ssub.s32 %s19, %s28
    %s41 = sor.u32 %s39, %s40
    %p42 = scmp.eq.s32.totalorder %s41, 0
    %s44 = sadd.s32 %s43, 1
    %s45 = scalar_select %p42, %s43, %s44
    %p48 = pneg %p42
    %p49 = scmp.eq.s32.totalorder %s10, 7
    %p50 = por %p48, %p49
    %p51 = scmp.ne.s32.totalorder %s43, %s46
    %p52 = scmp.eq.s32.totalorder %s10, 0
    %p53 = por %p51, %p52
    %p54 = scmp.ne.s32.totalorder %s43, %s46
    %p55 = scmp.eq.s32.totalorder %s15, 7
    %p56 = por %p54, %p55
    %p57 = scmp.ne.s32.totalorder %s46, %s47
    %p58 = scmp.eq.s32.totalorder %s15, 0
    %p59 = por %p57, %p58
    %p60 = scmp.ne.s32.totalorder %s46, %s47
    %p61 = scmp.eq.s32.totalorder %s16, 7
    %p62 = por %p60, %p61
    %p64 = scmp.ne.s32.totalorder %s47, %s63
    %p65 = scmp.eq.s32.totalorder %s16, 0
    %p66 = por %p64, %p65
    %s67 = sadd.s32 %s18, 1
    %s68 = sadd.s32 %s32, 1
    %s69 = ssub.s32 %s17, %s36
    %s70 = ssub.s32 %s67, %s68
    %s71 = sor.u32 %s69, %s70
    %s72 = ssub.s32 %s19, %s28
    %s73 = sor.u32 %s71, %s72
    %p74 = scmp.eq.s32.totalorder %s73, 0
    %s76 = sadd.s32 %s75, 1
    %s77 = scalar_select %p74, %s75, %s76
    %p80 = pneg %p74
    %p81 = scmp.eq.s32.totalorder %s10, 7
    %p82 = por %p80, %p81
    %p83 = scmp.ne.s32.totalorder %s75, %s78
    %p84 = scmp.eq.s32.totalorder %s10, 0
    %p85 = por %p83, %p84
    %p86 = scmp.ne.s32.totalorder %s75, %s78
    %p87 = scmp.eq.s32.totalorder %s15, 7
    %p88 = por %p86, %p87
    %p89 = scmp.ne.s32.totalorder %s78, %s79
    %p90 = scmp.eq.s32.totalorder %s15, 0
    %p91 = por %p89, %p90
    %p92 = scmp.ne.s32.totalorder %s78, %s79
    %p93 = scmp.eq.s32.totalorder %s16, 7
    %p94 = por %p92, %p93
    %p96 = scmp.ne.s32.totalorder %s79, %s95
    %p97 = scmp.eq.s32.totalorder %s16, 0
    %p98 = por %p96, %p97
    %s100 = sadd.s32 %s99, 1
    %p103 = scmp.eq.s32.totalorder %s10, 7
    %p104 = scmp.ne.s32.totalorder %s99, %s101
    %p105 = scmp.eq.s32.totalorder %s10, 0
    %p106 = por %p104, %p105
    %p107 = scmp.ne.s32.totalorder %s99, %s101
    %p108 = scmp.eq.s32.totalorder %s15, 7
    %p109 = por %p107, %p108
    %p110 = scmp.ne.s32.totalorder %s101, %s102
    %p111 = scmp.eq.s32.totalorder %s15, 0
    %p112 = por %p110, %p111
    %p113 = scmp.ne.s32.totalorder %s101, %s102
    %p114 = scmp.eq.s32.totalorder %s16, 7
    %p115 = por %p113, %p114
    %p117 = scmp.ne.s32.totalorder %s102, %s116
    %p118 = scmp.eq.s32.totalorder %s16, 0
    %p119 = por %p117, %p118
    %s121 = sadd.s32 %s120, 1
    %p124 = scmp.eq.s32.totalorder %s10, 7
    %p125 = scmp.ne.s32.totalorder %s120, %s122
    %p126 = scmp.eq.s32.totalorder %s10, 0
    %p127 = por %p125, %p126
    %p128 = scmp.ne.s32.totalorder %s120, %s122
    %p129 = scmp.eq.s32.totalorder %s15, 7
    %p130 = por %p128, %p129
    %p131 = scmp.ne.s32.totalorder %s122, %s123
    %p132 = scmp.eq.s32.totalorder %s15, 0
    %p133 = por %p131, %p132
    %p134 = scmp.ne.s32.totalorder %s122, %s123
    %p135 = scmp.eq.s32.totalorder %s16, 7
    %p136 = por %p134, %p135
    %p138 = scmp.ne.s32.totalorder %s123, %s137
    %p139 = scmp.eq.s32.totalorder %s16, 0
    %p140 = por %p138, %p139
    %s141 = ssub.s32 %s17, %s36
    %s142 = ssub.s32 %s18, %s32
    %s143 = sor.u32 %s141, %s142
    %s144 = ssub.s32 %s19, %s28
    %s145 = sor.u32 %s143, %s144
    %p146 = scmp.eq.s32.totalorder %s145, 0
    %s148 = sadd.s32 %s147, 1
    %s149 = scalar_select %p146, %s147, %s148
    %p152 = pneg %p146
    %p153 = scmp.eq.s32.totalorder %s10, 7
    %p154 = por %p152, %p153
    %p155 = scmp.ne.s32.totalorder %s147, %s150
    %p156 = scmp.eq.s32.totalorder %s10, 0
    %p157 = por %p155, %p156
    %p158 = scmp.ne.s32.totalorder %s147, %s150
    %p159 = scmp.eq.s32.totalorder %s15, 7
    %p160 = por %p158, %p159
    %p161 = scmp.ne.s32.totalorder %s150, %s151
    %p162 = scmp.eq.s32.totalorder %s15, 0
    %p163 = por %p161, %p162
    %p164 = scmp.ne.s32.totalorder %s150, %s151
    %p165 = scmp.eq.s32.totalorder %s16, 7
    %p166 = por %p164, %p165
    %p168 = scmp.ne.s32.totalorder %s151, %s167
    %p169 = scmp.eq.s32.totalorder %s16, 0
    %p170 = por %p168, %p169
    %p171 = scmp.le.s32.totalorder 1, %s10
    %p172 = scmp.lt.s32.totalorder %s10, 9
    %p173 = pnand %p171, %p172
    %p174 = pneg %p173
    // Predicated region
    $region9: #{_lambda_.11} parent=5 // pred_check
      _
    $region10: #{_lambda_.11} parent=5 // pred_check_branch
      %176 = sbr.rel (%p173) target = $region12
    $region11: #{_lambda_.11} parent=5 // pred_region
      %s177 = ssub.s32 %s10, 1
      // Predicated region
      $region13: #{_lambda_.11} parent=11 // pred_check
        %p178 = pneg %p112
      $region14: #{_lambda_.11} parent=11 // pred_check_branch
        %180 = sbr.rel (%p178) target = $region16
      $region15: #{_lambda_.11} parent=11 // pred_region
        _
      $region16: #{_lambda_.11} parent=11 // pred_fallthru
        _
      // Predicated region
      $region17: #{_lambda_.11} parent=11 // pred_check
        %p181 = pneg %p133
      $region18: #{_lambda_.11} parent=11 // pred_check_branch
        %183 = sbr.rel (%p181) target = $region20
      $region19: #{_lambda_.11} parent=11 // pred_region
        _
      $region20: #{_lambda_.11} parent=11 // pred_fallthru
        _
    $region12: #{_lambda_.11} parent=5 // pred_fallthru
      _
    %p184 = scmp.lt.s32.totalorder %s10, 8
    // Predicated region
    $region21: #{_lambda_.11} parent=5 // pred_check
      %p185 = pneg %p184
    $region22: #{_lambda_.11} parent=5 // pred_check_branch
      %187 = sbr.rel (%p185) target = $region24
    $region23: #{_lambda_.11} parent=5 // pred_region
      // Predicated region
      $region25: #{_lambda_.11} parent=23 // pred_check
        %p188 = pneg %p53
      $region26: #{_lambda_.11} parent=23 // pred_check_branch
        %190 = sbr.rel (%p188) target = $region28
      $region27: #{_lambda_.11} parent=23 // pred_region
        %s191 = smul.u32 8, %s19
        %p192 = scmp.lt.s32.totalorder %s17, 1
        %s193 = scalar_select %p192, %s17, 1
        %p194 = scmp.lt.s32.totalorder %s18, 4
        %s195 = scalar_select %p194, %s18, 4
        %p196 = scmp.lt.s32.totalorder %s191, 7
        %s197 = scalar_select %p196, %s191, 7
        %s198 = smul.addr %s195, 8
        %s199 = sadd.s32 %s197, %s198
        %s200 = smul.addr %s193, 40
        %s201 = sadd.s32 %s199, %s200
        %s202 = smul.addr %s201, 4
        %s203 = scalar_lea.vmem %s0, %s202
        %s204 = smul.u32 8, %s19
      $region28: #{_lambda_.11} parent=23 // pred_fallthru
        _
      // Predicated region
      $region29: #{_lambda_.11} parent=23 // pred_check
        %p205 = pneg %p85
      $region30: #{_lambda_.11} parent=23 // pred_check_branch
        %207 = sbr.rel (%p205) target = $region32
      $region31: #{_lambda_.11} parent=23 // pred_region
        %s208 = sadd.s32 %s18, 1
        %s209 = smul.u32 8, %s19
        %p210 = scmp.lt.s32.totalorder %s17, 1
        %s211 = scalar_select %p210, %s17, 1
        %p212 = scmp.lt.s32.totalorder %s208, 4
        %s213 = scalar_select %p212, %s208, 4
        %p214 = scmp.lt.s32.totalorder %s209, 7
        %s215 = scalar_select %p214, %s209, 7
        %s216 = smul.addr %s213, 8
        %s217 = sadd.s32 %s215, %s216
        %s218 = smul.addr %s211, 40
        %s219 = sadd.s32 %s217, %s218
        %s220 = smul.addr %s219, 4
        %s221 = scalar_lea.vmem %s1, %s220
        %s222 = sadd.s32 %s18, 1
        %s223 = smul.u32 8, %s19
      $region32: #{_lambda_.11} parent=23 // pred_fallthru
        _
    $region24: #{_lambda_.11} parent=5 // pred_fallthru
      _
    %p224 = scmp.le.s32.totalorder 1, %s10
    %p225 = scmp.lt.s32.totalorder %s10, 9
    %p226 = pnand %p224, %p225
    %p227 = pneg %p226
    // Predicated region
    $region33: #{_lambda_.11} parent=5 // pred_check
      _
    $region34: #{_lambda_.11} parent=5 // pred_check_branch
      %229 = sbr.rel (%p226) target = $region36
    $region35: #{_lambda_.11} parent=5 // pred_region
      %s230 = ssub.s32 %s10, 1
      %s231 = smul.u32 8, %s22
      %p232 = scmp.lt.s32.totalorder %s20, 1
      %s233 = scalar_select %p232, %s20, 1
      %p234 = scmp.lt.s32.totalorder %s21, 4
      %s235 = scalar_select %p234, %s21, 4
      %p236 = scmp.lt.s32.totalorder %s231, 7
      %s237 = scalar_select %p236, %s231, 7
      %s238 = smul.addr %s235, 8
      %s239 = sadd.s32 %s237, %s238
      %s240 = smul.addr %s233, 40
      %s241 = sadd.s32 %s239, %s240
      %s242 = smul.addr %s241, 4
      %s243 = scalar_lea.vmem %s0, %s242
      %p244 = pneg %p59
      %p245 = pneg %p56
      %s246 = sadd.s32 %s21, 1
      %s247 = smul.u32 8, %s22
      %p248 = scmp.lt.s32.totalorder %s20, 1
      %s249 = scalar_select %p248, %s20, 1
      %p250 = scmp.lt.s32.totalorder %s246, 4
      %s251 = scalar_select %p250, %s246, 4
      %p252 = scmp.lt.s32.totalorder %s247, 7
      %s253 = scalar_select %p252, %s247, 7
      %s254 = smul.addr %s251, 8
      %s255 = sadd.s32 %s253, %s254
      %s256 = smul.addr %s249, 40
      %s257 = sadd.s32 %s255, %s256
      %s258 = smul.addr %s257, 4
      %s259 = scalar_lea.vmem %s1, %s258
      %p260 = pneg %p91
      %p261 = pneg %p88
      %p262 = pneg %p112
      %p263 = pneg %p109
      %p264 = pneg %p133
      %p265 = pneg %p130
      %p266 = pneg %p163
      %p267 = pneg %p160
      %s268 = smul.u32 8, %s22
      %p269 = scmp.lt.s32.totalorder %s20, 1
      %s270 = scalar_select %p269, %s20, 1
      %p271 = scmp.lt.s32.totalorder %s21, 3
      %s272 = scalar_select %p271, %s21, 3
      %p273 = scmp.lt.s32.totalorder %s268, 7
      %s274 = scalar_select %p273, %s268, 7
      %s275 = smul.addr %s272, 8
      %s276 = sadd.s32 %s274, %s275
      %s277 = smul.addr %s270, 32
      %s278 = sadd.s32 %s276, %s277
      %s279 = smul.addr %s278, 4
      %s280 = scalar_lea.vmem %s4, %s279
      %s281 = smul.u32 8, %s22
      %p282 = scmp.lt.s32.totalorder %s20, 1
      %s283 = scalar_select %p282, %s20, 1
      %p284 = scmp.lt.s32.totalorder %s21, 4
      %s285 = scalar_select %p284, %s21, 4
      %p286 = scmp.lt.s32.totalorder %s281, 7
      %s287 = scalar_select %p286, %s281, 7
      %s288 = smul.addr %s285, 8
      %s289 = sadd.s32 %s287, %s288
      %s290 = smul.addr %s283, 40
      %s291 = sadd.s32 %s289, %s290
      %s292 = smul.addr %s291, 4
      %s293 = scalar_lea.vmem %s0, %s292
      %s294 = smul.u32 8, %s22
      %s295 = sadd.s32 %s21, 1
      %s296 = smul.u32 8, %s22
      %p297 = scmp.lt.s32.totalorder %s20, 1
      %s298 = scalar_select %p297, %s20, 1
      %p299 = scmp.lt.s32.totalorder %s295, 4
      %s300 = scalar_select %p299, %s295, 4
      %p301 = scmp.lt.s32.totalorder %s296, 7
      %s302 = scalar_select %p301, %s296, 7
      %s303 = smul.addr %s300, 8
      %s304 = sadd.s32 %s302, %s303
      %s305 = smul.addr %s298, 40
      %s306 = sadd.s32 %s304, %s305
      %s307 = smul.addr %s306, 4
      %s308 = scalar_lea.vmem %s1, %s307
      %s309 = sadd.s32 %s21, 1
      %s310 = smul.u32 8, %s22
      %s311 = smul.u32 8, %s22
      %p312 = scmp.lt.s32.totalorder %s20, 1
      %s313 = scalar_select %p312, %s20, 1
      %p314 = scmp.lt.s32.totalorder %s21, 3
      %s315 = scalar_select %p314, %s21, 3
      %p316 = scmp.lt.s32.totalorder %s311, 7
      %s317 = scalar_select %p316, %s311, 7
      %s318 = smul.addr %s315, 8
      %s319 = sadd.s32 %s317, %s318
      %s320 = smul.addr %s313, 32
      %s321 = sadd.s32 %s319, %s320
      %s322 = smul.addr %s321, 4
      %s323 = scalar_lea.vmem %s4, %s322
      %s324 = smul.u32 8, %s22
      %v326 = vld [vmem:[%s293] sm:$0xf]
      %v327 = vld [vmem:[%s293 + $0x4] sm:$0xf]
      %v328 = vld [vmem:[%s293 + $0x8] sm:$0xf]
      %v329 = vld [vmem:[%s293 + $0xc] sm:$0xf]
      %v330 = vld [vmem:[%s293 + $0x10] sm:$0xf]
      %v331 = vld [vmem:[%s293 + $0x14] sm:$0xf]
      %v332 = vld [vmem:[%s293 + $0x18] sm:$0xf]
      %v333 = vld [vmem:[%s293 + $0x1c] sm:$0xf]
      %v334 = vld [vmem:[%s2] sm:$0xf]
      %v335 = vld [vmem:[%s2 + $0x4] sm:$0xf]
      %v336 = vld [vmem:[%s2 + $0x8] sm:$0xf]
      %v337 = vld [vmem:[%s2 + $0xc] sm:$0xf]
      %v338 = vld [vmem:[%s308] sm:$0xf]
      %v339 = vld [vmem:[%s308 + $0x4] sm:$0xf]
      %v340 = vld [vmem:[%s308 + $0x8] sm:$0xf]
      %v341 = vld [vmem:[%s308 + $0xc] sm:$0xf]
      %v342 = vld [vmem:[%s308 + $0x10] sm:$0xf]
      %v343 = vld [vmem:[%s308 + $0x14] sm:$0xf]
      %v344 = vld [vmem:[%s308 + $0x18] sm:$0xf]
      %v345 = vld [vmem:[%s308 + $0x1c] sm:$0xf]
      %s346 = scalar_lea.vmem %s2, 16
      %v347 = vld [vmem:[%s346] sm:$0xf]
      %v348 = vld [vmem:[%s346 + $0x4] sm:$0xf]
      %v349 = vld [vmem:[%s346 + $0x8] sm:$0xf]
      %v350 = vld [vmem:[%s346 + $0xc] sm:$0xf]
      %v359 = vunpack.c.l.b16 %v338
      %v360 = vunpack.c.l.b16 %v339
      %v361 = vunpack.c.l.b16 %v340
      %v362 = vunpack.c.l.b16 %v341
      %v363 = vunpack.c.l.b16 %v342
      %v364 = vunpack.c.l.b16 %v343
      %v365 = vunpack.c.l.b16 %v344
      %v366 = vunpack.c.l.b16 %v345
      %v367 = vpack.c.b16 %v360, %v359
      %v368 = vpack.c.b16 %v362, %v361
      %v369 = vpack.c.b16 %v364, %v363
      %v370 = vpack.c.b16 %v366, %v365
      %v375 = vunpack.c.l.b16 %v347
      %v376 = vunpack.c.l.b16 %v348
      %v377 = vunpack.c.l.b16 %v349
      %v378 = vunpack.c.l.b16 %v350
      %v379 = vpack.c.b16 %v376, %v375
      %v380 = vpack.c.b16 %v378, %v377
      %vm383 = vcmask 261120
      %v385 = vsel %vm383, %v367, 0
      %v388 = vsel %vm383, %v368, 0
      %v391 = vsel %vm383, %v369, 0
      %v394 = vsel %vm383, %v370, 0
      %396 = vmatprep.subr.bf16.mxu0 0
      %397 = vmatpush1.bf16.msra.mxu0 %v379
      %398 = vmatprep.subr.bf16.mxu0 0
      %399 = vmatpush1.bf16.msra.mxu0 %v380
      %400 = vmatprep.subr.bf16.mxu0 0
      %401 = vmatpush1.bf16.msra.mxu0 0
      %402 = vmatprep.subr.bf16.mxu0 0
      %403 = vmatpush1.bf16.msra.mxu0 0
      %404 = vmatprep.subr.bf16.mxu0 0
      %405 = vmatpush1.bf16.msra.mxu0 0
      %406 = vmatprep.subr.bf16.mxu0 0
      %407 = vmatpush1.bf16.msra.mxu0 0
      %408 = vmatprep.subr.bf16.mxu0 0
      %409 = vmatpush1.bf16.msra.mxu0 0
      %410 = vmatprep.subr.bf16.mxu0 0
      %411 = vmatpush1.bf16.msra.mxu0 0
      %412 = vmatprep.subr.bf16.mxu0 0
      %413 = vmatpush1.bf16.msra.mxu0 0
      %414 = vmatprep.subr.bf16.mxu0 0
      %415 = vmatpush1.bf16.msra.mxu0 0
      %416 = vmatprep.subr.bf16.mxu0 0
      %417 = vmatpush1.bf16.msra.mxu0 0
      %418 = vmatprep.subr.bf16.mxu0 0
      %419 = vmatpush1.bf16.msra.mxu0 0
      %420 = vmatprep.subr.bf16.mxu0 0
      %421 = vmatpush1.bf16.msra.mxu0 0
      %422 = vmatprep.subr.bf16.mxu0 0
      %423 = vmatpush1.bf16.msra.mxu0 0
      %424 = vmatprep.subr.bf16.mxu0 0
      %425 = vmatpush1.bf16.msra.mxu0 0
      %426 = vmatprep.subr.bf16.mxu0 0
      %427 = vmatpush1.bf16.msra.mxu0 0
      %428 = vmatprep.mubr.bf16.mxu0 0
      %429 = vmatmul.mubr.bf16.gmra.mrb[0].mxu0 %v385
      %v430 = vpop.f32.mrb[0].mxu0
      %v431 = vadd.f32 0.0, %v430
      %v432 = vpop.f32.mrb[0].mxu0
      %v433 = vpop.f32.mrb[0].mxu0
      %v434 = vadd.f32 0.0, %v433
      %v435 = vpop.f32.mrb[0].mxu0
      %436 = vmatprep.mubr.bf16.mxu0 0
      %437 = vmatmul.mubr.bf16.gmra.mrb[0].mxu0 %v388
      %v438 = vpop.f32.mrb[0].mxu0
      %v439 = vadd.f32 0.0, %v438
      %v440 = vpop.f32.mrb[0].mxu0
      %v441 = vpop.f32.mrb[0].mxu0
      %v442 = vadd.f32 0.0, %v441
      %v443 = vpop.f32.mrb[0].mxu0
      %444 = vmatprep.mubr.bf16.mxu0 0
      %445 = vmatmul.mubr.bf16.gmra.mrb[0].mxu0 %v391
      %v446 = vpop.f32.mrb[0].mxu0
      %v447 = vadd.f32 0.0, %v446
      %v448 = vpop.f32.mrb[0].mxu0
      %v449 = vpop.f32.mrb[0].mxu0
      %v450 = vadd.f32 0.0, %v449
      %v451 = vpop.f32.mrb[0].mxu0
      %452 = vmatprep.mubr.bf16.mxu0 0
      %453 = vmatmul.mubr.bf16.gmra.mrb[0].mxu0 %v394
      %v454 = vpop.f32.mrb[0].mxu0
      %v455 = vadd.f32 0.0, %v454
      %v456 = vpop.f32.mrb[0].mxu0
      %v457 = vpop.f32.mrb[0].mxu0
      %v458 = vadd.f32 0.0, %v457
      %v459 = vpop.f32.mrb[0].mxu0
      %460 = vdwg.mxu0
      %v469 = vunpack.c.l.b16 %v326
      %v470 = vunpack.c.l.b16 %v327
      %v471 = vunpack.c.l.b16 %v328
      %v472 = vunpack.c.l.b16 %v329
      %v473 = vunpack.c.l.b16 %v330
      %v474 = vunpack.c.l.b16 %v331
      %v475 = vunpack.c.l.b16 %v332
      %v476 = vunpack.c.l.b16 %v333
      %v477 = vpack.c.b16 %v470, %v469
      %v478 = vpack.c.b16 %v472, %v471
      %v479 = vpack.c.b16 %v474, %v473
      %v480 = vpack.c.b16 %v476, %v475
      %v485 = vunpack.c.l.b16 %v334
      %v486 = vunpack.c.l.b16 %v335
      %v487 = vunpack.c.l.b16 %v336
      %v488 = vunpack.c.l.b16 %v337
      %v489 = vpack.c.b16 %v486, %v485
      %v490 = vpack.c.b16 %v488, %v487
      %v494 = vsel %vm383, %v477, 0
      %v497 = vsel %vm383, %v478, 0
      %v500 = vsel %vm383, %v479, 0
      %v503 = vsel %vm383, %v480, 0
      %505 = vmatprep.subr.bf16.mxu0 0
      %506 = vmatpush1.bf16.msra.mxu0 %v489
      %507 = vmatprep.subr.bf16.mxu0 0
      %508 = vmatpush1.bf16.msra.mxu0 %v490
      %509 = vmatprep.subr.bf16.mxu0 0
      %510 = vmatpush1.bf16.msra.mxu0 0
      %511 = vmatprep.subr.bf16.mxu0 0
      %512 = vmatpush1.bf16.msra.mxu0 0
      %513 = vmatprep.subr.bf16.mxu0 0
      %514 = vmatpush1.bf16.msra.mxu0 0
      %515 = vmatprep.subr.bf16.mxu0 0
      %516 = vmatpush1.bf16.msra.mxu0 0
      %517 = vmatprep.subr.bf16.mxu0 0
      %518 = vmatpush1.bf16.msra.mxu0 0
      %519 = vmatprep.subr.bf16.mxu0 0
      %520 = vmatpush1.bf16.msra.mxu0 0
      %521 = vmatprep.subr.bf16.mxu0 0
      %522 = vmatpush1.bf16.msra.mxu0 0
      %523 = vmatprep.subr.bf16.mxu0 0
      %524 = vmatpush1.bf16.msra.mxu0 0
      %525 = vmatprep.subr.bf16.mxu0 0
      %526 = vmatpush1.bf16.msra.mxu0 0
      %527 = vmatprep.subr.bf16.mxu0 0
      %528 = vmatpush1.bf16.msra.mxu0 0
      %529 = vmatprep.subr.bf16.mxu0 0
      %530 = vmatpush1.bf16.msra.mxu0 0
      %531 = vmatprep.subr.bf16.mxu0 0
      %532 = vmatpush1.bf16.msra.mxu0 0
      %533 = vmatprep.subr.bf16.mxu0 0
      %534 = vmatpush1.bf16.msra.mxu0 0
      %535 = vmatprep.subr.bf16.mxu0 0
      %536 = vmatpush1.bf16.msra.mxu0 0
      %537 = vmatprep.mubr.bf16.mxu0 0
      %538 = vmatmul.mubr.bf16.gmra.mrb[0].mxu0 %v494
      %v539 = vpop.f32.mrb[0].mxu0
      %v540 = vadd.f32 %v431, %v539
      %v541 = vpop.f32.mrb[0].mxu0
      %v542 = vpop.f32.mrb[0].mxu0
      %v543 = vadd.f32 %v434, %v542
      %v544 = vpop.f32.mrb[0].mxu0
      %545 = vmatprep.mubr.bf16.mxu0 0
      %546 = vmatmul.mubr.bf16.gmra.mrb[0].mxu0 %v497
      %v547 = vpop.f32.mrb[0].mxu0
      %v548 = vadd.f32 %v439, %v547
      %v549 = vpop.f32.mrb[0].mxu0
      %v550 = vpop.f32.mrb[0].mxu0
      %v551 = vadd.f32 %v442, %v550
      %v552 = vpop.f32.mrb[0].mxu0
      %553 = vmatprep.mubr.bf16.mxu0 0
      %554 = vmatmul.mubr.bf16.gmra.mrb[0].mxu0 %v500
      %v555 = vpop.f32.mrb[0].mxu0
      %v556 = vadd.f32 %v447, %v555
      %v557 = vpop.f32.mrb[0].mxu0
      %v558 = vpop.f32.mrb[0].mxu0
      %v559 = vadd.f32 %v450, %v558
      %v560 = vpop.f32.mrb[0].mxu0
      %561 = vmatprep.mubr.bf16.mxu0 0
      %562 = vmatmul.mubr.bf16.gmra.mrb[0].mxu0 %v503
      %v563 = vpop.f32.mrb[0].mxu0
      %v564 = vadd.f32 %v455, %v563
      %v565 = vpop.f32.mrb[0].mxu0
      %v566 = vpop.f32.mrb[0].mxu0
      %v567 = vadd.f32 %v458, %v566
      %v568 = vpop.f32.mrb[0].mxu0
      %569 = vdwg.mxu0
      %v570 = vld [vmem:[%s3] sm:$0x1]
      %v572 = vlaneseq
      %v573 = vshrl.u32 %v572, 7
      %v574 = vsub.s32 0, %v573
      %v575 = vrot.slane %v570, %v574
      %v577 = vadd.f32 %v540, %v575
      %v578 = vadd.f32 %v543, %v575
      %v579 = vadd.f32 %v548, %v575
      %v580 = vadd.f32 %v551, %v575
      %v581 = vadd.f32 %v556, %v575
      %v582 = vadd.f32 %v559, %v575
      %v583 = vadd.f32 %v564, %v575
      %v584 = vadd.f32 %v567, %v575
      %v585 = vpack.c.bf16 %v578, %v577
      %v586 = vpack.c.bf16 %v580, %v579
      %v587 = vpack.c.bf16 %v582, %v581
      %v588 = vpack.c.bf16 %v584, %v583
      %v593 = vunpack.c.l.b16 %v585
      %v594 = vunpack.c.h.b16 %v585
      %v595 = vunpack.c.l.b16 %v586
      %v596 = vunpack.c.h.b16 %v586
      %v597 = vunpack.c.l.b16 %v587
      %v598 = vunpack.c.h.b16 %v587
      %v599 = vunpack.c.l.b16 %v588
      %v600 = vunpack.c.h.b16 %v588
      %v601 = vpack.c.b16 %v593, %v593
      %v602 = vpack.c.b16 %v594, %v594
      %v603 = vpack.c.b16 %v595, %v595
      %v604 = vpack.c.b16 %v596, %v596
      %v605 = vpack.c.b16 %v597, %v597
      %v606 = vpack.c.b16 %v598, %v598
      %v607 = vpack.c.b16 %v599, %v599
      %v608 = vpack.c.b16 %v600, %v600
      %vm617 = vcmask 257024
      %618 = vst.msk [vmem:[%s323] sm:$0xf] %vm617, %v601
      %619 = vst.msk [vmem:[%s323 + $0x4] sm:$0xf] %vm617, %v602
      %620 = vst.msk [vmem:[%s323 + $0x8] sm:$0xf] %vm617, %v603
      %621 = vst.msk [vmem:[%s323 + $0xc] sm:$0xf] %vm617, %v604
      %622 = vst.msk [vmem:[%s323 + $0x10] sm:$0xf] %vm617, %v605
      %623 = vst.msk [vmem:[%s323 + $0x14] sm:$0xf] %vm617, %v606
      %624 = vst.msk [vmem:[%s323 + $0x18] sm:$0xf] %vm617, %v607
      %625 = vst.msk [vmem:[%s323 + $0x1c] sm:$0xf] %vm617, %v608
      %s626 = smul.u32 8, %s22
      %p627 = scmp.lt.s32.totalorder %s20, 1
      %s628 = scalar_select %p627, %s20, 1
      %p629 = scmp.lt.s32.totalorder %s21, 3
      %s630 = scalar_select %p629, %s21, 3
      %p631 = scmp.lt.s32.totalorder %s626, 7
      %s632 = scalar_select %p631, %s626, 7
      %s633 = smul.addr %s630, 8
      %s634 = sadd.s32 %s632, %s633
      %s635 = smul.addr %s628, 32
      %s636 = sadd.s32 %s634, %s635
      %s637 = smul.addr %s636, 4
      %s638 = scalar_lea.vmem %s4, %s637
      // Predicated region
      $region37: #{_lambda_.11} parent=35 // pred_check
        %p639 = pneg %p160
      $region38: #{_lambda_.11} parent=35 // pred_check_branch
        %641 = sbr.rel (%p639) target = $region40
      $region39: #{_lambda_.11} parent=35 // pred_region
        %s642 = smul.u32 8, %s22
      $region40: #{_lambda_.11} parent=35 // pred_fallthru
        _
    $region36: #{_lambda_.11} parent=5 // pred_fallthru
      _
    %p643 = scmp.le.s32.totalorder 2, %s10
    // Predicated region
    $region41: #{_lambda_.11} parent=5 // pred_check
      %p644 = pneg %p643
    $region42: #{_lambda_.11} parent=5 // pred_check_branch
      %646 = sbr.rel (%p644) target = $region44
    $region43: #{_lambda_.11} parent=5 // pred_region
      %s647 = ssub.s32 %s10, 2
      // Predicated region
      $region45: #{_lambda_.11} parent=43 // pred_check
        %p648 = pneg %p166
      $region46: #{_lambda_.11} parent=43 // pred_check_branch
        %650 = sbr.rel (%p648) target = $region48
      $region47: #{_lambda_.11} parent=43 // pred_region
        %s651 = smul.u32 8, %s25
        %p652 = scmp.lt.s32.totalorder %s23, 1
        %s653 = scalar_select %p652, %s23, 1
        %p654 = scmp.lt.s32.totalorder %s24, 3
        %s655 = scalar_select %p654, %s24, 3
        %p656 = scmp.lt.s32.totalorder %s651, 7
        %s657 = scalar_select %p656, %s651, 7
        %s658 = smul.addr %s655, 8
        %s659 = sadd.s32 %s657, %s658
        %s660 = smul.addr %s653, 32
        %s661 = sadd.s32 %s659, %s660
        %s662 = smul.addr %s661, 4
        %s663 = scalar_lea.vmem %s4, %s662
      $region48: #{_lambda_.11} parent=43 // pred_fallthru
        _
    $region44: #{_lambda_.11} parent=5 // pred_fallthru
      _
  $region6: #{_lambda_.11} parent=0 // loop_footer
    %s14 = sadd.s32 1, %s10
  $region7: #{_lambda_.11} parent=0 // loop_footer_branch
    %9 = sbr.rel target = $region3
  $region8: #{_lambda_.11} parent=0 // loop_exit
    _

</llo_original>
